<compile_context>
chip_gen: v7x
topology: tpu7x:2x2x1
jax: 0.10.0
libtpu: 0.0.40
codegen_flags: <defaults>
</compile_context>

<pallas_src>
import jax
import jax.numpy as jnp
from jax.experimental import pallas as pl
from jax.experimental.pallas import tpu as pltpu

F_IN = 28 * 28        # 784
F_PAD = 896           # 784 padded up to a multiple of 128
H1, H2 = 512, 256
N_PAD = 128           # last layer padded from 1 -> 128 lanes


def _discriminator_kernel(x_ref, w1_ref, b1_ref, w2_ref, b2_ref, w3_ref, b3_ref,
                          out_ref):
    """One batch tile of the fused forward pass. Weights are VMEM-resident."""
    x = x_ref[...]                                            # (TB, 896) bf16

    # Layer 1: Linear(896->512) + LeakyReLU(0.2)   (bf16 MXU, f32 accumulate)
    h1 = jnp.dot(x, w1_ref[...], preferred_element_type=jnp.float32)
    h1 = h1 + b1_ref[...]                                     # (TB,512)+(1,512)
    h1 = jnp.where(h1 >= 0, h1, 0.2 * h1)

    # Layer 2: Linear(512->256) + LeakyReLU(0.2)
    h2 = jnp.dot(h1.astype(jnp.bfloat16), w2_ref[...],
                 preferred_element_type=jnp.float32)
    h2 = h2 + b2_ref[...]
    h2 = jnp.where(h2 >= 0, h2, 0.2 * h2)

    # Layer 3: Linear(256->128 padded, real col 0) + Sigmoid (lane-dense store)
    h3 = jnp.dot(h2.astype(jnp.bfloat16), w3_ref[...],
                 preferred_element_type=jnp.float32)
    h3 = h3 + b3_ref[...]
    out_ref[...] = jax.nn.sigmoid(h3)                         # (TB, 128) f32


def discriminator_forward(x, params, tb=256):
    """x: (B, 784) float32 -> (B, 1) float32."""
    w1, b1, w2, b2, w3, b3 = params
    B = x.shape[0]

    # Batch tile: multiple of 8 sublanes, capped at `tb`, padded to full tiles.
    TB = min(tb, ((B + 7) // 8) * 8)
    n_tiles = pl.cdiv(B, TB)
    Bp = n_tiles * TB

    # ---- one-time wrapper-side padding & bf16 casts (not per tile) ----
    x_p = jnp.pad(x, ((0, Bp - B), (0, F_PAD - F_IN))).astype(jnp.bfloat16)
    w1_p = jnp.pad(w1, ((0, F_PAD - F_IN), (0, 0))).astype(jnp.bfloat16)
    w2_p = w2.astype(jnp.bfloat16)
    w3_p = jnp.pad(w3, ((0, 0), (0, N_PAD - w3.shape[1]))).astype(jnp.bfloat16)
    b3_p = jnp.pad(b3, ((0, 0), (0, N_PAD - b3.shape[1])))    # stays f32

    resident = lambda shape: pl.BlockSpec(shape, lambda i: (0,) * len(shape))

    out = pl.pallas_call(
        _discriminator_kernel,
        out_shape=jax.ShapeDtypeStruct((Bp, N_PAD), jnp.float32),
        grid=(n_tiles,),
        in_specs=[
            pl.BlockSpec((TB, F_PAD), lambda i: (i, 0)),      # x tile (pipelined)
            resident((F_PAD, H1)),                            # w1
            resident((1, H1)),                                # b1
            resident((H1, H2)),                               # w2
            resident((1, H2)),                                # b2
            resident((H2, N_PAD)),                            # w3 (padded)
            resident((1, N_PAD)),                             # b3 (padded)
        ],
        out_specs=pl.BlockSpec((TB, N_PAD), lambda i: (i, 0)),
        compiler_params=pltpu.CompilerParams(
            dimension_semantics=("parallel",)),
    )(x_p, w1_p, b1, w2_p, b2, w3_p, b3_p)

    return out[:B, :1]


def init_params(key):
    """PyTorch-default-like Linear init (uniform ±1/sqrt(fan_in)).
    Weights stored as (in, out); biases as (1, out)."""
    dims = [(F_IN, H1), (H1, H2), (H2, 1)]
    params = []
    for (fan_in, fan_out) in dims:
        key, kw, kb = jax.random.split(key, 3)
        bound = 1.0 / jnp.sqrt(fan_in)
        w = jax.random.uniform(kw, (fan_in, fan_out), jnp.float32, -bound, bound)
        b = jax.random.uniform(kb, (1, fan_out), jnp.float32, -bound, bound)
        params += [w, b]
    return tuple(params)


def _reference_forward(x, params):
    w1, b1, w2, b2, w3, b3 = params
    h1 = x @ w1 + b1
    h1 = jnp.where(h1 >= 0, h1, 0.2 * h1)
    h2 = h1 @ w2 + b2
    h2 = jnp.where(h2 >= 0, h2, 0.2 * h2)
    return jax.nn.sigmoid(h2 @ w3 + b3)


if __name__ == "__main__":
    key = jax.random.PRNGKey(0)
    key, kx = jax.random.split(key)

    B = 200                       # small; not a tile multiple -> exercises padding
    x = jax.random.normal(kx, (B, F_IN), jnp.float32)
    params = init_params(key)

    # tb=128 so this small test runs a 2-step grid (multi-tile path covered).
    out = discriminator_forward(x, params, tb=128)
    out = jax.block_until_ready(out)

    ref = _reference_forward(x, params)
    assert out.shape == (B, 1), out.shape
    # bf16 MXU operands (f32 accumulation) vs pure-f32 reference: ~1e-3 error
    # on the sigmoid output, so tolerance is loosened accordingly.
    assert jnp.allclose(out, ref, atol=1e-2, rtol=0.0), (
        "mismatch vs reference, max abs err = "
        f"{float(jnp.max(jnp.abs(out - ref)))}")

    print("KERNEL_OK")
</pallas_src>

<mosaic_0001>
module attributes {stable_mosaic.version = 11 : i64} {
  func.func @_discriminator_kernel(%arg0: i32, %arg1: memref<128x896xbf16, #tpu.memory_space<vmem>>, %arg2: memref<896x512xbf16, #tpu.memory_space<vmem>>, %arg3: memref<1x512xf32, #tpu.memory_space<vmem>>, %arg4: memref<512x256xbf16, #tpu.memory_space<vmem>>, %arg5: memref<1x256xf32, #tpu.memory_space<vmem>>, %arg6: memref<256x128xbf16, #tpu.memory_space<vmem>>, %arg7: memref<1x128xf32, #tpu.memory_space<vmem>>, %arg8: memref<128x128xf32, #tpu.memory_space<vmem>>) attributes {dimension_semantics = [#tpu.dimension_semantics<parallel>], iteration_bounds = array<i64: 2>, scalar_prefetch = 0 : i64, scratch_operands = 0 : i64, tpu.core_type = #tpu.core_type<tc>, window_params = [{transform_indices = @transform_0, window_bounds = array<i64: 128, 896>}, {pipeline_mode = #tpu.pipeline_mode<synchronous>, transform_indices = @transform_1, window_bounds = array<i64: 896, 512>}, {pipeline_mode = #tpu.pipeline_mode<synchronous>, transform_indices = @transform_2, window_bounds = array<i64: 1, 512>}, {pipeline_mode = #tpu.pipeline_mode<synchronous>, transform_indices = @transform_3, window_bounds = array<i64: 512, 256>}, {pipeline_mode = #tpu.pipeline_mode<synchronous>, transform_indices = @transform_4, window_bounds = array<i64: 1, 256>}, {pipeline_mode = #tpu.pipeline_mode<synchronous>, transform_indices = @transform_5, window_bounds = array<i64: 256, 128>}, {pipeline_mode = #tpu.pipeline_mode<synchronous>, transform_indices = @transform_6, window_bounds = array<i64: 1, 128>}, {transform_indices = @transform_7, window_bounds = array<i64: 128, 128>}]} {
    %c0 = arith.constant 0 : index
    %c0_0 = arith.constant 0 : index
    %0 = vector.load %arg1[%c0, %c0_0] : memref<128x896xbf16, #tpu.memory_space<vmem>>, vector<128x896xbf16>
    %c0_1 = arith.constant 0 : index
    %c0_2 = arith.constant 0 : index
    %1 = vector.load %arg2[%c0_1, %c0_2] : memref<896x512xbf16, #tpu.memory_space<vmem>>, vector<896x512xbf16>
    %cst = arith.constant dense<0.000000e+00> : vector<128x512xf32>
    %2 = tpu.matmul %0, %1, %cst {dimension_numbers = #tpu.dot_dimension_numbers<[1], [0], [0], [1], [0, 0, 1, 1], [], []>} : vector<128x896xbf16>, vector<896x512xbf16>, vector<128x512xf32> -> vector<128x512xf32>
    %c0_3 = arith.constant 0 : index
    %c0_4 = arith.constant 0 : index
    %3 = vector.load %arg3[%c0_3, %c0_4] : memref<1x512xf32, #tpu.memory_space<vmem>>, vector<1x512xf32>
    %4 = vector.broadcast %3 : vector<1x512xf32> to vector<128x512xf32>
    %5 = arith.addf %2, %4 : vector<128x512xf32>
    %cst_5 = arith.constant 0.000000e+00 : f32
    %6 = vector.broadcast %cst_5 : f32 to vector<128x512xf32>
    %7 = arith.cmpf oge, %5, %6 : vector<128x512xf32>
    %cst_6 = arith.constant 2.000000e-01 : f32
    %8 = vector.broadcast %cst_6 : f32 to vector<128x512xf32>
    %9 = arith.mulf %8, %5 : vector<128x512xf32>
    %10 = arith.select %7, %5, %9 : vector<128x512xi1>, vector<128x512xf32>
    %11 = arith.truncf %10 : vector<128x512xf32> to vector<128x512xbf16>
    %c0_7 = arith.constant 0 : index
    %c0_8 = arith.constant 0 : index
    %12 = vector.load %arg4[%c0_7, %c0_8] : memref<512x256xbf16, #tpu.memory_space<vmem>>, vector<512x256xbf16>
    %cst_9 = arith.constant dense<0.000000e+00> : vector<128x256xf32>
    %13 = tpu.matmul %11, %12, %cst_9 {dimension_numbers = #tpu.dot_dimension_numbers<[1], [0], [0], [1], [0, 0, 1, 1], [], []>} : vector<128x512xbf16>, vector<512x256xbf16>, vector<128x256xf32> -> vector<128x256xf32>
    %c0_10 = arith.constant 0 : index
    %c0_11 = arith.constant 0 : index
    %14 = vector.load %arg5[%c0_10, %c0_11] : memref<1x256xf32, #tpu.memory_space<vmem>>, vector<1x256xf32>
    %15 = vector.broadcast %14 : vector<1x256xf32> to vector<128x256xf32>
    %16 = arith.addf %13, %15 : vector<128x256xf32>
    %cst_12 = arith.constant 0.000000e+00 : f32
    %17 = vector.broadcast %cst_12 : f32 to vector<128x256xf32>
    %18 = arith.cmpf oge, %16, %17 : vector<128x256xf32>
    %cst_13 = arith.constant 2.000000e-01 : f32
    %19 = vector.broadcast %cst_13 : f32 to vector<128x256xf32>
    %20 = arith.mulf %19, %16 : vector<128x256xf32>
    %21 = arith.select %18, %16, %20 : vector<128x256xi1>, vector<128x256xf32>
    %22 = arith.truncf %21 : vector<128x256xf32> to vector<128x256xbf16>
    %c0_14 = arith.constant 0 : index
    %c0_15 = arith.constant 0 : index
    %23 = vector.load %arg6[%c0_14, %c0_15] : memref<256x128xbf16, #tpu.memory_space<vmem>>, vector<256x128xbf16>
    %cst_16 = arith.constant dense<0.000000e+00> : vector<128x128xf32>
    %24 = tpu.matmul %22, %23, %cst_16 {dimension_numbers = #tpu.dot_dimension_numbers<[1], [0], [0], [1], [0, 0, 1, 1], [], []>} : vector<128x256xbf16>, vector<256x128xbf16>, vector<128x128xf32> -> vector<128x128xf32>
    %c0_17 = arith.constant 0 : index
    %c0_18 = arith.constant 0 : index
    %25 = vector.load %arg7[%c0_17, %c0_18] : memref<1x128xf32, #tpu.memory_space<vmem>>, vector<1x128xf32>
    %26 = vector.broadcast %25 : vector<1x128xf32> to vector<128x128xf32>
    %27 = arith.addf %24, %26 : vector<128x128xf32>
    %28 = arith.negf %27 : vector<128x128xf32>
    %29 = math.exp %28 : vector<128x128xf32>
    %cst_19 = arith.constant 1.000000e+00 : f32
    %30 = vector.broadcast %cst_19 : f32 to vector<128x128xf32>
    %31 = arith.addf %30, %29 : vector<128x128xf32>
    %32 = arith.divf %30, %31 : vector<128x128xf32>
    %c0_20 = arith.constant 0 : index
    %c0_21 = arith.constant 0 : index
    %33 = vector.load %arg8[%c0_20, %c0_21] : memref<128x128xf32, #tpu.memory_space<vmem>>, vector<128x128xf32>
    tpu.vector_store %arg8[%c0_20, %c0_21], %32 {strides = array<i32>} : memref<128x128xf32, #tpu.memory_space<vmem>>, vector<128x128xf32>,
    return
  }
  func.func @transform_0(%arg0: i32) -> (i32, i32) {
    %c0_i32 = arith.constant 0 : i32
    %c0_i32_0 = arith.constant 0 : i32
    return %arg0, %c0_i32 : i32, i32
  }
  func.func @transform_1(%arg0: i32) -> (i32, i32) {
    %c0_i32 = arith.constant 0 : i32
    %c0_i32_0 = arith.constant 0 : i32
    %c0_i32_1 = arith.constant 0 : i32
    return %c0_i32, %c0_i32_0 : i32, i32
  }
  func.func @transform_2(%arg0: i32) -> (i32, i32) {
    %c0_i32 = arith.constant 0 : i32
    %c0_i32_0 = arith.constant 0 : i32
    %c0_i32_1 = arith.constant 0 : i32
    return %c0_i32, %c0_i32_0 : i32, i32
  }
  func.func @transform_3(%arg0: i32) -> (i32, i32) {
    %c0_i32 = arith.constant 0 : i32
    %c0_i32_0 = arith.constant 0 : i32
    %c0_i32_1 = arith.constant 0 : i32
    return %c0_i32, %c0_i32_0 : i32, i32
  }
  func.func @transform_4(%arg0: i32) -> (i32, i32) {
    %c0_i32 = arith.constant 0 : i32
    %c0_i32_0 = arith.constant 0 : i32
    %c0_i32_1 = arith.constant 0 : i32
    return %c0_i32, %c0_i32_0 : i32, i32
  }
  func.func @transform_5(%arg0: i32) -> (i32, i32) {
    %c0_i32 = arith.constant 0 : i32
    %c0_i32_0 = arith.constant 0 : i32
    %c0_i32_1 = arith.constant 0 : i32
    return %c0_i32, %c0_i32_0 : i32, i32
  }
  func.func @transform_6(%arg0: i32) -> (i32, i32) {
    %c0_i32 = arith.constant 0 : i32
    %c0_i32_0 = arith.constant 0 : i32
    %c0_i32_1 = arith.constant 0 : i32
    return %c0_i32, %c0_i32_0 : i32, i32
  }
  func.func @transform_7(%arg0: i32) -> (i32, i32) {
    %c0_i32 = arith.constant 0 : i32
    %c0_i32_0 = arith.constant 0 : i32
    return %arg0, %c0_i32 : i32, i32
  }
}

</mosaic_0001>

<llo_original>
// kernel: tpu_custom_call.1
$region0: #{tpu_custom_call.1}
  #allocation0 [shape = 'u32[]', space=smem, size = 0x4, offset = 0x4, fixed_abs, tag = 'smem constant byte address 0x4 - core index']
  #allocation1 [shape = 'u32[144,128]{1,0:T(1,128)}', space=vmem, size = 0x12000, scoped, tag = 'internal scratch']
  %s0 = inlined_call_operand.hbm [shape: bf16[256,896], index: 0, kind: input, shape index: {}]
  %s1 = inlined_call_operand.hbm [shape: bf16[896,512], index: 1, kind: input, shape index: {}]
  %s2 = inlined_call_operand.vmem [shape: f32[1,512], index: 2, kind: input, shape index: {}]
  %s3 = inlined_call_operand.hbm [shape: bf16[512,256], index: 3, kind: input, shape index: {}]
  %s4 = inlined_call_operand.vmem [shape: f32[1,256], index: 4, kind: input, shape index: {}]
  %s5 = inlined_call_operand.hbm [shape: bf16[256,128], index: 5, kind: input, shape index: {}]
  %s6 = inlined_call_operand.vmem [shape: f32[1,128], index: 6, kind: input, shape index: {}]
  %s7 = inlined_call_operand.hbm [shape: f32[256,128], index: 7, kind: output, shape index: {}]
  %s8 = sld [smem:[#allocation0]]
  $region77: #{tpu_custom_call.1} parent=0
    _
  %s10 = ssub.s32 1, %s8
  %s11 = scalar_select 0, %s10, %s8
  $region1: #{tpu_custom_call.1} parent=0
    #allocation2 [shape = 'u8[458752]{0}', space=vmem, size = 0x70000, scoped, tag = 'input window, operand 0']
    #allocation3 [shape = 's32[2]{0}', space=sflag, size = 0x8, scoped, tag = 'scoped memory for tpu_custom_call.1']
    #allocation4 [shape = 's32[2]{0}', space=sflag, size = 0x8, scoped, tag = 'scoped memory for tpu_custom_call.1']
    #allocation5 [shape = 'u8[917504]{0}', space=vmem, size = 0xe0000, scoped, tag = 'input window, operand 1, single buffered']
    #allocation6 [shape = 's32[1]{0}', space=sflag, size = 0x4, scoped, tag = 'scoped memory for tpu_custom_call.1']
    #allocation7 [shape = 'u8[262144]{0}', space=vmem, size = 0x40000, scoped, tag = 'input window, operand 3, single buffered']
    #allocation8 [shape = 'u8[65536]{0}', space=vmem, size = 0x10000, scoped, tag = 'input window, operand 5, single buffered']
    #allocation9 [shape = 's32[1]{0}', space=sflag, size = 0x4, scoped, tag = 'scoped memory for tpu_custom_call.1']
    #allocation10 [shape = 'u8[131072]{0}', space=vmem, size = 0x20000, scoped, tag = 'output window, operand 0']
    %12 = vsyncpa [#allocation3], 0
    %s13 = scalar_lea.sflag [#allocation3], 1
    %14 = vsyncpa %s13, 0
    %15 = vsyncpa [#allocation6], 0
    %16 = vsyncpa [#allocation9], 0
    %17 = vsyncpa [#allocation4], 0
    %s18 = scalar_lea.sflag [#allocation4], 1
    %19 = vsyncpa %s18, 0
    loop: start=0, step=1, limit=4
    $region2: #{tpu_custom_call.1} parent=1 // loop_pre_header
      _
    $region3: #{tpu_custom_call.1} parent=1 // loop_header
      %s21 = sphi 0, %s25
      %p22 = scmp.ge.s32.totalorder %s21, 4
      %s31 = sphi 0, %s33
      %s34 = sphi 0, %s31
      %s35 = sphi 0, %s34
      %s51 = sphi 0, %s35
      %s55 = sphi 0, %s55
      %s57 = sphi 0, %s55
      %s58 = sphi 0, %s57
      %s72 = sphi 0, %s58
      %s76 = sphi 0, %s76
      %s78 = sphi 0, %s76
      %s79 = sphi 0, %s78
      %s93 = sphi 0, %s79
      %s97 = sphi 0, %s97
      %s99 = sphi 0, %s97
      %s100 = sphi 0, %s99
      %s114 = sphi 0, %s100
      %s118 = sphi 0, %s118
      %s120 = sphi 0, %s118
      %s121 = sphi 0, %s120
      %s135 = sphi 0, %s121
      %s139 = sphi 0, %s139
      %s141 = sphi 0, %s139
      %s142 = sphi 0, %s141
      %s156 = sphi 0, %s142
      %s160 = sphi 0, %s160
      %s162 = sphi 0, %s160
      %s163 = sphi 0, %s162
      %s177 = sphi 0, %s163
      %s183 = sphi 0, %s185
      %s186 = sphi 0, %s183
      %s187 = sphi 0, %s186
      %s203 = sphi 0, %s187
    $region4: #{tpu_custom_call.1} parent=1 // loop_header_branch
      %24 = sbr.rel (%p22) target = $region8
    $region5: #{tpu_custom_call.1} parent=1 // loop_body
      %s26 = ssub.s32 %s21, 1
      %s27 = ssub.s32 %s21, 2
      %s28 = sadd.s32 %s21, 1
      %s29 = ssub.s32 %s21, %s28
      %p30 = scmp.eq.s32.totalorder %s29, 0
      %s32 = sadd.s32 %s31, 1
      %s33 = scalar_select %p30, %s31, %s32
      %p36 = pneg %p30
      %p37 = scmp.eq.s32.totalorder %s21, 1
      %p38 = por %p36, %p37
      %p39 = scmp.ne.s32.totalorder %s31, %s34
      %p40 = scmp.eq.s32.totalorder %s21, 0
      %p41 = por %p39, %p40
      %p42 = scmp.ne.s32.totalorder %s31, %s34
      %p43 = scmp.eq.s32.totalorder %s26, 1
      %p44 = por %p42, %p43
      %p45 = scmp.ne.s32.totalorder %s34, %s35
      %p46 = scmp.eq.s32.totalorder %s26, 0
      %p47 = por %p45, %p46
      %p48 = scmp.ne.s32.totalorder %s34, %s35
      %p49 = scmp.eq.s32.totalorder %s27, 1
      %p50 = por %p48, %p49
      %p52 = scmp.ne.s32.totalorder %s35, %s51
      %p53 = scmp.eq.s32.totalorder %s27, 0
      %p54 = por %p52, %p53
      %s56 = sadd.s32 %s55, 1
      %p59 = scmp.eq.s32.totalorder %s21, 1
      %p60 = scmp.ne.s32.totalorder %s55, %s57
      %p61 = scmp.eq.s32.totalorder %s21, 0
      %p62 = por %p60, %p61
      %p63 = scmp.ne.s32.totalorder %s55, %s57
      %p64 = scmp.eq.s32.totalorder %s26, 1
      %p65 = por %p63, %p64
      %p66 = scmp.ne.s32.totalorder %s57, %s58
      %p67 = scmp.eq.s32.totalorder %s26, 0
      %p68 = por %p66, %p67
      %p69 = scmp.ne.s32.totalorder %s57, %s58
      %p70 = scmp.eq.s32.totalorder %s27, 1
      %p71 = por %p69, %p70
      %p73 = scmp.ne.s32.totalorder %s58, %s72
      %p74 = scmp.eq.s32.totalorder %s27, 0
      %p75 = por %p73, %p74
      %s77 = sadd.s32 %s76, 1
      %p80 = scmp.eq.s32.totalorder %s21, 1
      %p81 = scmp.ne.s32.totalorder %s76, %s78
      %p82 = scmp.eq.s32.totalorder %s21, 0
      %p83 = por %p81, %p82
      %p84 = scmp.ne.s32.totalorder %s76, %s78
      %p85 = scmp.eq.s32.totalorder %s26, 1
      %p86 = por %p84, %p85
      %p87 = scmp.ne.s32.totalorder %s78, %s79
      %p88 = scmp.eq.s32.totalorder %s26, 0
      %p89 = por %p87, %p88
      %p90 = scmp.ne.s32.totalorder %s78, %s79
      %p91 = scmp.eq.s32.totalorder %s27, 1
      %p92 = por %p90, %p91
      %p94 = scmp.ne.s32.totalorder %s79, %s93
      %p95 = scmp.eq.s32.totalorder %s27, 0
      %p96 = por %p94, %p95
      %s98 = sadd.s32 %s97, 1
      %p101 = scmp.eq.s32.totalorder %s21, 1
      %p102 = scmp.ne.s32.totalorder %s97, %s99
      %p103 = scmp.eq.s32.totalorder %s21, 0
      %p104 = por %p102, %p103
      %p105 = scmp.ne.s32.totalorder %s97, %s99
      %p106 = scmp.eq.s32.totalorder %s26, 1
      %p107 = por %p105, %p106
      %p108 = scmp.ne.s32.totalorder %s99, %s100
      %p109 = scmp.eq.s32.totalorder %s26, 0
      %p110 = por %p108, %p109
      %p111 = scmp.ne.s32.totalorder %s99, %s100
      %p112 = scmp.eq.s32.totalorder %s27, 1
      %p113 = por %p111, %p112
      %p115 = scmp.ne.s32.totalorder %s100, %s114
      %p116 = scmp.eq.s32.totalorder %s27, 0
      %p117 = por %p115, %p116
      %s119 = sadd.s32 %s118, 1
      %p122 = scmp.eq.s32.totalorder %s21, 1
      %p123 = scmp.ne.s32.totalorder %s118, %s120
      %p124 = scmp.eq.s32.totalorder %s21, 0
      %p125 = por %p123, %p124
      %p126 = scmp.ne.s32.totalorder %s118, %s120
      %p127 = scmp.eq.s32.totalorder %s26, 1
      %p128 = por %p126, %p127
      %p129 = scmp.ne.s32.totalorder %s120, %s121
      %p130 = scmp.eq.s32.totalorder %s26, 0
      %p131 = por %p129, %p130
      %p132 = scmp.ne.s32.totalorder %s120, %s121
      %p133 = scmp.eq.s32.totalorder %s27, 1
      %p134 = por %p132, %p133
      %p136 = scmp.ne.s32.totalorder %s121, %s135
      %p137 = scmp.eq.s32.totalorder %s27, 0
      %p138 = por %p136, %p137
      %s140 = sadd.s32 %s139, 1
      %p143 = scmp.eq.s32.totalorder %s21, 1
      %p144 = scmp.ne.s32.totalorder %s139, %s141
      %p145 = scmp.eq.s32.totalorder %s21, 0
      %p146 = por %p144, %p145
      %p147 = scmp.ne.s32.totalorder %s139, %s141
      %p148 = scmp.eq.s32.totalorder %s26, 1
      %p149 = por %p147, %p148
      %p150 = scmp.ne.s32.totalorder %s141, %s142
      %p151 = scmp.eq.s32.totalorder %s26, 0
      %p152 = por %p150, %p151
      %p153 = scmp.ne.s32.totalorder %s141, %s142
      %p154 = scmp.eq.s32.totalorder %s27, 1
      %p155 = por %p153, %p154
      %p157 = scmp.ne.s32.totalorder %s142, %s156
      %p158 = scmp.eq.s32.totalorder %s27, 0
      %p159 = por %p157, %p158
      %s161 = sadd.s32 %s160, 1
      %p164 = scmp.eq.s32.totalorder %s21, 1
      %p165 = scmp.ne.s32.totalorder %s160, %s162
      %p166 = scmp.eq.s32.totalorder %s21, 0
      %p167 = por %p165, %p166
      %p168 = scmp.ne.s32.totalorder %s160, %s162
      %p169 = scmp.eq.s32.totalorder %s26, 1
      %p170 = por %p168, %p169
      %p171 = scmp.ne.s32.totalorder %s162, %s163
      %p172 = scmp.eq.s32.totalorder %s26, 0
      %p173 = por %p171, %p172
      %p174 = scmp.ne.s32.totalorder %s162, %s163
      %p175 = scmp.eq.s32.totalorder %s27, 1
      %p176 = por %p174, %p175
      %p178 = scmp.ne.s32.totalorder %s163, %s177
      %p179 = scmp.eq.s32.totalorder %s27, 0
      %p180 = por %p178, %p179
      %s181 = ssub.s32 %s21, %s28
      %p182 = scmp.eq.s32.totalorder %s181, 0
      %s184 = sadd.s32 %s183, 1
      %s185 = scalar_select %p182, %s183, %s184
      %p188 = pneg %p182
      %p189 = scmp.eq.s32.totalorder %s21, 1
      %p190 = por %p188, %p189
      %p191 = scmp.ne.s32.totalorder %s183, %s186
      %p192 = scmp.eq.s32.totalorder %s21, 0
      %p193 = por %p191, %p192
      %p194 = scmp.ne.s32.totalorder %s183, %s186
      %p195 = scmp.eq.s32.totalorder %s26, 1
      %p196 = por %p194, %p195
      %p197 = scmp.ne.s32.totalorder %s186, %s187
      %p198 = scmp.eq.s32.totalorder %s26, 0
      %p199 = por %p197, %p198
      %p200 = scmp.ne.s32.totalorder %s186, %s187
      %p201 = scmp.eq.s32.totalorder %s27, 1
      %p202 = por %p200, %p201
      %p204 = scmp.ne.s32.totalorder %s187, %s203
      %p205 = scmp.eq.s32.totalorder %s27, 0
      %p206 = por %p204, %p205
      %p207 = scmp.le.s32.totalorder 1, %s21
      %p208 = scmp.lt.s32.totalorder %s21, 3
      %p209 = pnand %p207, %p208
      %p210 = pneg %p209
      // Predicated region
      $region9: #{tpu_custom_call.1} parent=5 // pred_check
        _
      $region10: #{tpu_custom_call.1} parent=5 // pred_check_branch
        %212 = sbr.rel (%p209) target = $region12
      $region11: #{tpu_custom_call.1} parent=5 // pred_region
        %s213 = ssub.s32 %s21, 1
        // Predicated region
        $region13: #{tpu_custom_call.1} parent=11 // pred_check
          %p214 = pneg %p68
        $region14: #{tpu_custom_call.1} parent=11 // pred_check_branch
          %216 = sbr.rel (%p214) target = $region16
        $region15: #{tpu_custom_call.1} parent=11 // pred_region
          %s218 = ssub.s32 28672, 28672
          %219 = vsyncadd [#allocation6], %s218
          %s220 = sshll.u32 [#allocation5], 4
          %s221 = int_to_ptr.vmem [resolvable:$true] %s220
          %226 = dma.hbm_to_vmem [thread:$0]  %s1, 28672, %s221, [#allocation6], 256, 256, 16
        $region16: #{tpu_custom_call.1} parent=11 // pred_fallthru
          _
        // Predicated region
        $region17: #{tpu_custom_call.1} parent=11 // pred_check
          %p227 = pneg %p89
        $region18: #{tpu_custom_call.1} parent=11 // pred_check_branch
          %229 = sbr.rel (%p227) target = $region20
        $region19: #{tpu_custom_call.1} parent=11 // pred_region
          _
        $region20: #{tpu_custom_call.1} parent=11 // pred_fallthru
          _
        // Predicated region
        $region21: #{tpu_custom_call.1} parent=11 // pred_check
          %p230 = pneg %p110
        $region22: #{tpu_custom_call.1} parent=11 // pred_check_branch
          %232 = sbr.rel (%p230) target = $region24
        $region23: #{tpu_custom_call.1} parent=11 // pred_region
          %s234 = ssub.s32 8192, 8192
          %235 = vsyncadd [#allocation6], %s234
          %s236 = sshll.u32 [#allocation7], 4
          %s237 = int_to_ptr.vmem [resolvable:$true] %s236
          %242 = dma.hbm_to_vmem [thread:$0]  %s3, 8192, %s237, [#allocation6], 128, 128, 8
        $region24: #{tpu_custom_call.1} parent=11 // pred_fallthru
          _
        // Predicated region
        $region25: #{tpu_custom_call.1} parent=11 // pred_check
          %p243 = pneg %p131
        $region26: #{tpu_custom_call.1} parent=11 // pred_check_branch
          %245 = sbr.rel (%p243) target = $region28
        $region27: #{tpu_custom_call.1} parent=11 // pred_region
          _
        $region28: #{tpu_custom_call.1} parent=11 // pred_fallthru
          _
        // Predicated region
        $region29: #{tpu_custom_call.1} parent=11 // pred_check
          %p246 = pneg %p152
        $region30: #{tpu_custom_call.1} parent=11 // pred_check_branch
          %248 = sbr.rel (%p246) target = $region32
        $region31: #{tpu_custom_call.1} parent=11 // pred_region
          %s250 = ssub.s32 2048, 2048
          %251 = vsyncadd [#allocation9], %s250
          %s252 = sshll.u32 [#allocation8], 4
          %s253 = int_to_ptr.vmem [resolvable:$true] %s252
          %258 = dma.hbm_to_vmem [thread:$0]  %s5, 2048, %s253, [#allocation9], 64, 64, 4
        $region32: #{tpu_custom_call.1} parent=11 // pred_fallthru
          _
        // Predicated region
        $region33: #{tpu_custom_call.1} parent=11 // pred_check
          %p259 = pneg %p173
        $region34: #{tpu_custom_call.1} parent=11 // pred_check_branch
          %261 = sbr.rel (%p259) target = $region36
        $region35: #{tpu_custom_call.1} parent=11 // pred_region
          _
        $region36: #{tpu_custom_call.1} parent=11 // pred_fallthru
          _
      $region12: #{tpu_custom_call.1} parent=5 // pred_fallthru
        _
      %p262 = scmp.lt.s32.totalorder %s21, 2
      // Predicated region
      $region37: #{tpu_custom_call.1} parent=5 // pred_check
        %p263 = pneg %p262
      $region38: #{tpu_custom_call.1} parent=5 // pred_check_branch
        %265 = sbr.rel (%p263) target = $region40
      $region39: #{tpu_custom_call.1} parent=5 // pred_region
        // Predicated region
        $region41: #{tpu_custom_call.1} parent=39 // pred_check
          %p266 = pneg %p41
        $region42: #{tpu_custom_call.1} parent=39 // pred_check_branch
          %268 = sbr.rel (%p266) target = $region44
        $region43: #{tpu_custom_call.1} parent=39 // pred_region
          %s269 = sand.u32 %s31, 1
          %s270 = scalar_lea.sflag [#allocation3], %s269
          %s271 = sand.u32 %s31, 1
          %s272 = smul.addr %s271, 448
          %s273 = scalar_lea.vmem [#allocation2], %s272
          %s274 = smul.u32 16, %s21
          %s276 = ssub.s32 7168, 7168
          %277 = vsyncadd %s270, %s276
          %s278 = smul.addr %s274, 7
          %s279 = smul.addr %s278, 64
          %s280 = scalar_lea.hbm %s0, %s279
          %s281 = sshll.u32 %s273, 4
          %s282 = int_to_ptr.vmem [resolvable:$true] %s281
          %287 = dma.hbm_to_vmem [thread:$0]  %s280, 7168, %s282, %s270, 448, 448, 28
        $region44: #{tpu_custom_call.1} parent=39 // pred_fallthru
          _
      $region40: #{tpu_custom_call.1} parent=5 // pred_fallthru
        _
      %p288 = scmp.le.s32.totalorder 1, %s21
      %p289 = scmp.lt.s32.totalorder %s21, 3
      %p290 = pnand %p288, %p289
      %p291 = pneg %p290
      // Predicated region
      $region45: #{tpu_custom_call.1} parent=5 // pred_check
        _
      $region46: #{tpu_custom_call.1} parent=5 // pred_check_branch
        %293 = sbr.rel (%p290) target = $region48
      $region47: #{tpu_custom_call.1} parent=5 // pred_region
        %s294 = ssub.s32 %s21, 1
        %s295 = sand.u32 %s34, 1
        %s296 = scalar_lea.sflag [#allocation3], %s295
        %s297 = sand.u32 %s34, 1
        %s298 = smul.addr %s297, 448
        %s299 = scalar_lea.vmem [#allocation2], %s298
        // Predicated region
        $region49: #{tpu_custom_call.1} parent=47 // pred_check
          %p300 = pneg %p47
        $region50: #{tpu_custom_call.1} parent=47 // pred_check_branch
          %302 = sbr.rel (%p300) target = $region52
        $region51: #{tpu_custom_call.1} parent=47 // pred_region
          %303 = dma.done %s296, 7168
        $region52: #{tpu_custom_call.1} parent=47 // pred_fallthru
          _
        // Predicated region
        $region53: #{tpu_custom_call.1} parent=47 // pred_check
          %p304 = pneg %p68
        $region54: #{tpu_custom_call.1} parent=47 // pred_check_branch
          %306 = sbr.rel (%p304) target = $region56
        $region55: #{tpu_custom_call.1} parent=47 // pred_region
          %307 = dma.done [#allocation6], 28672
        $region56: #{tpu_custom_call.1} parent=47 // pred_fallthru
          _
        // Predicated region
        $region57: #{tpu_custom_call.1} parent=47 // pred_check
          %p308 = pneg %p110
        $region58: #{tpu_custom_call.1} parent=47 // pred_check_branch
          %310 = sbr.rel (%p308) target = $region60
        $region59: #{tpu_custom_call.1} parent=47 // pred_region
          %311 = dma.done [#allocation6], 8192
        $region60: #{tpu_custom_call.1} parent=47 // pred_fallthru
          _
        // Predicated region
        $region61: #{tpu_custom_call.1} parent=47 // pred_check
          %p312 = pneg %p152
        $region62: #{tpu_custom_call.1} parent=47 // pred_check_branch
          %314 = sbr.rel (%p312) target = $region64
        $region63: #{tpu_custom_call.1} parent=47 // pred_region
          %315 = dma.done [#allocation9], 2048
        $region64: #{tpu_custom_call.1} parent=47 // pred_fallthru
          _
        %s316 = sand.u32 %s34, 1
        %s317 = scalar_lea.sflag [#allocation3], %s316
        %s318 = sand.u32 %s34, 1
        %s319 = smul.addr %s318, 448
        %s320 = scalar_lea.vmem [#allocation2], %s319
        %p321 = pneg %p47
        %p322 = pneg %p44
        %p323 = pneg %p68
        %p324 = pneg %p65
        %p325 = pneg %p89
        %p326 = pneg %p86
        %p327 = pneg %p110
        %p328 = pneg %p107
        %p329 = pneg %p131
        %p330 = pneg %p128
        %p331 = pneg %p152
        %p332 = pneg %p149
        %p333 = pneg %p173
        %p334 = pneg %p170
        %p335 = pneg %p199
        %p336 = pneg %p196
        %s337 = sand.u32 %s186, 1
        %s338 = scalar_lea.sflag [#allocation4], %s337
        %s339 = sand.u32 %s186, 1
        %s340 = smul.addr %s339, 128
        %s341 = scalar_lea.vmem [#allocation10], %s340
        %s342 = smul.u32 16, %s26
        %s343 = smul.u32 16, %s26
        %v345 = vld [vmem:[%s299] sm:$0xff]
        %v346 = vld [vmem:[%s299 + $0x8] sm:$0xff]
        %v347 = vld [vmem:[%s299 + $0x10] sm:$0xff]
        %v348 = vld [vmem:[%s299 + $0x18] sm:$0xf]
        %v349 = vld [vmem:[%s299 + $0x1c] sm:$0xff]
        %v350 = vld [vmem:[%s299 + $0x24] sm:$0xff]
        %v351 = vld [vmem:[%s299 + $0x2c] sm:$0xff]
        %v352 = vld [vmem:[%s299 + $0x34] sm:$0xf]
        %v353 = vld [vmem:[%s299 + $0x38] sm:$0xff]
        %v354 = vld [vmem:[%s299 + $0x40] sm:$0xff]
        %v355 = vld [vmem:[%s299 + $0x48] sm:$0xff]
        %v356 = vld [vmem:[%s299 + $0x50] sm:$0xf]
        %v357 = vld [vmem:[%s299 + $0x54] sm:$0xff]
        %v358 = vld [vmem:[%s299 + $0x5c] sm:$0xff]
        %v359 = vld [vmem:[%s299 + $0x64] sm:$0xff]
        %v360 = vld [vmem:[%s299 + $0x6c] sm:$0xf]
        %v361 = vld [vmem:[%s299 + $0x70] sm:$0xff]
        %v362 = vld [vmem:[%s299 + $0x78] sm:$0xff]
        %v363 = vld [vmem:[%s299 + $0x80] sm:$0xff]
        %v364 = vld [vmem:[%s299 + $0x88] sm:$0xf]
        %v365 = vld [vmem:[%s299 + $0x8c] sm:$0xff]
        %v366 = vld [vmem:[%s299 + $0x94] sm:$0xff]
        %v367 = vld [vmem:[%s299 + $0x9c] sm:$0xff]
        %v368 = vld [vmem:[%s299 + $0xa4] sm:$0xf]
        %v369 = vld [vmem:[%s299 + $0xa8] sm:$0xff]
        %v370 = vld [vmem:[%s299 + $0xb0] sm:$0xff]
        %v371 = vld [vmem:[%s299 + $0xb8] sm:$0xff]
        %v372 = vld [vmem:[%s299 + $0xc0] sm:$0xf]
        %v373 = vld [vmem:[%s299 + $0xc4] sm:$0xff]
        %v374 = vld [vmem:[%s299 + $0xcc] sm:$0xff]
        %v375 = vld [vmem:[%s299 + $0xd4] sm:$0xff]
        %v376 = vld [vmem:[%s299 + $0xdc] sm:$0xf]
        %v377 = vld [vmem:[%s299 + $0xe0] sm:$0xff]
        %v378 = vld [vmem:[%s299 + $0xe8] sm:$0xff]
        %v379 = vld [vmem:[%s299 + $0xf0] sm:$0xff]
        %v380 = vld [vmem:[%s299 + $0xf8] sm:$0xf]
        %v381 = vld [vmem:[%s299 + $0xfc] sm:$0xff]
        %v382 = vld [vmem:[%s299 + $0x104] sm:$0xff]
        %v383 = vld [vmem:[%s299 + $0x10c] sm:$0xff]
        %v384 = vld [vmem:[%s299 + $0x114] sm:$0xf]
        %v385 = vld [vmem:[%s299 + $0x118] sm:$0xff]
        %v386 = vld [vmem:[%s299 + $0x120] sm:$0xff]
        %v387 = vld [vmem:[%s299 + $0x128] sm:$0xff]
        %v388 = vld [vmem:[%s299 + $0x130] sm:$0xf]
        %v389 = vld [vmem:[%s299 + $0x134] sm:$0xff]
        %v390 = vld [vmem:[%s299 + $0x13c] sm:$0xff]
        %v391 = vld [vmem:[%s299 + $0x144] sm:$0xff]
        %v392 = vld [vmem:[%s299 + $0x14c] sm:$0xf]
        %v393 = vld [vmem:[%s299 + $0x150] sm:$0xff]
        %v394 = vld [vmem:[%s299 + $0x158] sm:$0xff]
        %v395 = vld [vmem:[%s299 + $0x160] sm:$0xff]
        %v396 = vld [vmem:[%s299 + $0x168] sm:$0xf]
        %v397 = vld [vmem:[%s299 + $0x16c] sm:$0xff]
        %v398 = vld [vmem:[%s299 + $0x174] sm:$0xff]
        %v399 = vld [vmem:[%s299 + $0x17c] sm:$0xff]
        %v400 = vld [vmem:[%s299 + $0x184] sm:$0xf]
        %v401 = vld [vmem:[%s299 + $0x188] sm:$0xff]
        %v402 = vld [vmem:[%s299 + $0x190] sm:$0xff]
        %v403 = vld [vmem:[%s299 + $0x198] sm:$0xff]
        %v404 = vld [vmem:[%s299 + $0x1a0] sm:$0xf]
        %v405 = vld [vmem:[%s299 + $0x1a4] sm:$0xff]
        %v406 = vld [vmem:[%s299 + $0x1ac] sm:$0xff]
        %v407 = vld [vmem:[%s299 + $0x1b4] sm:$0xff]
        %v408 = vld [vmem:[%s299 + $0x1bc] sm:$0xf]
        %v409 = vld [vmem:[#allocation5] sm:$0xff]
        %v410 = vld [vmem:[#allocation5 + $0x8] sm:$0xff]
        %v411 = vld [vmem:[#allocation5 + $0x10] sm:$0xff]
        %v412 = vld [vmem:[#allocation5 + $0x18] sm:$0xff]
        %v413 = vld [vmem:[#allocation5 + $0x20] sm:$0xff]
        %v414 = vld [vmem:[#allocation5 + $0x28] sm:$0xff]
        %v415 = vld [vmem:[#allocation5 + $0x30] sm:$0xff]
        %v416 = vld [vmem:[#allocation5 + $0x38] sm:$0xff]
        %v417 = vld [vmem:[#allocation5 + $0x40] sm:$0xff]
        %v418 = vld [vmem:[#allocation5 + $0x48] sm:$0xff]
        %v419 = vld [vmem:[#allocation5 + $0x50] sm:$0xff]
        %v420 = vld [vmem:[#allocation5 + $0x58] sm:$0xff]
        %v421 = vld [vmem:[#allocation5 + $0x60] sm:$0xff]
        %v422 = vld [vmem:[#allocation5 + $0x68] sm:$0xff]
        %v423 = vld [vmem:[#allocation5 + $0x70] sm:$0xff]
        %v424 = vld [vmem:[#allocation5 + $0x78] sm:$0xff]
        %v425 = vld [vmem:[#allocation5 + $0x80] sm:$0xff]
        %v426 = vld [vmem:[#allocation5 + $0x88] sm:$0xff]
        %v427 = vld [vmem:[#allocation5 + $0x90] sm:$0xff]
        %v428 = vld [vmem:[#allocation5 + $0x98] sm:$0xff]
        %v429 = vld [vmem:[#allocation5 + $0xa0] sm:$0xff]
        %v430 = vld [vmem:[#allocation5 + $0xa8] sm:$0xff]
        %v431 = vld [vmem:[#allocation5 + $0xb0] sm:$0xff]
        %v432 = vld [vmem:[#allocation5 + $0xb8] sm:$0xff]
        %v433 = vld [vmem:[#allocation5 + $0xc0] sm:$0xff]
        %v434 = vld [vmem:[#allocation5 + $0xc8] sm:$0xff]
        %v435 = vld [vmem:[#allocation5 + $0xd0] sm:$0xff]
        %v436 = vld [vmem:[#allocation5 + $0xd8] sm:$0xff]
        %v437 = vld [vmem:[#allocation5 + $0xe0] sm:$0xff]
        %v438 = vld [vmem:[#allocation5 + $0xe8] sm:$0xff]
        %v439 = vld [vmem:[#allocation5 + $0xf0] sm:$0xff]
        %v440 = vld [vmem:[#allocation5 + $0xf8] sm:$0xff]
        %v441 = vld [vmem:[#allocation5 + $0x100] sm:$0xff]
        %v442 = vld [vmem:[#allocation5 + $0x108] sm:$0xff]
        %v443 = vld [vmem:[#allocation5 + $0x110] sm:$0xff]
        %v444 = vld [vmem:[#allocation5 + $0x118] sm:$0xff]
        %v445 = vld [vmem:[#allocation5 + $0x120] sm:$0xff]
        %v446 = vld [vmem:[#allocation5 + $0x128] sm:$0xff]
        %v447 = vld [vmem:[#allocation5 + $0x130] sm:$0xff]
        %v448 = vld [vmem:[#allocation5 + $0x138] sm:$0xff]
        %v449 = vld [vmem:[#allocation5 + $0x140] sm:$0xff]
        %v450 = vld [vmem:[#allocation5 + $0x148] sm:$0xff]
        %v451 = vld [vmem:[#allocation5 + $0x150] sm:$0xff]
        %v452 = vld [vmem:[#allocation5 + $0x158] sm:$0xff]
        %v453 = vld [vmem:[#allocation5 + $0x160] sm:$0xff]
        %v454 = vld [vmem:[#allocation5 + $0x168] sm:$0xff]
        %v455 = vld [vmem:[#allocation5 + $0x170] sm:$0xff]
        %v456 = vld [vmem:[#allocation5 + $0x178] sm:$0xff]
        %v457 = vld [vmem:[#allocation5 + $0x180] sm:$0xff]
        %v458 = vld [vmem:[#allocation5 + $0x188] sm:$0xff]
        %v459 = vld [vmem:[#allocation5 + $0x190] sm:$0xff]
        %v460 = vld [vmem:[#allocation5 + $0x198] sm:$0xff]
        %v461 = vld [vmem:[#allocation5 + $0x1a0] sm:$0xff]
        %v462 = vld [vmem:[#allocation5 + $0x1a8] sm:$0xff]
        %v463 = vld [vmem:[#allocation5 + $0x1b0] sm:$0xff]
        %v464 = vld [vmem:[#allocation5 + $0x1b8] sm:$0xff]
        %v465 = vld [vmem:[#allocation5 + $0x1c0] sm:$0xff]
        %v466 = vld [vmem:[#allocation5 + $0x1c8] sm:$0xff]
        %v467 = vld [vmem:[#allocation5 + $0x1d0] sm:$0xff]
        %v468 = vld [vmem:[#allocation5 + $0x1d8] sm:$0xff]
        %v469 = vld [vmem:[#allocation5 + $0x1e0] sm:$0xff]
        %v470 = vld [vmem:[#allocation5 + $0x1e8] sm:$0xff]
        %v471 = vld [vmem:[#allocation5 + $0x1f0] sm:$0xff]
        %v472 = vld [vmem:[#allocation5 + $0x1f8] sm:$0xff]
        %v473 = vld [vmem:[#allocation5 + $0x200] sm:$0xff]
        %v474 = vld [vmem:[#allocation5 + $0x208] sm:$0xff]
        %v475 = vld [vmem:[#allocation5 + $0x210] sm:$0xff]
        %v476 = vld [vmem:[#allocation5 + $0x218] sm:$0xff]
        %v477 = vld [vmem:[#allocation5 + $0x220] sm:$0xff]
        %v478 = vld [vmem:[#allocation5 + $0x228] sm:$0xff]
        %v479 = vld [vmem:[#allocation5 + $0x230] sm:$0xff]
        %v480 = vld [vmem:[#allocation5 + $0x238] sm:$0xff]
        %v481 = vld [vmem:[#allocation5 + $0x240] sm:$0xff]
        %v482 = vld [vmem:[#allocation5 + $0x248] sm:$0xff]
        %v483 = vld [vmem:[#allocation5 + $0x250] sm:$0xff]
        %v484 = vld [vmem:[#allocation5 + $0x258] sm:$0xff]
        %v485 = vld [vmem:[#allocation5 + $0x260] sm:$0xff]
        %v486 = vld [vmem:[#allocation5 + $0x268] sm:$0xff]
        %v487 = vld [vmem:[#allocation5 + $0x270] sm:$0xff]
        %v488 = vld [vmem:[#allocation5 + $0x278] sm:$0xff]
        %v489 = vld [vmem:[#allocation5 + $0x280] sm:$0xff]
        %v490 = vld [vmem:[#allocation5 + $0x288] sm:$0xff]
        %v491 = vld [vmem:[#allocation5 + $0x290] sm:$0xff]
        %v492 = vld [vmem:[#allocation5 + $0x298] sm:$0xff]
        %v493 = vld [vmem:[#allocation5 + $0x2a0] sm:$0xff]
        %v494 = vld [vmem:[#allocation5 + $0x2a8] sm:$0xff]
        %v495 = vld [vmem:[#allocation5 + $0x2b0] sm:$0xff]
        %v496 = vld [vmem:[#allocation5 + $0x2b8] sm:$0xff]
        %v497 = vld [vmem:[#allocation5 + $0x2c0] sm:$0xff]
        %v498 = vld [vmem:[#allocation5 + $0x2c8] sm:$0xff]
        %v499 = vld [vmem:[#allocation5 + $0x2d0] sm:$0xff]
        %v500 = vld [vmem:[#allocation5 + $0x2d8] sm:$0xff]
        %v501 = vld [vmem:[#allocation5 + $0x2e0] sm:$0xff]
        %v502 = vld [vmem:[#allocation5 + $0x2e8] sm:$0xff]
        %v503 = vld [vmem:[#allocation5 + $0x2f0] sm:$0xff]
        %v504 = vld [vmem:[#allocation5 + $0x2f8] sm:$0xff]
        %v505 = vld [vmem:[#allocation5 + $0x300] sm:$0xff]
        %v506 = vld [vmem:[#allocation5 + $0x308] sm:$0xff]
        %v507 = vld [vmem:[#allocation5 + $0x310] sm:$0xff]
        %v508 = vld [vmem:[#allocation5 + $0x318] sm:$0xff]
        %v509 = vld [vmem:[#allocation5 + $0x320] sm:$0xff]
        %v510 = vld [vmem:[#allocation5 + $0x328] sm:$0xff]
        %v511 = vld [vmem:[#allocation5 + $0x330] sm:$0xff]
        %v512 = vld [vmem:[#allocation5 + $0x338] sm:$0xff]
        %v513 = vld [vmem:[#allocation5 + $0x340] sm:$0xff]
        %v514 = vld [vmem:[#allocation5 + $0x348] sm:$0xff]
        %v515 = vld [vmem:[#allocation5 + $0x350] sm:$0xff]
        %v516 = vld [vmem:[#allocation5 + $0x358] sm:$0xff]
        %v517 = vld [vmem:[#allocation5 + $0x360] sm:$0xff]
        %v518 = vld [vmem:[#allocation5 + $0x368] sm:$0xff]
        %v519 = vld [vmem:[#allocation5 + $0x370] sm:$0xff]
        %v520 = vld [vmem:[#allocation5 + $0x378] sm:$0xff]
        %v521 = vld [vmem:[#allocation5 + $0x380] sm:$0xff]
        %v522 = vld [vmem:[#allocation5 + $0x388] sm:$0xff]
        %v523 = vld [vmem:[#allocation5 + $0x390] sm:$0xff]
        %v524 = vld [vmem:[#allocation5 + $0x398] sm:$0xff]
        %v525 = vld [vmem:[#allocation5 + $0x3a0] sm:$0xff]
        %v526 = vld [vmem:[#allocation5 + $0x3a8] sm:$0xff]
        %v527 = vld [vmem:[#allocation5 + $0x3b0] sm:$0xff]
        %v528 = vld [vmem:[#allocation5 + $0x3b8] sm:$0xff]
        %v529 = vld [vmem:[#allocation5 + $0x3c0] sm:$0xff]
        %v530 = vld [vmem:[#allocation5 + $0x3c8] sm:$0xff]
        %v531 = vld [vmem:[#allocation5 + $0x3d0] sm:$0xff]
        %v532 = vld [vmem:[#allocation5 + $0x3d8] sm:$0xff]
        %v533 = vld [vmem:[#allocation5 + $0x3e0] sm:$0xff]
        %v534 = vld [vmem:[#allocation5 + $0x3e8] sm:$0xff]
        %v535 = vld [vmem:[#allocation5 + $0x3f0] sm:$0xff]
        %v536 = vld [vmem:[#allocation5 + $0x3f8] sm:$0xff]
        %v537 = vld [vmem:[#allocation5 + $0x400] sm:$0xff]
        %v538 = vld [vmem:[#allocation5 + $0x408] sm:$0xff]
        %v539 = vld [vmem:[#allocation5 + $0x410] sm:$0xff]
        %v540 = vld [vmem:[#allocation5 + $0x418] sm:$0xff]
        %v541 = vld [vmem:[#allocation5 + $0x420] sm:$0xff]
        %v542 = vld [vmem:[#allocation5 + $0x428] sm:$0xff]
        %v543 = vld [vmem:[#allocation5 + $0x430] sm:$0xff]
        %v544 = vld [vmem:[#allocation5 + $0x438] sm:$0xff]
        %v545 = vld [vmem:[#allocation5 + $0x440] sm:$0xff]
        %v546 = vld [vmem:[#allocation5 + $0x448] sm:$0xff]
        %v547 = vld [vmem:[#allocation5 + $0x450] sm:$0xff]
        %v548 = vld [vmem:[#allocation5 + $0x458] sm:$0xff]
        %v549 = vld [vmem:[#allocation5 + $0x460] sm:$0xff]
        %v550 = vld [vmem:[#allocation5 + $0x468] sm:$0xff]
        %v551 = vld [vmem:[#allocation5 + $0x470] sm:$0xff]
        %v552 = vld [vmem:[#allocation5 + $0x478] sm:$0xff]
        %v553 = vld [vmem:[#allocation5 + $0x480] sm:$0xff]
        %v554 = vld [vmem:[#allocation5 + $0x488] sm:$0xff]
        %v555 = vld [vmem:[#allocation5 + $0x490] sm:$0xff]
        %v556 = vld [vmem:[#allocation5 + $0x498] sm:$0xff]
        %v557 = vld [vmem:[#allocation5 + $0x4a0] sm:$0xff]
        %v558 = vld [vmem:[#allocation5 + $0x4a8] sm:$0xff]
        %v559 = vld [vmem:[#allocation5 + $0x4b0] sm:$0xff]
        %v560 = vld [vmem:[#allocation5 + $0x4b8] sm:$0xff]
        %v561 = vld [vmem:[#allocation5 + $0x4c0] sm:$0xff]
        %v562 = vld [vmem:[#allocation5 + $0x4c8] sm:$0xff]
        %v563 = vld [vmem:[#allocation5 + $0x4d0] sm:$0xff]
        %v564 = vld [vmem:[#allocation5 + $0x4d8] sm:$0xff]
        %v565 = vld [vmem:[#allocation5 + $0x4e0] sm:$0xff]
        %v566 = vld [vmem:[#allocation5 + $0x4e8] sm:$0xff]
        %v567 = vld [vmem:[#allocation5 + $0x4f0] sm:$0xff]
        %v568 = vld [vmem:[#allocation5 + $0x4f8] sm:$0xff]
        %v569 = vld [vmem:[#allocation5 + $0x500] sm:$0xff]
        %v570 = vld [vmem:[#allocation5 + $0x508] sm:$0xff]
        %v571 = vld [vmem:[#allocation5 + $0x510] sm:$0xff]
        %v572 = vld [vmem:[#allocation5 + $0x518] sm:$0xff]
        %v573 = vld [vmem:[#allocation5 + $0x520] sm:$0xff]
        %v574 = vld [vmem:[#allocation5 + $0x528] sm:$0xff]
        %v575 = vld [vmem:[#allocation5 + $0x530] sm:$0xff]
        %v576 = vld [vmem:[#allocation5 + $0x538] sm:$0xff]
        %v577 = vld [vmem:[#allocation5 + $0x540] sm:$0xff]
        %v578 = vld [vmem:[#allocation5 + $0x548] sm:$0xff]
        %v579 = vld [vmem:[#allocation5 + $0x550] sm:$0xff]
        %v580 = vld [vmem:[#allocation5 + $0x558] sm:$0xff]
        %v581 = vld [vmem:[#allocation5 + $0x560] sm:$0xff]
        %v582 = vld [vmem:[#allocation5 + $0x568] sm:$0xff]
        %v583 = vld [vmem:[#allocation5 + $0x570] sm:$0xff]
        %v584 = vld [vmem:[#allocation5 + $0x578] sm:$0xff]
        %v585 = vld [vmem:[#allocation5 + $0x580] sm:$0xff]
        %v586 = vld [vmem:[#allocation5 + $0x588] sm:$0xff]
        %v587 = vld [vmem:[#allocation5 + $0x590] sm:$0xff]
        %v588 = vld [vmem:[#allocation5 + $0x598] sm:$0xff]
        %v589 = vld [vmem:[#allocation5 + $0x5a0] sm:$0xff]
        %v590 = vld [vmem:[#allocation5 + $0x5a8] sm:$0xff]
        %v591 = vld [vmem:[#allocation5 + $0x5b0] sm:$0xff]
        %v592 = vld [vmem:[#allocation5 + $0x5b8] sm:$0xff]
        %v593 = vld [vmem:[#allocation5 + $0x5c0] sm:$0xff]
        %v594 = vld [vmem:[#allocation5 + $0x5c8] sm:$0xff]
        %v595 = vld [vmem:[#allocation5 + $0x5d0] sm:$0xff]
        %v596 = vld [vmem:[#allocation5 + $0x5d8] sm:$0xff]
        %v597 = vld [vmem:[#allocation5 + $0x5e0] sm:$0xff]
        %v598 = vld [vmem:[#allocation5 + $0x5e8] sm:$0xff]
        %v599 = vld [vmem:[#allocation5 + $0x5f0] sm:$0xff]
        %v600 = vld [vmem:[#allocation5 + $0x5f8] sm:$0xff]
        %v601 = vld [vmem:[#allocation5 + $0x600] sm:$0xff]
        %v602 = vld [vmem:[#allocation5 + $0x608] sm:$0xff]
        %v603 = vld [vmem:[#allocation5 + $0x610] sm:$0xff]
        %v604 = vld [vmem:[#allocation5 + $0x618] sm:$0xff]
        %v605 = vld [vmem:[#allocation5 + $0x620] sm:$0xff]
        %v606 = vld [vmem:[#allocation5 + $0x628] sm:$0xff]
        %v607 = vld [vmem:[#allocation5 + $0x630] sm:$0xff]
        %v608 = vld [vmem:[#allocation5 + $0x638] sm:$0xff]
        %v609 = vld [vmem:[#allocation5 + $0x640] sm:$0xff]
        %v610 = vld [vmem:[#allocation5 + $0x648] sm:$0xff]
        %v611 = vld [vmem:[#allocation5 + $0x650] sm:$0xff]
        %v612 = vld [vmem:[#allocation5 + $0x658] sm:$0xff]
        %v613 = vld [vmem:[#allocation5 + $0x660] sm:$0xff]
        %v614 = vld [vmem:[#allocation5 + $0x668] sm:$0xff]
        %v615 = vld [vmem:[#allocation5 + $0x670] sm:$0xff]
        %v616 = vld [vmem:[#allocation5 + $0x678] sm:$0xff]
        %v617 = vld [vmem:[#allocation5 + $0x680] sm:$0xff]
        %v618 = vld [vmem:[#allocation5 + $0x688] sm:$0xff]
        %v619 = vld [vmem:[#allocation5 + $0x690] sm:$0xff]
        %v620 = vld [vmem:[#allocation5 + $0x698] sm:$0xff]
        %v621 = vld [vmem:[#allocation5 + $0x6a0] sm:$0xff]
        %v622 = vld [vmem:[#allocation5 + $0x6a8] sm:$0xff]
        %v623 = vld [vmem:[#allocation5 + $0x6b0] sm:$0xff]
        %v624 = vld [vmem:[#allocation5 + $0x6b8] sm:$0xff]
        %v625 = vld [vmem:[#allocation5 + $0x6c0] sm:$0xff]
        %v626 = vld [vmem:[#allocation5 + $0x6c8] sm:$0xff]
        %v627 = vld [vmem:[#allocation5 + $0x6d0] sm:$0xff]
        %v628 = vld [vmem:[#allocation5 + $0x6d8] sm:$0xff]
        %v629 = vld [vmem:[#allocation5 + $0x6e0] sm:$0xff]
        %v630 = vld [vmem:[#allocation5 + $0x6e8] sm:$0xff]
        %v631 = vld [vmem:[#allocation5 + $0x6f0] sm:$0xff]
        %v632 = vld [vmem:[#allocation5 + $0x6f8] sm:$0xff]
        %v633 = vld [vmem:[%s2] sm:$0xf]
        %v635 = vlaneseq
        %v636 = vshrl.u32 %v635, 7
        %v637 = vsub.s32 0, %v636
        %v638 = vrot.slane %v633, %v637
        %v639 = vlaneseq
        %v640 = vshrl.u32 %v639, 7
        %v641 = vsub.s32 1, %v640
        %v642 = vrot.slane %v633, %v641
        %v643 = vlaneseq
        %v644 = vshrl.u32 %v643, 7
        %v645 = vsub.s32 2, %v644
        %v646 = vrot.slane %v633, %v645
        %v647 = vlaneseq
        %v648 = vshrl.u32 %v647, 7
        %v649 = vsub.s32 3, %v648
        %v650 = vrot.slane %v633, %v649
        %v719 = vunpack.c.l.b16 %v345
        %v720 = vunpack.c.h.b16 %v345
        %v721 = vunpack.c.l.b16 %v346
        %v722 = vunpack.c.h.b16 %v346
        %v723 = vunpack.c.l.b16 %v347
        %v724 = vunpack.c.h.b16 %v347
        %v725 = vunpack.c.l.b16 %v348
        %v726 = vunpack.c.l.b16 %v349
        %v727 = vunpack.c.h.b16 %v349
        %v728 = vunpack.c.l.b16 %v350
        %v729 = vunpack.c.h.b16 %v350
        %v730 = vunpack.c.l.b16 %v351
        %v731 = vunpack.c.h.b16 %v351
        %v732 = vunpack.c.l.b16 %v352
        %v733 = vunpack.c.l.b16 %v353
        %v734 = vunpack.c.h.b16 %v353
        %v735 = vunpack.c.l.b16 %v354
        %v736 = vunpack.c.h.b16 %v354
        %v737 = vunpack.c.l.b16 %v355
        %v738 = vunpack.c.h.b16 %v355
        %v739 = vunpack.c.l.b16 %v356
        %v740 = vunpack.c.l.b16 %v357
        %v741 = vunpack.c.h.b16 %v357
        %v742 = vunpack.c.l.b16 %v358
        %v743 = vunpack.c.h.b16 %v358
        %v744 = vunpack.c.l.b16 %v359
        %v745 = vunpack.c.h.b16 %v359
        %v746 = vunpack.c.l.b16 %v360
        %v747 = vunpack.c.l.b16 %v361
        %v748 = vunpack.c.h.b16 %v361
        %v749 = vunpack.c.l.b16 %v362
        %v750 = vunpack.c.h.b16 %v362
        %v751 = vunpack.c.l.b16 %v363
        %v752 = vunpack.c.h.b16 %v363
        %v753 = vunpack.c.l.b16 %v364
        %v754 = vunpack.c.l.b16 %v365
        %v755 = vunpack.c.h.b16 %v365
        %v756 = vunpack.c.l.b16 %v366
        %v757 = vunpack.c.h.b16 %v366
        %v758 = vunpack.c.l.b16 %v367
        %v759 = vunpack.c.h.b16 %v367
        %v760 = vunpack.c.l.b16 %v368
        %v761 = vunpack.c.l.b16 %v369
        %v762 = vunpack.c.h.b16 %v369
        %v763 = vunpack.c.l.b16 %v370
        %v764 = vunpack.c.h.b16 %v370
        %v765 = vunpack.c.l.b16 %v371
        %v766 = vunpack.c.h.b16 %v371
        %v767 = vunpack.c.l.b16 %v372
        %v768 = vunpack.c.l.b16 %v373
        %v769 = vunpack.c.h.b16 %v373
        %v770 = vunpack.c.l.b16 %v374
        %v771 = vunpack.c.h.b16 %v374
        %v772 = vunpack.c.l.b16 %v375
        %v773 = vunpack.c.h.b16 %v375
        %v774 = vunpack.c.l.b16 %v376
        %v775 = vunpack.c.l.b16 %v377
        %v776 = vunpack.c.h.b16 %v377
        %v777 = vunpack.c.l.b16 %v378
        %v778 = vunpack.c.h.b16 %v378
        %v779 = vunpack.c.l.b16 %v379
        %v780 = vunpack.c.h.b16 %v379
        %v781 = vunpack.c.l.b16 %v380
        %v782 = vunpack.c.l.b16 %v381
        %v783 = vunpack.c.h.b16 %v381
        %v784 = vunpack.c.l.b16 %v382
        %v785 = vunpack.c.h.b16 %v382
        %v786 = vunpack.c.l.b16 %v383
        %v787 = vunpack.c.h.b16 %v383
        %v788 = vunpack.c.l.b16 %v384
        %v789 = vunpack.c.l.b16 %v385
        %v790 = vunpack.c.h.b16 %v385
        %v791 = vunpack.c.l.b16 %v386
        %v792 = vunpack.c.h.b16 %v386
        %v793 = vunpack.c.l.b16 %v387
        %v794 = vunpack.c.h.b16 %v387
        %v795 = vunpack.c.l.b16 %v388
        %v796 = vunpack.c.l.b16 %v389
        %v797 = vunpack.c.h.b16 %v389
        %v798 = vunpack.c.l.b16 %v390
        %v799 = vunpack.c.h.b16 %v390
        %v800 = vunpack.c.l.b16 %v391
        %v801 = vunpack.c.h.b16 %v391
        %v802 = vunpack.c.l.b16 %v392
        %v803 = vunpack.c.l.b16 %v393
        %v804 = vunpack.c.h.b16 %v393
        %v805 = vunpack.c.l.b16 %v394
        %v806 = vunpack.c.h.b16 %v394
        %v807 = vunpack.c.l.b16 %v395
        %v808 = vunpack.c.h.b16 %v395
        %v809 = vunpack.c.l.b16 %v396
        %v810 = vunpack.c.l.b16 %v397
        %v811 = vunpack.c.h.b16 %v397
        %v812 = vunpack.c.l.b16 %v398
        %v813 = vunpack.c.h.b16 %v398
        %v814 = vunpack.c.l.b16 %v399
        %v815 = vunpack.c.h.b16 %v399
        %v816 = vunpack.c.l.b16 %v400
        %v817 = vunpack.c.l.b16 %v401
        %v818 = vunpack.c.h.b16 %v401
        %v819 = vunpack.c.l.b16 %v402
        %v820 = vunpack.c.h.b16 %v402
        %v821 = vunpack.c.l.b16 %v403
        %v822 = vunpack.c.h.b16 %v403
        %v823 = vunpack.c.l.b16 %v404
        %v824 = vunpack.c.l.b16 %v405
        %v825 = vunpack.c.h.b16 %v405
        %v826 = vunpack.c.l.b16 %v406
        %v827 = vunpack.c.h.b16 %v406
        %v828 = vunpack.c.l.b16 %v407
        %v829 = vunpack.c.h.b16 %v407
        %v830 = vunpack.c.l.b16 %v408
        %v831 = vpack.c.b16 %v726, %v719
        %v832 = vpack.c.b16 %v727, %v720
        %v833 = vpack.c.b16 %v728, %v721
        %v834 = vpack.c.b16 %v729, %v722
        %v835 = vpack.c.b16 %v730, %v723
        %v836 = vpack.c.b16 %v731, %v724
        %v837 = vpack.c.b16 %v732, %v725
        %v838 = vpack.c.b16 %v740, %v733
        %v839 = vpack.c.b16 %v741, %v734
        %v840 = vpack.c.b16 %v742, %v735
        %v841 = vpack.c.b16 %v743, %v736
        %v842 = vpack.c.b16 %v744, %v737
        %v843 = vpack.c.b16 %v745, %v738
        %v844 = vpack.c.b16 %v746, %v739
        %v845 = vpack.c.b16 %v754, %v747
        %v846 = vpack.c.b16 %v755, %v748
        %v847 = vpack.c.b16 %v756, %v749
        %v848 = vpack.c.b16 %v757, %v750
        %v849 = vpack.c.b16 %v758, %v751
        %v850 = vpack.c.b16 %v759, %v752
        %v851 = vpack.c.b16 %v760, %v753
        %v852 = vpack.c.b16 %v768, %v761
        %v853 = vpack.c.b16 %v769, %v762
        %v854 = vpack.c.b16 %v770, %v763
        %v855 = vpack.c.b16 %v771, %v764
        %v856 = vpack.c.b16 %v772, %v765
        %v857 = vpack.c.b16 %v773, %v766
        %v858 = vpack.c.b16 %v774, %v767
        %v859 = vpack.c.b16 %v782, %v775
        %v860 = vpack.c.b16 %v783, %v776
        %v861 = vpack.c.b16 %v784, %v777
        %v862 = vpack.c.b16 %v785, %v778
        %v863 = vpack.c.b16 %v786, %v779
        %v864 = vpack.c.b16 %v787, %v780
        %v865 = vpack.c.b16 %v788, %v781
        %v866 = vpack.c.b16 %v796, %v789
        %v867 = vpack.c.b16 %v797, %v790
        %v868 = vpack.c.b16 %v798, %v791
        %v869 = vpack.c.b16 %v799, %v792
        %v870 = vpack.c.b16 %v800, %v793
        %v871 = vpack.c.b16 %v801, %v794
        %v872 = vpack.c.b16 %v802, %v795
        %v873 = vpack.c.b16 %v810, %v803
        %v874 = vpack.c.b16 %v811, %v804
        %v875 = vpack.c.b16 %v812, %v805
        %v876 = vpack.c.b16 %v813, %v806
        %v877 = vpack.c.b16 %v814, %v807
        %v878 = vpack.c.b16 %v815, %v808
        %v879 = vpack.c.b16 %v816, %v809
        %v880 = vpack.c.b16 %v824, %v817
        %v881 = vpack.c.b16 %v825, %v818
        %v882 = vpack.c.b16 %v826, %v819
        %v883 = vpack.c.b16 %v827, %v820
        %v884 = vpack.c.b16 %v828, %v821
        %v885 = vpack.c.b16 %v829, %v822
        %v886 = vpack.c.b16 %v830, %v823
        %v1167 = vunpack.c.l.b16 %v409
        %v1168 = vunpack.c.h.b16 %v409
        %v1169 = vunpack.c.l.b16 %v410
        %v1170 = vunpack.c.h.b16 %v410
        %v1171 = vunpack.c.l.b16 %v411
        %v1172 = vunpack.c.h.b16 %v411
        %v1173 = vunpack.c.l.b16 %v412
        %v1174 = vunpack.c.h.b16 %v412
        %v1175 = vunpack.c.l.b16 %v413
        %v1176 = vunpack.c.h.b16 %v413
        %v1177 = vunpack.c.l.b16 %v414
        %v1178 = vunpack.c.h.b16 %v414
        %v1179 = vunpack.c.l.b16 %v415
        %v1180 = vunpack.c.h.b16 %v415
        %v1181 = vunpack.c.l.b16 %v416
        %v1182 = vunpack.c.h.b16 %v416
        %v1183 = vunpack.c.l.b16 %v417
        %v1184 = vunpack.c.h.b16 %v417
        %v1185 = vunpack.c.l.b16 %v418
        %v1186 = vunpack.c.h.b16 %v418
        %v1187 = vunpack.c.l.b16 %v419
        %v1188 = vunpack.c.h.b16 %v419
        %v1189 = vunpack.c.l.b16 %v420
        %v1190 = vunpack.c.h.b16 %v420
        %v1191 = vunpack.c.l.b16 %v421
        %v1192 = vunpack.c.h.b16 %v421
        %v1193 = vunpack.c.l.b16 %v422
        %v1194 = vunpack.c.h.b16 %v422
        %v1195 = vunpack.c.l.b16 %v423
        %v1196 = vunpack.c.h.b16 %v423
        %v1197 = vunpack.c.l.b16 %v424
        %v1198 = vunpack.c.h.b16 %v424
        %v1199 = vunpack.c.l.b16 %v425
        %v1200 = vunpack.c.h.b16 %v425
        %v1201 = vunpack.c.l.b16 %v426
        %v1202 = vunpack.c.h.b16 %v426
        %v1203 = vunpack.c.l.b16 %v427
        %v1204 = vunpack.c.h.b16 %v427
        %v1205 = vunpack.c.l.b16 %v428
        %v1206 = vunpack.c.h.b16 %v428
        %v1207 = vunpack.c.l.b16 %v429
        %v1208 = vunpack.c.h.b16 %v429
        %v1209 = vunpack.c.l.b16 %v430
        %v1210 = vunpack.c.h.b16 %v430
        %v1211 = vunpack.c.l.b16 %v431
        %v1212 = vunpack.c.h.b16 %v431
        %v1213 = vunpack.c.l.b16 %v432
        %v1214 = vunpack.c.h.b16 %v432
        %v1215 = vunpack.c.l.b16 %v433
        %v1216 = vunpack.c.h.b16 %v433
        %v1217 = vunpack.c.l.b16 %v434
        %v1218 = vunpack.c.h.b16 %v434
        %v1219 = vunpack.c.l.b16 %v435
        %v1220 = vunpack.c.h.b16 %v435
        %v1221 = vunpack.c.l.b16 %v436
        %v1222 = vunpack.c.h.b16 %v436
        %v1223 = vunpack.c.l.b16 %v437
        %v1224 = vunpack.c.h.b16 %v437
        %v1225 = vunpack.c.l.b16 %v438
        %v1226 = vunpack.c.h.b16 %v438
        %v1227 = vunpack.c.l.b16 %v439
        %v1228 = vunpack.c.h.b16 %v439
        %v1229 = vunpack.c.l.b16 %v440
        %v1230 = vunpack.c.h.b16 %v440
        %v1231 = vunpack.c.l.b16 %v441
        %v1232 = vunpack.c.h.b16 %v441
        %v1233 = vunpack.c.l.b16 %v442
        %v1234 = vunpack.c.h.b16 %v442
        %v1235 = vunpack.c.l.b16 %v443
        %v1236 = vunpack.c.h.b16 %v443
        %v1237 = vunpack.c.l.b16 %v444
        %v1238 = vunpack.c.h.b16 %v444
        %v1239 = vunpack.c.l.b16 %v445
        %v1240 = vunpack.c.h.b16 %v445
        %v1241 = vunpack.c.l.b16 %v446
        %v1242 = vunpack.c.h.b16 %v446
        %v1243 = vunpack.c.l.b16 %v447
        %v1244 = vunpack.c.h.b16 %v447
        %v1245 = vunpack.c.l.b16 %v448
        %v1246 = vunpack.c.h.b16 %v448
        %v1247 = vunpack.c.l.b16 %v449
        %v1248 = vunpack.c.h.b16 %v449
        %v1249 = vunpack.c.l.b16 %v450
        %v1250 = vunpack.c.h.b16 %v450
        %v1251 = vunpack.c.l.b16 %v451
        %v1252 = vunpack.c.h.b16 %v451
        %v1253 = vunpack.c.l.b16 %v452
        %v1254 = vunpack.c.h.b16 %v452
        %v1255 = vunpack.c.l.b16 %v453
        %v1256 = vunpack.c.h.b16 %v453
        %v1257 = vunpack.c.l.b16 %v454
        %v1258 = vunpack.c.h.b16 %v454
        %v1259 = vunpack.c.l.b16 %v455
        %v1260 = vunpack.c.h.b16 %v455
        %v1261 = vunpack.c.l.b16 %v456
        %v1262 = vunpack.c.h.b16 %v456
        %v1263 = vunpack.c.l.b16 %v457
        %v1264 = vunpack.c.h.b16 %v457
        %v1265 = vunpack.c.l.b16 %v458
        %v1266 = vunpack.c.h.b16 %v458
        %v1267 = vunpack.c.l.b16 %v459
        %v1268 = vunpack.c.h.b16 %v459
        %v1269 = vunpack.c.l.b16 %v460
        %v1270 = vunpack.c.h.b16 %v460
        %v1271 = vunpack.c.l.b16 %v461
        %v1272 = vunpack.c.h.b16 %v461
        %v1273 = vunpack.c.l.b16 %v462
        %v1274 = vunpack.c.h.b16 %v462
        %v1275 = vunpack.c.l.b16 %v463
        %v1276 = vunpack.c.h.b16 %v463
        %v1277 = vunpack.c.l.b16 %v464
        %v1278 = vunpack.c.h.b16 %v464
        %v1279 = vunpack.c.l.b16 %v465
        %v1280 = vunpack.c.h.b16 %v465
        %v1281 = vunpack.c.l.b16 %v466
        %v1282 = vunpack.c.h.b16 %v466
        %v1283 = vunpack.c.l.b16 %v467
        %v1284 = vunpack.c.h.b16 %v467
        %v1285 = vunpack.c.l.b16 %v468
        %v1286 = vunpack.c.h.b16 %v468
        %v1287 = vunpack.c.l.b16 %v469
        %v1288 = vunpack.c.h.b16 %v469
        %v1289 = vunpack.c.l.b16 %v470
        %v1290 = vunpack.c.h.b16 %v470
        %v1291 = vunpack.c.l.b16 %v471
        %v1292 = vunpack.c.h.b16 %v471
        %v1293 = vunpack.c.l.b16 %v472
        %v1294 = vunpack.c.h.b16 %v472
        %v1295 = vunpack.c.l.b16 %v473
        %v1296 = vunpack.c.h.b16 %v473
        %v1297 = vunpack.c.l.b16 %v474
        %v1298 = vunpack.c.h.b16 %v474
        %v1299 = vunpack.c.l.b16 %v475
        %v1300 = vunpack.c.h.b16 %v475
        %v1301 = vunpack.c.l.b16 %v476
        %v1302 = vunpack.c.h.b16 %v476
        %v1303 = vunpack.c.l.b16 %v477
        %v1304 = vunpack.c.h.b16 %v477
        %v1305 = vunpack.c.l.b16 %v478
        %v1306 = vunpack.c.h.b16 %v478
        %v1307 = vunpack.c.l.b16 %v479
        %v1308 = vunpack.c.h.b16 %v479
        %v1309 = vunpack.c.l.b16 %v480
        %v1310 = vunpack.c.h.b16 %v480
        %v1311 = vunpack.c.l.b16 %v481
        %v1312 = vunpack.c.h.b16 %v481
        %v1313 = vunpack.c.l.b16 %v482
        %v1314 = vunpack.c.h.b16 %v482
        %v1315 = vunpack.c.l.b16 %v483
        %v1316 = vunpack.c.h.b16 %v483
        %v1317 = vunpack.c.l.b16 %v484
        %v1318 = vunpack.c.h.b16 %v484
        %v1319 = vunpack.c.l.b16 %v485
        %v1320 = vunpack.c.h.b16 %v485
        %v1321 = vunpack.c.l.b16 %v486
        %v1322 = vunpack.c.h.b16 %v486
        %v1323 = vunpack.c.l.b16 %v487
        %v1324 = vunpack.c.h.b16 %v487
        %v1325 = vunpack.c.l.b16 %v488
        %v1326 = vunpack.c.h.b16 %v488
        %v1327 = vunpack.c.l.b16 %v489
        %v1328 = vunpack.c.h.b16 %v489
        %v1329 = vunpack.c.l.b16 %v490
        %v1330 = vunpack.c.h.b16 %v490
        %v1331 = vunpack.c.l.b16 %v491
        %v1332 = vunpack.c.h.b16 %v491
        %v1333 = vunpack.c.l.b16 %v492
        %v1334 = vunpack.c.h.b16 %v492
        %v1335 = vunpack.c.l.b16 %v493
        %v1336 = vunpack.c.h.b16 %v493
        %v1337 = vunpack.c.l.b16 %v494
        %v1338 = vunpack.c.h.b16 %v494
        %v1339 = vunpack.c.l.b16 %v495
        %v1340 = vunpack.c.h.b16 %v495
        %v1341 = vunpack.c.l.b16 %v496
        %v1342 = vunpack.c.h.b16 %v496
        %v1343 = vunpack.c.l.b16 %v497
        %v1344 = vunpack.c.h.b16 %v497
        %v1345 = vunpack.c.l.b16 %v498
        %v1346 = vunpack.c.h.b16 %v498
        %v1347 = vunpack.c.l.b16 %v499
        %v1348 = vunpack.c.h.b16 %v499
        %v1349 = vunpack.c.l.b16 %v500
        %v1350 = vunpack.c.h.b16 %v500
        %v1351 = vunpack.c.l.b16 %v501
        %v1352 = vunpack.c.h.b16 %v501
        %v1353 = vunpack.c.l.b16 %v502
        %v1354 = vunpack.c.h.b16 %v502
        %v1355 = vunpack.c.l.b16 %v503
        %v1356 = vunpack.c.h.b16 %v503
        %v1357 = vunpack.c.l.b16 %v504
        %v1358 = vunpack.c.h.b16 %v504
        %v1359 = vunpack.c.l.b16 %v505
        %v1360 = vunpack.c.h.b16 %v505
        %v1361 = vunpack.c.l.b16 %v506
        %v1362 = vunpack.c.h.b16 %v506
        %v1363 = vunpack.c.l.b16 %v507
        %v1364 = vunpack.c.h.b16 %v507
        %v1365 = vunpack.c.l.b16 %v508
        %v1366 = vunpack.c.h.b16 %v508
        %v1367 = vunpack.c.l.b16 %v509
        %v1368 = vunpack.c.h.b16 %v509
        %v1369 = vunpack.c.l.b16 %v510
        %v1370 = vunpack.c.h.b16 %v510
        %v1371 = vunpack.c.l.b16 %v511
        %v1372 = vunpack.c.h.b16 %v511
        %v1373 = vunpack.c.l.b16 %v512
        %v1374 = vunpack.c.h.b16 %v512
        %v1375 = vunpack.c.l.b16 %v513
        %v1376 = vunpack.c.h.b16 %v513
        %v1377 = vunpack.c.l.b16 %v514
        %v1378 = vunpack.c.h.b16 %v514
        %v1379 = vunpack.c.l.b16 %v515
        %v1380 = vunpack.c.h.b16 %v515
        %v1381 = vunpack.c.l.b16 %v516
        %v1382 = vunpack.c.h.b16 %v516
        %v1383 = vunpack.c.l.b16 %v517
        %v1384 = vunpack.c.h.b16 %v517
        %v1385 = vunpack.c.l.b16 %v518
        %v1386 = vunpack.c.h.b16 %v518
        %v1387 = vunpack.c.l.b16 %v519
        %v1388 = vunpack.c.h.b16 %v519
        %v1389 = vunpack.c.l.b16 %v520
        %v1390 = vunpack.c.h.b16 %v520
        %v1391 = vunpack.c.l.b16 %v521
        %v1392 = vunpack.c.h.b16 %v521
        %v1393 = vunpack.c.l.b16 %v522
        %v1394 = vunpack.c.h.b16 %v522
        %v1395 = vunpack.c.l.b16 %v523
        %v1396 = vunpack.c.h.b16 %v523
        %v1397 = vunpack.c.l.b16 %v524
        %v1398 = vunpack.c.h.b16 %v524
        %v1399 = vunpack.c.l.b16 %v525
        %v1400 = vunpack.c.h.b16 %v525
        %v1401 = vunpack.c.l.b16 %v526
        %v1402 = vunpack.c.h.b16 %v526
        %v1403 = vunpack.c.l.b16 %v527
        %v1404 = vunpack.c.h.b16 %v527
        %v1405 = vunpack.c.l.b16 %v528
        %v1406 = vunpack.c.h.b16 %v528
        %v1407 = vunpack.c.l.b16 %v529
        %v1408 = vunpack.c.h.b16 %v529
        %v1409 = vunpack.c.l.b16 %v530
        %v1410 = vunpack.c.h.b16 %v530
        %v1411 = vunpack.c.l.b16 %v531
        %v1412 = vunpack.c.h.b16 %v531
        %v1413 = vunpack.c.l.b16 %v532
        %v1414 = vunpack.c.h.b16 %v532
        %v1415 = vunpack.c.l.b16 %v533
        %v1416 = vunpack.c.h.b16 %v533
        %v1417 = vunpack.c.l.b16 %v534
        %v1418 = vunpack.c.h.b16 %v534
        %v1419 = vunpack.c.l.b16 %v535
        %v1420 = vunpack.c.h.b16 %v535
        %v1421 = vunpack.c.l.b16 %v536
        %v1422 = vunpack.c.h.b16 %v536
        %v1423 = vunpack.c.l.b16 %v537
        %v1424 = vunpack.c.h.b16 %v537
        %v1425 = vunpack.c.l.b16 %v538
        %v1426 = vunpack.c.h.b16 %v538
        %v1427 = vunpack.c.l.b16 %v539
        %v1428 = vunpack.c.h.b16 %v539
        %v1429 = vunpack.c.l.b16 %v540
        %v1430 = vunpack.c.h.b16 %v540
        %v1431 = vunpack.c.l.b16 %v541
        %v1432 = vunpack.c.h.b16 %v541
        %v1433 = vunpack.c.l.b16 %v542
        %v1434 = vunpack.c.h.b16 %v542
        %v1435 = vunpack.c.l.b16 %v543
        %v1436 = vunpack.c.h.b16 %v543
        %v1437 = vunpack.c.l.b16 %v544
        %v1438 = vunpack.c.h.b16 %v544
        %v1439 = vunpack.c.l.b16 %v545
        %v1440 = vunpack.c.h.b16 %v545
        %v1441 = vunpack.c.l.b16 %v546
        %v1442 = vunpack.c.h.b16 %v546
        %v1443 = vunpack.c.l.b16 %v547
        %v1444 = vunpack.c.h.b16 %v547
        %v1445 = vunpack.c.l.b16 %v548
        %v1446 = vunpack.c.h.b16 %v548
        %v1447 = vunpack.c.l.b16 %v549
        %v1448 = vunpack.c.h.b16 %v549
        %v1449 = vunpack.c.l.b16 %v550
        %v1450 = vunpack.c.h.b16 %v550
        %v1451 = vunpack.c.l.b16 %v551
        %v1452 = vunpack.c.h.b16 %v551
        %v1453 = vunpack.c.l.b16 %v552
        %v1454 = vunpack.c.h.b16 %v552
        %v1455 = vunpack.c.l.b16 %v553
        %v1456 = vunpack.c.h.b16 %v553
        %v1457 = vunpack.c.l.b16 %v554
        %v1458 = vunpack.c.h.b16 %v554
        %v1459 = vunpack.c.l.b16 %v555
        %v1460 = vunpack.c.h.b16 %v555
        %v1461 = vunpack.c.l.b16 %v556
        %v1462 = vunpack.c.h.b16 %v556
        %v1463 = vunpack.c.l.b16 %v557
        %v1464 = vunpack.c.h.b16 %v557
        %v1465 = vunpack.c.l.b16 %v558
        %v1466 = vunpack.c.h.b16 %v558
        %v1467 = vunpack.c.l.b16 %v559
        %v1468 = vunpack.c.h.b16 %v559
        %v1469 = vunpack.c.l.b16 %v560
        %v1470 = vunpack.c.h.b16 %v560
        %v1471 = vunpack.c.l.b16 %v561
        %v1472 = vunpack.c.h.b16 %v561
        %v1473 = vunpack.c.l.b16 %v562
        %v1474 = vunpack.c.h.b16 %v562
        %v1475 = vunpack.c.l.b16 %v563
        %v1476 = vunpack.c.h.b16 %v563
        %v1477 = vunpack.c.l.b16 %v564
        %v1478 = vunpack.c.h.b16 %v564
        %v1479 = vunpack.c.l.b16 %v565
        %v1480 = vunpack.c.h.b16 %v565
        %v1481 = vunpack.c.l.b16 %v566
        %v1482 = vunpack.c.h.b16 %v566
        %v1483 = vunpack.c.l.b16 %v567
        %v1484 = vunpack.c.h.b16 %v567
        %v1485 = vunpack.c.l.b16 %v568
        %v1486 = vunpack.c.h.b16 %v568
        %v1487 = vunpack.c.l.b16 %v569
        %v1488 = vunpack.c.h.b16 %v569
        %v1489 = vunpack.c.l.b16 %v570
        %v1490 = vunpack.c.h.b16 %v570
        %v1491 = vunpack.c.l.b16 %v571
        %v1492 = vunpack.c.h.b16 %v571
        %v1493 = vunpack.c.l.b16 %v572
        %v1494 = vunpack.c.h.b16 %v572
        %v1495 = vunpack.c.l.b16 %v573
        %v1496 = vunpack.c.h.b16 %v573
        %v1497 = vunpack.c.l.b16 %v574
        %v1498 = vunpack.c.h.b16 %v574
        %v1499 = vunpack.c.l.b16 %v575
        %v1500 = vunpack.c.h.b16 %v575
        %v1501 = vunpack.c.l.b16 %v576
        %v1502 = vunpack.c.h.b16 %v576
        %v1503 = vunpack.c.l.b16 %v577
        %v1504 = vunpack.c.h.b16 %v577
        %v1505 = vunpack.c.l.b16 %v578
        %v1506 = vunpack.c.h.b16 %v578
        %v1507 = vunpack.c.l.b16 %v579
        %v1508 = vunpack.c.h.b16 %v579
        %v1509 = vunpack.c.l.b16 %v580
        %v1510 = vunpack.c.h.b16 %v580
        %v1511 = vunpack.c.l.b16 %v581
        %v1512 = vunpack.c.h.b16 %v581
        %v1513 = vunpack.c.l.b16 %v582
        %v1514 = vunpack.c.h.b16 %v582
        %v1515 = vunpack.c.l.b16 %v583
        %v1516 = vunpack.c.h.b16 %v583
        %v1517 = vunpack.c.l.b16 %v584
        %v1518 = vunpack.c.h.b16 %v584
        %v1519 = vunpack.c.l.b16 %v585
        %v1520 = vunpack.c.h.b16 %v585
        %v1521 = vunpack.c.l.b16 %v586
        %v1522 = vunpack.c.h.b16 %v586
        %v1523 = vunpack.c.l.b16 %v587
        %v1524 = vunpack.c.h.b16 %v587
        %v1525 = vunpack.c.l.b16 %v588
        %v1526 = vunpack.c.h.b16 %v588
        %v1527 = vunpack.c.l.b16 %v589
        %v1528 = vunpack.c.h.b16 %v589
        %v1529 = vunpack.c.l.b16 %v590
        %v1530 = vunpack.c.h.b16 %v590
        %v1531 = vunpack.c.l.b16 %v591
        %v1532 = vunpack.c.h.b16 %v591
        %v1533 = vunpack.c.l.b16 %v592
        %v1534 = vunpack.c.h.b16 %v592
        %v1535 = vunpack.c.l.b16 %v593
        %v1536 = vunpack.c.h.b16 %v593
        %v1537 = vunpack.c.l.b16 %v594
        %v1538 = vunpack.c.h.b16 %v594
        %v1539 = vunpack.c.l.b16 %v595
        %v1540 = vunpack.c.h.b16 %v595
        %v1541 = vunpack.c.l.b16 %v596
        %v1542 = vunpack.c.h.b16 %v596
        %v1543 = vunpack.c.l.b16 %v597
        %v1544 = vunpack.c.h.b16 %v597
        %v1545 = vunpack.c.l.b16 %v598
        %v1546 = vunpack.c.h.b16 %v598
        %v1547 = vunpack.c.l.b16 %v599
        %v1548 = vunpack.c.h.b16 %v599
        %v1549 = vunpack.c.l.b16 %v600
        %v1550 = vunpack.c.h.b16 %v600
        %v1551 = vunpack.c.l.b16 %v601
        %v1552 = vunpack.c.h.b16 %v601
        %v1553 = vunpack.c.l.b16 %v602
        %v1554 = vunpack.c.h.b16 %v602
        %v1555 = vunpack.c.l.b16 %v603
        %v1556 = vunpack.c.h.b16 %v603
        %v1557 = vunpack.c.l.b16 %v604
        %v1558 = vunpack.c.h.b16 %v604
        %v1559 = vunpack.c.l.b16 %v605
        %v1560 = vunpack.c.h.b16 %v605
        %v1561 = vunpack.c.l.b16 %v606
        %v1562 = vunpack.c.h.b16 %v606
        %v1563 = vunpack.c.l.b16 %v607
        %v1564 = vunpack.c.h.b16 %v607
        %v1565 = vunpack.c.l.b16 %v608
        %v1566 = vunpack.c.h.b16 %v608
        %v1567 = vunpack.c.l.b16 %v609
        %v1568 = vunpack.c.h.b16 %v609
        %v1569 = vunpack.c.l.b16 %v610
        %v1570 = vunpack.c.h.b16 %v610
        %v1571 = vunpack.c.l.b16 %v611
        %v1572 = vunpack.c.h.b16 %v611
        %v1573 = vunpack.c.l.b16 %v612
        %v1574 = vunpack.c.h.b16 %v612
        %v1575 = vunpack.c.l.b16 %v613
        %v1576 = vunpack.c.h.b16 %v613
        %v1577 = vunpack.c.l.b16 %v614
        %v1578 = vunpack.c.h.b16 %v614
        %v1579 = vunpack.c.l.b16 %v615
        %v1580 = vunpack.c.h.b16 %v615
        %v1581 = vunpack.c.l.b16 %v616
        %v1582 = vunpack.c.h.b16 %v616
        %v1583 = vunpack.c.l.b16 %v617
        %v1584 = vunpack.c.h.b16 %v617
        %v1585 = vunpack.c.l.b16 %v618
        %v1586 = vunpack.c.h.b16 %v618
        %v1587 = vunpack.c.l.b16 %v619
        %v1588 = vunpack.c.h.b16 %v619
        %v1589 = vunpack.c.l.b16 %v620
        %v1590 = vunpack.c.h.b16 %v620
        %v1591 = vunpack.c.l.b16 %v621
        %v1592 = vunpack.c.h.b16 %v621
        %v1593 = vunpack.c.l.b16 %v622
        %v1594 = vunpack.c.h.b16 %v622
        %v1595 = vunpack.c.l.b16 %v623
        %v1596 = vunpack.c.h.b16 %v623
        %v1597 = vunpack.c.l.b16 %v624
        %v1598 = vunpack.c.h.b16 %v624
        %v1599 = vunpack.c.l.b16 %v625
        %v1600 = vunpack.c.h.b16 %v625
        %v1601 = vunpack.c.l.b16 %v626
        %v1602 = vunpack.c.h.b16 %v626
        %v1603 = vunpack.c.l.b16 %v627
        %v1604 = vunpack.c.h.b16 %v627
        %v1605 = vunpack.c.l.b16 %v628
        %v1606 = vunpack.c.h.b16 %v628
        %v1607 = vunpack.c.l.b16 %v629
        %v1608 = vunpack.c.h.b16 %v629
        %v1609 = vunpack.c.l.b16 %v630
        %v1610 = vunpack.c.h.b16 %v630
        %v1611 = vunpack.c.l.b16 %v631
        %v1612 = vunpack.c.h.b16 %v631
        %v1613 = vunpack.c.l.b16 %v632
        %v1614 = vunpack.c.h.b16 %v632
        %v1615 = vpack.c.b16 %v1171, %v1167
        %v1616 = vpack.c.b16 %v1172, %v1168
        %v1617 = vpack.c.b16 %v1173, %v1169
        %v1618 = vpack.c.b16 %v1174, %v1170
        %v1619 = vpack.c.b16 %v1179, %v1175
        %v1620 = vpack.c.b16 %v1180, %v1176
        %v1621 = vpack.c.b16 %v1181, %v1177
        %v1622 = vpack.c.b16 %v1182, %v1178
        %v1623 = vpack.c.b16 %v1187, %v1183
        %v1624 = vpack.c.b16 %v1188, %v1184
        %v1625 = vpack.c.b16 %v1189, %v1185
        %v1626 = vpack.c.b16 %v1190, %v1186
        %v1627 = vpack.c.b16 %v1195, %v1191
        %v1628 = vpack.c.b16 %v1196, %v1192
        %v1629 = vpack.c.b16 %v1197, %v1193
        %v1630 = vpack.c.b16 %v1198, %v1194
        %v1631 = vpack.c.b16 %v1203, %v1199
        %v1632 = vpack.c.b16 %v1204, %v1200
        %v1633 = vpack.c.b16 %v1205, %v1201
        %v1634 = vpack.c.b16 %v1206, %v1202
        %v1635 = vpack.c.b16 %v1211, %v1207
        %v1636 = vpack.c.b16 %v1212, %v1208
        %v1637 = vpack.c.b16 %v1213, %v1209
        %v1638 = vpack.c.b16 %v1214, %v1210
        %v1639 = vpack.c.b16 %v1219, %v1215
        %v1640 = vpack.c.b16 %v1220, %v1216
        %v1641 = vpack.c.b16 %v1221, %v1217
        %v1642 = vpack.c.b16 %v1222, %v1218
        %v1643 = vpack.c.b16 %v1227, %v1223
        %v1644 = vpack.c.b16 %v1228, %v1224
        %v1645 = vpack.c.b16 %v1229, %v1225
        %v1646 = vpack.c.b16 %v1230, %v1226
        %v1647 = vpack.c.b16 %v1235, %v1231
        %v1648 = vpack.c.b16 %v1236, %v1232
        %v1649 = vpack.c.b16 %v1237, %v1233
        %v1650 = vpack.c.b16 %v1238, %v1234
        %v1651 = vpack.c.b16 %v1243, %v1239
        %v1652 = vpack.c.b16 %v1244, %v1240
        %v1653 = vpack.c.b16 %v1245, %v1241
        %v1654 = vpack.c.b16 %v1246, %v1242
        %v1655 = vpack.c.b16 %v1251, %v1247
        %v1656 = vpack.c.b16 %v1252, %v1248
        %v1657 = vpack.c.b16 %v1253, %v1249
        %v1658 = vpack.c.b16 %v1254, %v1250
        %v1659 = vpack.c.b16 %v1259, %v1255
        %v1660 = vpack.c.b16 %v1260, %v1256
        %v1661 = vpack.c.b16 %v1261, %v1257
        %v1662 = vpack.c.b16 %v1262, %v1258
        %v1663 = vpack.c.b16 %v1267, %v1263
        %v1664 = vpack.c.b16 %v1268, %v1264
        %v1665 = vpack.c.b16 %v1269, %v1265
        %v1666 = vpack.c.b16 %v1270, %v1266
        %v1667 = vpack.c.b16 %v1275, %v1271
        %v1668 = vpack.c.b16 %v1276, %v1272
        %v1669 = vpack.c.b16 %v1277, %v1273
        %v1670 = vpack.c.b16 %v1278, %v1274
        %v1671 = vpack.c.b16 %v1283, %v1279
        %v1672 = vpack.c.b16 %v1284, %v1280
        %v1673 = vpack.c.b16 %v1285, %v1281
        %v1674 = vpack.c.b16 %v1286, %v1282
        %v1675 = vpack.c.b16 %v1291, %v1287
        %v1676 = vpack.c.b16 %v1292, %v1288
        %v1677 = vpack.c.b16 %v1293, %v1289
        %v1678 = vpack.c.b16 %v1294, %v1290
        %v1679 = vpack.c.b16 %v1299, %v1295
        %v1680 = vpack.c.b16 %v1300, %v1296
        %v1681 = vpack.c.b16 %v1301, %v1297
        %v1682 = vpack.c.b16 %v1302, %v1298
        %v1683 = vpack.c.b16 %v1307, %v1303
        %v1684 = vpack.c.b16 %v1308, %v1304
        %v1685 = vpack.c.b16 %v1309, %v1305
        %v1686 = vpack.c.b16 %v1310, %v1306
        %v1687 = vpack.c.b16 %v1315, %v1311
        %v1688 = vpack.c.b16 %v1316, %v1312
        %v1689 = vpack.c.b16 %v1317, %v1313
        %v1690 = vpack.c.b16 %v1318, %v1314
        %v1691 = vpack.c.b16 %v1323, %v1319
        %v1692 = vpack.c.b16 %v1324, %v1320
        %v1693 = vpack.c.b16 %v1325, %v1321
        %v1694 = vpack.c.b16 %v1326, %v1322
        %v1695 = vpack.c.b16 %v1331, %v1327
        %v1696 = vpack.c.b16 %v1332, %v1328
        %v1697 = vpack.c.b16 %v1333, %v1329
        %v1698 = vpack.c.b16 %v1334, %v1330
        %v1699 = vpack.c.b16 %v1339, %v1335
        %v1700 = vpack.c.b16 %v1340, %v1336
        %v1701 = vpack.c.b16 %v1341, %v1337
        %v1702 = vpack.c.b16 %v1342, %v1338
        %v1703 = vpack.c.b16 %v1347, %v1343
        %v1704 = vpack.c.b16 %v1348, %v1344
        %v1705 = vpack.c.b16 %v1349, %v1345
        %v1706 = vpack.c.b16 %v1350, %v1346
        %v1707 = vpack.c.b16 %v1355, %v1351
        %v1708 = vpack.c.b16 %v1356, %v1352
        %v1709 = vpack.c.b16 %v1357, %v1353
        %v1710 = vpack.c.b16 %v1358, %v1354
        %v1711 = vpack.c.b16 %v1363, %v1359
        %v1712 = vpack.c.b16 %v1364, %v1360
        %v1713 = vpack.c.b16 %v1365, %v1361
        %v1714 = vpack.c.b16 %v1366, %v1362
        %v1715 = vpack.c.b16 %v1371, %v1367
        %v1716 = vpack.c.b16 %v1372, %v1368
        %v1717 = vpack.c.b16 %v1373, %v1369
        %v1718 = vpack.c.b16 %v1374, %v1370
        %v1719 = vpack.c.b16 %v1379, %v1375
        %v1720 = vpack.c.b16 %v1380, %v1376
        %v1721 = vpack.c.b16 %v1381, %v1377
        %v1722 = vpack.c.b16 %v1382, %v1378
        %v1723 = vpack.c.b16 %v1387, %v1383
        %v1724 = vpack.c.b16 %v1388, %v1384
        %v1725 = vpack.c.b16 %v1389, %v1385
        %v1726 = vpack.c.b16 %v1390, %v1386
        %v1727 = vpack.c.b16 %v1395, %v1391
        %v1728 = vpack.c.b16 %v1396, %v1392
        %v1729 = vpack.c.b16 %v1397, %v1393
        %v1730 = vpack.c.b16 %v1398, %v1394
        %v1731 = vpack.c.b16 %v1403, %v1399
        %v1732 = vpack.c.b16 %v1404, %v1400
        %v1733 = vpack.c.b16 %v1405, %v1401
        %v1734 = vpack.c.b16 %v1406, %v1402
        %v1735 = vpack.c.b16 %v1411, %v1407
        %v1736 = vpack.c.b16 %v1412, %v1408
        %v1737 = vpack.c.b16 %v1413, %v1409
        %v1738 = vpack.c.b16 %v1414, %v1410
        %v1739 = vpack.c.b16 %v1419, %v1415
        %v1740 = vpack.c.b16 %v1420, %v1416
        %v1741 = vpack.c.b16 %v1421, %v1417
        %v1742 = vpack.c.b16 %v1422, %v1418
        %v1743 = vpack.c.b16 %v1427, %v1423
        %v1744 = vpack.c.b16 %v1428, %v1424
        %v1745 = vpack.c.b16 %v1429, %v1425
        %v1746 = vpack.c.b16 %v1430, %v1426
        %v1747 = vpack.c.b16 %v1435, %v1431
        %v1748 = vpack.c.b16 %v1436, %v1432
        %v1749 = vpack.c.b16 %v1437, %v1433
        %v1750 = vpack.c.b16 %v1438, %v1434
        %v1751 = vpack.c.b16 %v1443, %v1439
        %v1752 = vpack.c.b16 %v1444, %v1440
        %v1753 = vpack.c.b16 %v1445, %v1441
        %v1754 = vpack.c.b16 %v1446, %v1442
        %v1755 = vpack.c.b16 %v1451, %v1447
        %v1756 = vpack.c.b16 %v1452, %v1448
        %v1757 = vpack.c.b16 %v1453, %v1449
        %v1758 = vpack.c.b16 %v1454, %v1450
        %v1759 = vpack.c.b16 %v1459, %v1455
        %v1760 = vpack.c.b16 %v1460, %v1456
        %v1761 = vpack.c.b16 %v1461, %v1457
        %v1762 = vpack.c.b16 %v1462, %v1458
        %v1763 = vpack.c.b16 %v1467, %v1463
        %v1764 = vpack.c.b16 %v1468, %v1464
        %v1765 = vpack.c.b16 %v1469, %v1465
        %v1766 = vpack.c.b16 %v1470, %v1466
        %v1767 = vpack.c.b16 %v1475, %v1471
        %v1768 = vpack.c.b16 %v1476, %v1472
        %v1769 = vpack.c.b16 %v1477, %v1473
        %v1770 = vpack.c.b16 %v1478, %v1474
        %v1771 = vpack.c.b16 %v1483, %v1479
        %v1772 = vpack.c.b16 %v1484, %v1480
        %v1773 = vpack.c.b16 %v1485, %v1481
        %v1774 = vpack.c.b16 %v1486, %v1482
        %v1775 = vpack.c.b16 %v1491, %v1487
        %v1776 = vpack.c.b16 %v1492, %v1488
        %v1777 = vpack.c.b16 %v1493, %v1489
        %v1778 = vpack.c.b16 %v1494, %v1490
        %v1779 = vpack.c.b16 %v1499, %v1495
        %v1780 = vpack.c.b16 %v1500, %v1496
        %v1781 = vpack.c.b16 %v1501, %v1497
        %v1782 = vpack.c.b16 %v1502, %v1498
        %v1783 = vpack.c.b16 %v1507, %v1503
        %v1784 = vpack.c.b16 %v1508, %v1504
        %v1785 = vpack.c.b16 %v1509, %v1505
        %v1786 = vpack.c.b16 %v1510, %v1506
        %v1787 = vpack.c.b16 %v1515, %v1511
        %v1788 = vpack.c.b16 %v1516, %v1512
        %v1789 = vpack.c.b16 %v1517, %v1513
        %v1790 = vpack.c.b16 %v1518, %v1514
        %v1791 = vpack.c.b16 %v1523, %v1519
        %v1792 = vpack.c.b16 %v1524, %v1520
        %v1793 = vpack.c.b16 %v1525, %v1521
        %v1794 = vpack.c.b16 %v1526, %v1522
        %v1795 = vpack.c.b16 %v1531, %v1527
        %v1796 = vpack.c.b16 %v1532, %v1528
        %v1797 = vpack.c.b16 %v1533, %v1529
        %v1798 = vpack.c.b16 %v1534, %v1530
        %v1799 = vpack.c.b16 %v1539, %v1535
        %v1800 = vpack.c.b16 %v1540, %v1536
        %v1801 = vpack.c.b16 %v1541, %v1537
        %v1802 = vpack.c.b16 %v1542, %v1538
        %v1803 = vpack.c.b16 %v1547, %v1543
        %v1804 = vpack.c.b16 %v1548, %v1544
        %v1805 = vpack.c.b16 %v1549, %v1545
        %v1806 = vpack.c.b16 %v1550, %v1546
        %v1807 = vpack.c.b16 %v1555, %v1551
        %v1808 = vpack.c.b16 %v1556, %v1552
        %v1809 = vpack.c.b16 %v1557, %v1553
        %v1810 = vpack.c.b16 %v1558, %v1554
        %v1811 = vpack.c.b16 %v1563, %v1559
        %v1812 = vpack.c.b16 %v1564, %v1560
        %v1813 = vpack.c.b16 %v1565, %v1561
        %v1814 = vpack.c.b16 %v1566, %v1562
        %v1815 = vpack.c.b16 %v1571, %v1567
        %v1816 = vpack.c.b16 %v1572, %v1568
        %v1817 = vpack.c.b16 %v1573, %v1569
        %v1818 = vpack.c.b16 %v1574, %v1570
        %v1819 = vpack.c.b16 %v1579, %v1575
        %v1820 = vpack.c.b16 %v1580, %v1576
        %v1821 = vpack.c.b16 %v1581, %v1577
        %v1822 = vpack.c.b16 %v1582, %v1578
        %v1823 = vpack.c.b16 %v1587, %v1583
        %v1824 = vpack.c.b16 %v1588, %v1584
        %v1825 = vpack.c.b16 %v1589, %v1585
        %v1826 = vpack.c.b16 %v1590, %v1586
        %v1827 = vpack.c.b16 %v1595, %v1591
        %v1828 = vpack.c.b16 %v1596, %v1592
        %v1829 = vpack.c.b16 %v1597, %v1593
        %v1830 = vpack.c.b16 %v1598, %v1594
        %v1831 = vpack.c.b16 %v1603, %v1599
        %v1832 = vpack.c.b16 %v1604, %v1600
        %v1833 = vpack.c.b16 %v1605, %v1601
        %v1834 = vpack.c.b16 %v1606, %v1602
        %v1835 = vpack.c.b16 %v1611, %v1607
        %v1836 = vpack.c.b16 %v1612, %v1608
        %v1837 = vpack.c.b16 %v1613, %v1609
        %v1838 = vpack.c.b16 %v1614, %v1610
        %2063 = vmatprep.subr.bf16.mxu0 %v1616
        %2064 = vmatpush1.bf16.msra.mxu0 %v1615
        %2065 = vmatprep.subr.bf16.mxu0 %v1620
        %2066 = vmatpush1.bf16.msra.mxu0 %v1619
        %2067 = vmatprep.subr.bf16.mxu0 %v1624
        %2068 = vmatpush1.bf16.msra.mxu0 %v1623
        %2069 = vmatprep.subr.bf16.mxu0 %v1628
        %2070 = vmatpush1.bf16.msra.mxu0 %v1627
        %2071 = vmatprep.subr.bf16.mxu0 %v1632
        %2072 = vmatpush1.bf16.msra.mxu0 %v1631
        %2073 = vmatprep.subr.bf16.mxu0 %v1636
        %2074 = vmatpush1.bf16.msra.mxu0 %v1635
        %2075 = vmatprep.subr.bf16.mxu0 %v1640
        %2076 = vmatpush1.bf16.msra.mxu0 %v1639
        %2077 = vmatprep.subr.bf16.mxu0 %v1644
        %2078 = vmatpush1.bf16.msra.mxu0 %v1643
        %2079 = vmatprep.subr.bf16.mxu0 %v1648
        %2080 = vmatpush1.bf16.msra.mxu0 %v1647
        %2081 = vmatprep.subr.bf16.mxu0 %v1652
        %2082 = vmatpush1.bf16.msra.mxu0 %v1651
        %2083 = vmatprep.subr.bf16.mxu0 %v1656
        %2084 = vmatpush1.bf16.msra.mxu0 %v1655
        %2085 = vmatprep.subr.bf16.mxu0 %v1660
        %2086 = vmatpush1.bf16.msra.mxu0 %v1659
        %2087 = vmatprep.subr.bf16.mxu0 %v1664
        %2088 = vmatpush1.bf16.msra.mxu0 %v1663
        %2089 = vmatprep.subr.bf16.mxu0 %v1668
        %2090 = vmatpush1.bf16.msra.mxu0 %v1667
        %2091 = vmatprep.subr.bf16.mxu0 %v1672
        %2092 = vmatpush1.bf16.msra.mxu0 %v1671
        %2093 = vmatprep.subr.bf16.mxu0 %v1676
        %2094 = vmatpush1.bf16.msra.mxu0 %v1675
        %2095 = vmatprep.mubr.bf16.mxu0 %v832
        %2096 = vmatmul.mubr.bf16.gmra.mrb[0].mxu0 %v831
        %v2097 = vpop.f32.mrb[0].mxu0
        %v2098 = vadd.f32 %v638, %v2097
        %v2099 = vpop.f32.mrb[0].mxu0
        %v2100 = vadd.f32 %v642, %v2099
        %v2101 = vpop.f32.mrb[0].mxu0
        %v2102 = vadd.f32 %v638, %v2101
        %v2103 = vpop.f32.mrb[0].mxu0
        %v2104 = vadd.f32 %v642, %v2103
        %2105 = vmatprep.mubr.bf16.mxu0 %v839
        %2106 = vmatmul.mubr.bf16.gmra.mrb[0].mxu0 %v838
        %v2107 = vpop.f32.mrb[0].mxu0
        %v2108 = vadd.f32 %v638, %v2107
        %v2109 = vpop.f32.mrb[0].mxu0
        %v2110 = vadd.f32 %v642, %v2109
        %v2111 = vpop.f32.mrb[0].mxu0
        %v2112 = vadd.f32 %v638, %v2111
        %v2113 = vpop.f32.mrb[0].mxu0
        %v2114 = vadd.f32 %v642, %v2113
        %2115 = vmatprep.mubr.bf16.mxu0 %v846
        %2116 = vmatmul.mubr.bf16.gmra.mrb[0].mxu0 %v845
        %v2117 = vpop.f32.mrb[0].mxu0
        %v2118 = vadd.f32 %v638, %v2117
        %v2119 = vpop.f32.mrb[0].mxu0
        %v2120 = vadd.f32 %v642, %v2119
        %v2121 = vpop.f32.mrb[0].mxu0
        %v2122 = vadd.f32 %v638, %v2121
        %v2123 = vpop.f32.mrb[0].mxu0
        %v2124 = vadd.f32 %v642, %v2123
        %2125 = vmatprep.mubr.bf16.mxu0 %v853
        %2126 = vmatmul.mubr.bf16.gmra.mrb[0].mxu0 %v852
        %v2127 = vpop.f32.mrb[0].mxu0
        %v2128 = vadd.f32 %v638, %v2127
        %v2129 = vpop.f32.mrb[0].mxu0
        %v2130 = vadd.f32 %v642, %v2129
        %v2131 = vpop.f32.mrb[0].mxu0
        %v2132 = vadd.f32 %v638, %v2131
        %v2133 = vpop.f32.mrb[0].mxu0
        %v2134 = vadd.f32 %v642, %v2133
        %2135 = vmatprep.mubr.bf16.mxu0 %v860
        %2136 = vmatmul.mubr.bf16.gmra.mrb[0].mxu0 %v859
        %v2137 = vpop.f32.mrb[0].mxu0
        %v2138 = vadd.f32 %v638, %v2137
        %v2139 = vpop.f32.mrb[0].mxu0
        %v2140 = vadd.f32 %v642, %v2139
        %v2141 = vpop.f32.mrb[0].mxu0
        %v2142 = vadd.f32 %v638, %v2141
        %v2143 = vpop.f32.mrb[0].mxu0
        %v2144 = vadd.f32 %v642, %v2143
        %2145 = vmatprep.mubr.bf16.mxu0 %v867
        %2146 = vmatmul.mubr.bf16.gmra.mrb[0].mxu0 %v866
        %v2147 = vpop.f32.mrb[0].mxu0
        %v2148 = vadd.f32 %v638, %v2147
        %v2149 = vpop.f32.mrb[0].mxu0
        %v2150 = vadd.f32 %v642, %v2149
        %v2151 = vpop.f32.mrb[0].mxu0
        %v2152 = vadd.f32 %v638, %v2151
        %v2153 = vpop.f32.mrb[0].mxu0
        %v2154 = vadd.f32 %v642, %v2153
        %2155 = vmatprep.mubr.bf16.mxu0 %v874
        %2156 = vmatmul.mubr.bf16.gmra.mrb[0].mxu0 %v873
        %v2157 = vpop.f32.mrb[0].mxu0
        %v2158 = vadd.f32 %v638, %v2157
        %v2159 = vpop.f32.mrb[0].mxu0
        %v2160 = vadd.f32 %v642, %v2159
        %v2161 = vpop.f32.mrb[0].mxu0
        %v2162 = vadd.f32 %v638, %v2161
        %v2163 = vpop.f32.mrb[0].mxu0
        %v2164 = vadd.f32 %v642, %v2163
        %2165 = vmatprep.mubr.bf16.mxu0 %v881
        %2166 = vmatmul.mubr.bf16.gmra.mrb[0].mxu0 %v880
        %v2167 = vpop.f32.mrb[0].mxu0
        %v2168 = vadd.f32 %v638, %v2167
        %v2169 = vpop.f32.mrb[0].mxu0
        %v2170 = vadd.f32 %v642, %v2169
        %v2171 = vpop.f32.mrb[0].mxu0
        %v2172 = vadd.f32 %v638, %v2171
        %v2173 = vpop.f32.mrb[0].mxu0
        %v2174 = vadd.f32 %v642, %v2173
        %2175 = vdwg.mxu0
        %2176 = vmatprep.subr.bf16.mxu0 %v1680
        %2177 = vmatpush1.bf16.msra.mxu0 %v1679
        %2178 = vmatprep.subr.bf16.mxu0 %v1684
        %2179 = vmatpush1.bf16.msra.mxu0 %v1683
        %2180 = vmatprep.subr.bf16.mxu0 %v1688
        %2181 = vmatpush1.bf16.msra.mxu0 %v1687
        %2182 = vmatprep.subr.bf16.mxu0 %v1692
        %2183 = vmatpush1.bf16.msra.mxu0 %v1691
        %2184 = vmatprep.subr.bf16.mxu0 %v1696
        %2185 = vmatpush1.bf16.msra.mxu0 %v1695
        %2186 = vmatprep.subr.bf16.mxu0 %v1700
        %2187 = vmatpush1.bf16.msra.mxu0 %v1699
        %2188 = vmatprep.subr.bf16.mxu0 %v1704
        %2189 = vmatpush1.bf16.msra.mxu0 %v1703
        %2190 = vmatprep.subr.bf16.mxu0 %v1708
        %2191 = vmatpush1.bf16.msra.mxu0 %v1707
        %2192 = vmatprep.subr.bf16.mxu0 %v1712
        %2193 = vmatpush1.bf16.msra.mxu0 %v1711
        %2194 = vmatprep.subr.bf16.mxu0 %v1716
        %2195 = vmatpush1.bf16.msra.mxu0 %v1715
        %2196 = vmatprep.subr.bf16.mxu0 %v1720
        %2197 = vmatpush1.bf16.msra.mxu0 %v1719
        %2198 = vmatprep.subr.bf16.mxu0 %v1724
        %2199 = vmatpush1.bf16.msra.mxu0 %v1723
        %2200 = vmatprep.subr.bf16.mxu0 %v1728
        %2201 = vmatpush1.bf16.msra.mxu0 %v1727
        %2202 = vmatprep.subr.bf16.mxu0 %v1732
        %2203 = vmatpush1.bf16.msra.mxu0 %v1731
        %2204 = vmatprep.subr.bf16.mxu0 %v1736
        %2205 = vmatpush1.bf16.msra.mxu0 %v1735
        %2206 = vmatprep.subr.bf16.mxu0 %v1740
        %2207 = vmatpush1.bf16.msra.mxu0 %v1739
        %2208 = vmatprep.mubr.bf16.mxu0 %v834
        %2209 = vmatmul.mubr.bf16.gmra.mrb[0].mxu0 %v833
        %v2210 = vpop.f32.mrb[0].mxu0
        %v2211 = vadd.f32 %v2098, %v2210
        %v2212 = vpop.f32.mrb[0].mxu0
        %v2213 = vadd.f32 %v2100, %v2212
        %v2214 = vpop.f32.mrb[0].mxu0
        %v2215 = vadd.f32 %v2102, %v2214
        %v2216 = vpop.f32.mrb[0].mxu0
        %v2217 = vadd.f32 %v2104, %v2216
        %2218 = vmatprep.mubr.bf16.mxu0 %v841
        %2219 = vmatmul.mubr.bf16.gmra.mrb[0].mxu0 %v840
        %v2220 = vpop.f32.mrb[0].mxu0
        %v2221 = vadd.f32 %v2108, %v2220
        %v2222 = vpop.f32.mrb[0].mxu0
        %v2223 = vadd.f32 %v2110, %v2222
        %v2224 = vpop.f32.mrb[0].mxu0
        %v2225 = vadd.f32 %v2112, %v2224
        %v2226 = vpop.f32.mrb[0].mxu0
        %v2227 = vadd.f32 %v2114, %v2226
        %2228 = vmatprep.mubr.bf16.mxu0 %v848
        %2229 = vmatmul.mubr.bf16.gmra.mrb[0].mxu0 %v847
        %v2230 = vpop.f32.mrb[0].mxu0
        %v2231 = vadd.f32 %v2118, %v2230
        %v2232 = vpop.f32.mrb[0].mxu0
        %v2233 = vadd.f32 %v2120, %v2232
        %v2234 = vpop.f32.mrb[0].mxu0
        %v2235 = vadd.f32 %v2122, %v2234
        %v2236 = vpop.f32.mrb[0].mxu0
        %v2237 = vadd.f32 %v2124, %v2236
        %2238 = vmatprep.mubr.bf16.mxu0 %v855
        %2239 = vmatmul.mubr.bf16.gmra.mrb[0].mxu0 %v854
        %v2240 = vpop.f32.mrb[0].mxu0
        %v2241 = vadd.f32 %v2128, %v2240
        %v2242 = vpop.f32.mrb[0].mxu0
        %v2243 = vadd.f32 %v2130, %v2242
        %v2244 = vpop.f32.mrb[0].mxu0
        %v2245 = vadd.f32 %v2132, %v2244
        %v2246 = vpop.f32.mrb[0].mxu0
        %v2247 = vadd.f32 %v2134, %v2246
        %2248 = vmatprep.mubr.bf16.mxu0 %v862
        %2249 = vmatmul.mubr.bf16.gmra.mrb[0].mxu0 %v861
        %v2250 = vpop.f32.mrb[0].mxu0
        %v2251 = vadd.f32 %v2138, %v2250
        %v2252 = vpop.f32.mrb[0].mxu0
        %v2253 = vadd.f32 %v2140, %v2252
        %v2254 = vpop.f32.mrb[0].mxu0
        %v2255 = vadd.f32 %v2142, %v2254
        %v2256 = vpop.f32.mrb[0].mxu0
        %v2257 = vadd.f32 %v2144, %v2256
        %2258 = vmatprep.mubr.bf16.mxu0 %v869
        %2259 = vmatmul.mubr.bf16.gmra.mrb[0].mxu0 %v868
        %v2260 = vpop.f32.mrb[0].mxu0
        %v2261 = vadd.f32 %v2148, %v2260
        %v2262 = vpop.f32.mrb[0].mxu0
        %v2263 = vadd.f32 %v2150, %v2262
        %v2264 = vpop.f32.mrb[0].mxu0
        %v2265 = vadd.f32 %v2152, %v2264
        %v2266 = vpop.f32.mrb[0].mxu0
        %v2267 = vadd.f32 %v2154, %v2266
        %2268 = vmatprep.mubr.bf16.mxu0 %v876
        %2269 = vmatmul.mubr.bf16.gmra.mrb[0].mxu0 %v875
        %v2270 = vpop.f32.mrb[0].mxu0
        %v2271 = vadd.f32 %v2158, %v2270
        %v2272 = vpop.f32.mrb[0].mxu0
        %v2273 = vadd.f32 %v2160, %v2272
        %v2274 = vpop.f32.mrb[0].mxu0
        %v2275 = vadd.f32 %v2162, %v2274
        %v2276 = vpop.f32.mrb[0].mxu0
        %v2277 = vadd.f32 %v2164, %v2276
        %2278 = vmatprep.mubr.bf16.mxu0 %v883
        %2279 = vmatmul.mubr.bf16.gmra.mrb[0].mxu0 %v882
        %v2280 = vpop.f32.mrb[0].mxu0
        %v2281 = vadd.f32 %v2168, %v2280
        %v2282 = vpop.f32.mrb[0].mxu0
        %v2283 = vadd.f32 %v2170, %v2282
        %v2284 = vpop.f32.mrb[0].mxu0
        %v2285 = vadd.f32 %v2172, %v2284
        %v2286 = vpop.f32.mrb[0].mxu0
        %v2287 = vadd.f32 %v2174, %v2286
        %2288 = vdwg.mxu0
        %2289 = vmatprep.subr.bf16.mxu0 %v1744
        %2290 = vmatpush1.bf16.msra.mxu0 %v1743
        %2291 = vmatprep.subr.bf16.mxu0 %v1748
        %2292 = vmatpush1.bf16.msra.mxu0 %v1747
        %2293 = vmatprep.subr.bf16.mxu0 %v1752
        %2294 = vmatpush1.bf16.msra.mxu0 %v1751
        %2295 = vmatprep.subr.bf16.mxu0 %v1756
        %2296 = vmatpush1.bf16.msra.mxu0 %v1755
        %2297 = vmatprep.subr.bf16.mxu0 %v1760
        %2298 = vmatpush1.bf16.msra.mxu0 %v1759
        %2299 = vmatprep.subr.bf16.mxu0 %v1764
        %2300 = vmatpush1.bf16.msra.mxu0 %v1763
        %2301 = vmatprep.subr.bf16.mxu0 %v1768
        %2302 = vmatpush1.bf16.msra.mxu0 %v1767
        %2303 = vmatprep.subr.bf16.mxu0 %v1772
        %2304 = vmatpush1.bf16.msra.mxu0 %v1771
        %2305 = vmatprep.subr.bf16.mxu0 %v1776
        %2306 = vmatpush1.bf16.msra.mxu0 %v1775
        %2307 = vmatprep.subr.bf16.mxu0 %v1780
        %2308 = vmatpush1.bf16.msra.mxu0 %v1779
        %2309 = vmatprep.subr.bf16.mxu0 %v1784
        %2310 = vmatpush1.bf16.msra.mxu0 %v1783
        %2311 = vmatprep.subr.bf16.mxu0 %v1788
        %2312 = vmatpush1.bf16.msra.mxu0 %v1787
        %2313 = vmatprep.subr.bf16.mxu0 %v1792
        %2314 = vmatpush1.bf16.msra.mxu0 %v1791
        %2315 = vmatprep.subr.bf16.mxu0 %v1796
        %2316 = vmatpush1.bf16.msra.mxu0 %v1795
        %2317 = vmatprep.subr.bf16.mxu0 %v1800
        %2318 = vmatpush1.bf16.msra.mxu0 %v1799
        %2319 = vmatprep.subr.bf16.mxu0 %v1804
        %2320 = vmatpush1.bf16.msra.mxu0 %v1803
        %2321 = vmatprep.mubr.bf16.mxu0 %v836
        %2322 = vmatmul.mubr.bf16.gmra.mrb[0].mxu0 %v835
        %v2323 = vpop.f32.mrb[0].mxu0
        %v2324 = vadd.f32 %v2211, %v2323
        %v2325 = vpop.f32.mrb[0].mxu0
        %v2326 = vadd.f32 %v2213, %v2325
        %v2327 = vpop.f32.mrb[0].mxu0
        %v2328 = vadd.f32 %v2215, %v2327
        %v2329 = vpop.f32.mrb[0].mxu0
        %v2330 = vadd.f32 %v2217, %v2329
        %2331 = vmatprep.mubr.bf16.mxu0 %v843
        %2332 = vmatmul.mubr.bf16.gmra.mrb[0].mxu0 %v842
        %v2333 = vpop.f32.mrb[0].mxu0
        %v2334 = vadd.f32 %v2221, %v2333
        %v2335 = vpop.f32.mrb[0].mxu0
        %v2336 = vadd.f32 %v2223, %v2335
        %v2337 = vpop.f32.mrb[0].mxu0
        %v2338 = vadd.f32 %v2225, %v2337
        %v2339 = vpop.f32.mrb[0].mxu0
        %v2340 = vadd.f32 %v2227, %v2339
        %2341 = vmatprep.mubr.bf16.mxu0 %v850
        %2342 = vmatmul.mubr.bf16.gmra.mrb[0].mxu0 %v849
        %v2343 = vpop.f32.mrb[0].mxu0
        %v2344 = vadd.f32 %v2231, %v2343
        %v2345 = vpop.f32.mrb[0].mxu0
        %v2346 = vadd.f32 %v2233, %v2345
        %v2347 = vpop.f32.mrb[0].mxu0
        %v2348 = vadd.f32 %v2235, %v2347
        %v2349 = vpop.f32.mrb[0].mxu0
        %v2350 = vadd.f32 %v2237, %v2349
        %2351 = vmatprep.mubr.bf16.mxu0 %v857
        %2352 = vmatmul.mubr.bf16.gmra.mrb[0].mxu0 %v856
        %v2353 = vpop.f32.mrb[0].mxu0
        %v2354 = vadd.f32 %v2241, %v2353
        %v2355 = vpop.f32.mrb[0].mxu0
        %v2356 = vadd.f32 %v2243, %v2355
        %v2357 = vpop.f32.mrb[0].mxu0
        %v2358 = vadd.f32 %v2245, %v2357
        %v2359 = vpop.f32.mrb[0].mxu0
        %v2360 = vadd.f32 %v2247, %v2359
        %2361 = vmatprep.mubr.bf16.mxu0 %v864
        %2362 = vmatmul.mubr.bf16.gmra.mrb[0].mxu0 %v863
        %v2363 = vpop.f32.mrb[0].mxu0
        %v2364 = vadd.f32 %v2251, %v2363
        %v2365 = vpop.f32.mrb[0].mxu0
        %v2366 = vadd.f32 %v2253, %v2365
        %v2367 = vpop.f32.mrb[0].mxu0
        %v2368 = vadd.f32 %v2255, %v2367
        %v2369 = vpop.f32.mrb[0].mxu0
        %v2370 = vadd.f32 %v2257, %v2369
        %2371 = vmatprep.mubr.bf16.mxu0 %v871
        %2372 = vmatmul.mubr.bf16.gmra.mrb[0].mxu0 %v870
        %v2373 = vpop.f32.mrb[0].mxu0
        %v2374 = vadd.f32 %v2261, %v2373
        %v2375 = vpop.f32.mrb[0].mxu0
        %v2376 = vadd.f32 %v2263, %v2375
        %v2377 = vpop.f32.mrb[0].mxu0
        %v2378 = vadd.f32 %v2265, %v2377
        %v2379 = vpop.f32.mrb[0].mxu0
        %v2380 = vadd.f32 %v2267, %v2379
        %2381 = vmatprep.mubr.bf16.mxu0 %v878
        %2382 = vmatmul.mubr.bf16.gmra.mrb[0].mxu0 %v877
        %v2383 = vpop.f32.mrb[0].mxu0
        %v2384 = vadd.f32 %v2271, %v2383
        %v2385 = vpop.f32.mrb[0].mxu0
        %v2386 = vadd.f32 %v2273, %v2385
        %v2387 = vpop.f32.mrb[0].mxu0
        %v2388 = vadd.f32 %v2275, %v2387
        %v2389 = vpop.f32.mrb[0].mxu0
        %v2390 = vadd.f32 %v2277, %v2389
        %2391 = vmatprep.mubr.bf16.mxu0 %v885
        %2392 = vmatmul.mubr.bf16.gmra.mrb[0].mxu0 %v884
        %v2393 = vpop.f32.mrb[0].mxu0
        %v2394 = vadd.f32 %v2281, %v2393
        %v2395 = vpop.f32.mrb[0].mxu0
        %v2396 = vadd.f32 %v2283, %v2395
        %v2397 = vpop.f32.mrb[0].mxu0
        %v2398 = vadd.f32 %v2285, %v2397
        %v2399 = vpop.f32.mrb[0].mxu0
        %v2400 = vadd.f32 %v2287, %v2399
        %2401 = vdwg.mxu0
        %2402 = vmatprep.subr.bf16.mxu0 %v1808
        %2403 = vmatpush1.bf16.msra.mxu0 %v1807
        %2404 = vmatprep.subr.bf16.mxu0 %v1812
        %2405 = vmatpush1.bf16.msra.mxu0 %v1811
        %2406 = vmatprep.subr.bf16.mxu0 %v1816
        %2407 = vmatpush1.bf16.msra.mxu0 %v1815
        %2408 = vmatprep.subr.bf16.mxu0 %v1820
        %2409 = vmatpush1.bf16.msra.mxu0 %v1819
        %2410 = vmatprep.subr.bf16.mxu0 %v1824
        %2411 = vmatpush1.bf16.msra.mxu0 %v1823
        %2412 = vmatprep.subr.bf16.mxu0 %v1828
        %2413 = vmatpush1.bf16.msra.mxu0 %v1827
        %2414 = vmatprep.subr.bf16.mxu0 %v1832
        %2415 = vmatpush1.bf16.msra.mxu0 %v1831
        %2416 = vmatprep.subr.bf16.mxu0 %v1836
        %2417 = vmatpush1.bf16.msra.mxu0 %v1835
        %2418 = vmatprep.subr.bf16.mxu0 0
        %2419 = vmatpush1.bf16.msra.mxu0 0
        %2420 = vmatprep.subr.bf16.mxu0 0
        %2421 = vmatpush1.bf16.msra.mxu0 0
        %2422 = vmatprep.subr.bf16.mxu0 0
        %2423 = vmatpush1.bf16.msra.mxu0 0
        %2424 = vmatprep.subr.bf16.mxu0 0
        %2425 = vmatpush1.bf16.msra.mxu0 0
        %2426 = vmatprep.subr.bf16.mxu0 0
        %2427 = vmatpush1.bf16.msra.mxu0 0
        %2428 = vmatprep.subr.bf16.mxu0 0
        %2429 = vmatpush1.bf16.msra.mxu0 0
        %2430 = vmatprep.subr.bf16.mxu0 0
        %2431 = vmatpush1.bf16.msra.mxu0 0
        %2432 = vmatprep.subr.bf16.mxu0 0
        %2433 = vmatpush1.bf16.msra.mxu0 0
        %2434 = vmatprep.mubr.bf16.mxu0 0
        %2435 = vmatmul.mubr.bf16.gmra.mrb[0].mxu0 %v837
        %v2436 = vpop.f32.mrb[0].mxu0
        %v2437 = vadd.f32 %v2324, %v2436
        %v2438 = vpop.f32.mrb[0].mxu0
        %v2439 = vadd.f32 %v2326, %v2438
        %v2440 = vpop.f32.mrb[0].mxu0
        %v2441 = vadd.f32 %v2328, %v2440
        %v2442 = vpop.f32.mrb[0].mxu0
        %v2443 = vadd.f32 %v2330, %v2442
        %2444 = vmatprep.mubr.bf16.mxu0 0
        %2445 = vmatmul.mubr.bf16.gmra.mrb[0].mxu0 %v844
        %v2446 = vpop.f32.mrb[0].mxu0
        %v2447 = vadd.f32 %v2334, %v2446
        %v2448 = vpop.f32.mrb[0].mxu0
        %v2449 = vadd.f32 %v2336, %v2448
        %v2450 = vpop.f32.mrb[0].mxu0
        %v2451 = vadd.f32 %v2338, %v2450
        %v2452 = vpop.f32.mrb[0].mxu0
        %v2453 = vadd.f32 %v2340, %v2452
        %2454 = vmatprep.mubr.bf16.mxu0 0
        %2455 = vmatmul.mubr.bf16.gmra.mrb[0].mxu0 %v851
        %v2456 = vpop.f32.mrb[0].mxu0
        %v2457 = vadd.f32 %v2344, %v2456
        %v2458 = vpop.f32.mrb[0].mxu0
        %v2459 = vadd.f32 %v2346, %v2458
        %v2460 = vpop.f32.mrb[0].mxu0
        %v2461 = vadd.f32 %v2348, %v2460
        %v2462 = vpop.f32.mrb[0].mxu0
        %v2463 = vadd.f32 %v2350, %v2462
        %2464 = vmatprep.mubr.bf16.mxu0 0
        %2465 = vmatmul.mubr.bf16.gmra.mrb[0].mxu0 %v858
        %v2466 = vpop.f32.mrb[0].mxu0
        %v2467 = vadd.f32 %v2354, %v2466
        %v2468 = vpop.f32.mrb[0].mxu0
        %v2469 = vadd.f32 %v2356, %v2468
        %v2470 = vpop.f32.mrb[0].mxu0
        %v2471 = vadd.f32 %v2358, %v2470
        %v2472 = vpop.f32.mrb[0].mxu0
        %v2473 = vadd.f32 %v2360, %v2472
        %2474 = vmatprep.mubr.bf16.mxu0 0
        %2475 = vmatmul.mubr.bf16.gmra.mrb[0].mxu0 %v865
        %v2476 = vpop.f32.mrb[0].mxu0
        %v2477 = vadd.f32 %v2364, %v2476
        %v2478 = vpop.f32.mrb[0].mxu0
        %v2479 = vadd.f32 %v2366, %v2478
        %v2480 = vpop.f32.mrb[0].mxu0
        %v2481 = vadd.f32 %v2368, %v2480
        %v2482 = vpop.f32.mrb[0].mxu0
        %v2483 = vadd.f32 %v2370, %v2482
        %2484 = vmatprep.mubr.bf16.mxu0 0
        %2485 = vmatmul.mubr.bf16.gmra.mrb[0].mxu0 %v872
        %v2486 = vpop.f32.mrb[0].mxu0
        %v2487 = vadd.f32 %v2374, %v2486
        %v2488 = vpop.f32.mrb[0].mxu0
        %v2489 = vadd.f32 %v2376, %v2488
        %v2490 = vpop.f32.mrb[0].mxu0
        %v2491 = vadd.f32 %v2378, %v2490
        %v2492 = vpop.f32.mrb[0].mxu0
        %v2493 = vadd.f32 %v2380, %v2492
        %2494 = vmatprep.mubr.bf16.mxu0 0
        %2495 = vmatmul.mubr.bf16.gmra.mrb[0].mxu0 %v879
        %v2496 = vpop.f32.mrb[0].mxu0
        %v2497 = vadd.f32 %v2384, %v2496
        %v2498 = vpop.f32.mrb[0].mxu0
        %v2499 = vadd.f32 %v2386, %v2498
        %v2500 = vpop.f32.mrb[0].mxu0
        %v2501 = vadd.f32 %v2388, %v2500
        %v2502 = vpop.f32.mrb[0].mxu0
        %v2503 = vadd.f32 %v2390, %v2502
        %2504 = vmatprep.mubr.bf16.mxu0 0
        %2505 = vmatmul.mubr.bf16.gmra.mrb[0].mxu0 %v886
        %v2506 = vpop.f32.mrb[0].mxu0
        %v2507 = vadd.f32 %v2394, %v2506
        %v2508 = vpop.f32.mrb[0].mxu0
        %v2509 = vadd.f32 %v2396, %v2508
        %v2510 = vpop.f32.mrb[0].mxu0
        %v2511 = vadd.f32 %v2398, %v2510
        %v2512 = vpop.f32.mrb[0].mxu0
        %v2513 = vadd.f32 %v2400, %v2512
        %2514 = vdwg.mxu0
        %2515 = vmatprep.subr.bf16.mxu0 %v1618
        %2516 = vmatpush1.bf16.msra.mxu0 %v1617
        %2517 = vmatprep.subr.bf16.mxu0 %v1622
        %2518 = vmatpush1.bf16.msra.mxu0 %v1621
        %2519 = vmatprep.subr.bf16.mxu0 %v1626
        %2520 = vmatpush1.bf16.msra.mxu0 %v1625
        %2521 = vmatprep.subr.bf16.mxu0 %v1630
        %2522 = vmatpush1.bf16.msra.mxu0 %v1629
        %2523 = vmatprep.subr.bf16.mxu0 %v1634
        %2524 = vmatpush1.bf16.msra.mxu0 %v1633
        %2525 = vmatprep.subr.bf16.mxu0 %v1638
        %2526 = vmatpush1.bf16.msra.mxu0 %v1637
        %2527 = vmatprep.subr.bf16.mxu0 %v1642
        %2528 = vmatpush1.bf16.msra.mxu0 %v1641
        %2529 = vmatprep.subr.bf16.mxu0 %v1646
        %2530 = vmatpush1.bf16.msra.mxu0 %v1645
        %2531 = vmatprep.subr.bf16.mxu0 %v1650
        %2532 = vmatpush1.bf16.msra.mxu0 %v1649
        %2533 = vmatprep.subr.bf16.mxu0 %v1654
        %2534 = vmatpush1.bf16.msra.mxu0 %v1653
        %2535 = vmatprep.subr.bf16.mxu0 %v1658
        %2536 = vmatpush1.bf16.msra.mxu0 %v1657
        %2537 = vmatprep.subr.bf16.mxu0 %v1662
        %2538 = vmatpush1.bf16.msra.mxu0 %v1661
        %2539 = vmatprep.subr.bf16.mxu0 %v1666
        %2540 = vmatpush1.bf16.msra.mxu0 %v1665
        %2541 = vmatprep.subr.bf16.mxu0 %v1670
        %2542 = vmatpush1.bf16.msra.mxu0 %v1669
        %2543 = vmatprep.subr.bf16.mxu0 %v1674
        %2544 = vmatpush1.bf16.msra.mxu0 %v1673
        %2545 = vmatprep.subr.bf16.mxu0 %v1678
        %2546 = vmatpush1.bf16.msra.mxu0 %v1677
        %2547 = vmatprep.mubr.bf16.mxu0 %v832
        %2548 = vmatmul.mubr.bf16.gmra.mrb[0].mxu0 %v831
        %v2549 = vpop.f32.mrb[0].mxu0
        %v2550 = vadd.f32 %v646, %v2549
        %v2551 = vpop.f32.mrb[0].mxu0
        %v2552 = vadd.f32 %v650, %v2551
        %v2553 = vpop.f32.mrb[0].mxu0
        %v2554 = vadd.f32 %v646, %v2553
        %v2555 = vpop.f32.mrb[0].mxu0
        %v2556 = vadd.f32 %v650, %v2555
        %2557 = vmatprep.mubr.bf16.mxu0 %v839
        %2558 = vmatmul.mubr.bf16.gmra.mrb[0].mxu0 %v838
        %v2559 = vpop.f32.mrb[0].mxu0
        %v2560 = vadd.f32 %v646, %v2559
        %v2561 = vpop.f32.mrb[0].mxu0
        %v2562 = vadd.f32 %v650, %v2561
        %v2563 = vpop.f32.mrb[0].mxu0
        %v2564 = vadd.f32 %v646, %v2563
        %v2565 = vpop.f32.mrb[0].mxu0
        %v2566 = vadd.f32 %v650, %v2565
        %2567 = vmatprep.mubr.bf16.mxu0 %v846
        %2568 = vmatmul.mubr.bf16.gmra.mrb[0].mxu0 %v845
        %v2569 = vpop.f32.mrb[0].mxu0
        %v2570 = vadd.f32 %v646, %v2569
        %v2571 = vpop.f32.mrb[0].mxu0
        %v2572 = vadd.f32 %v650, %v2571
        %v2573 = vpop.f32.mrb[0].mxu0
        %v2574 = vadd.f32 %v646, %v2573
        %v2575 = vpop.f32.mrb[0].mxu0
        %v2576 = vadd.f32 %v650, %v2575
        %2577 = vmatprep.mubr.bf16.mxu0 %v853
        %2578 = vmatmul.mubr.bf16.gmra.mrb[0].mxu0 %v852
        %v2579 = vpop.f32.mrb[0].mxu0
        %v2580 = vadd.f32 %v646, %v2579
        %v2581 = vpop.f32.mrb[0].mxu0
        %v2582 = vadd.f32 %v650, %v2581
        %v2583 = vpop.f32.mrb[0].mxu0
        %v2584 = vadd.f32 %v646, %v2583
        %v2585 = vpop.f32.mrb[0].mxu0
        %v2586 = vadd.f32 %v650, %v2585
        %2587 = vmatprep.mubr.bf16.mxu0 %v860
        %2588 = vmatmul.mubr.bf16.gmra.mrb[0].mxu0 %v859
        %v2589 = vpop.f32.mrb[0].mxu0
        %v2590 = vadd.f32 %v646, %v2589
        %v2591 = vpop.f32.mrb[0].mxu0
        %v2592 = vadd.f32 %v650, %v2591
        %v2593 = vpop.f32.mrb[0].mxu0
        %v2594 = vadd.f32 %v646, %v2593
        %v2595 = vpop.f32.mrb[0].mxu0
        %v2596 = vadd.f32 %v650, %v2595
        %2597 = vmatprep.mubr.bf16.mxu0 %v867
        %2598 = vmatmul.mubr.bf16.gmra.mrb[0].mxu0 %v866
        %v2599 = vpop.f32.mrb[0].mxu0
        %v2600 = vadd.f32 %v646, %v2599
        %v2601 = vpop.f32.mrb[0].mxu0
        %v2602 = vadd.f32 %v650, %v2601
        %v2603 = vpop.f32.mrb[0].mxu0
        %v2604 = vadd.f32 %v646, %v2603
        %v2605 = vpop.f32.mrb[0].mxu0
        %v2606 = vadd.f32 %v650, %v2605
        %2607 = vmatprep.mubr.bf16.mxu0 %v874
        %2608 = vmatmul.mubr.bf16.gmra.mrb[0].mxu0 %v873
        %v2609 = vpop.f32.mrb[0].mxu0
        %v2610 = vadd.f32 %v646, %v2609
        %v2611 = vpop.f32.mrb[0].mxu0
        %v2612 = vadd.f32 %v650, %v2611
        %v2613 = vpop.f32.mrb[0].mxu0
        %v2614 = vadd.f32 %v646, %v2613
        %v2615 = vpop.f32.mrb[0].mxu0
        %v2616 = vadd.f32 %v650, %v2615
        %2617 = vmatprep.mubr.bf16.mxu0 %v881
        %2618 = vmatmul.mubr.bf16.gmra.mrb[0].mxu0 %v880
        %v2619 = vpop.f32.mrb[0].mxu0
        %v2620 = vadd.f32 %v646, %v2619
        %v2621 = vpop.f32.mrb[0].mxu0
        %v2622 = vadd.f32 %v650, %v2621
        %v2623 = vpop.f32.mrb[0].mxu0
        %v2624 = vadd.f32 %v646, %v2623
        %v2625 = vpop.f32.mrb[0].mxu0
        %v2626 = vadd.f32 %v650, %v2625
        %2627 = vdwg.mxu0
        %2628 = vmatprep.subr.bf16.mxu0 %v1682
        %2629 = vmatpush1.bf16.msra.mxu0 %v1681
        %2630 = vmatprep.subr.bf16.mxu0 %v1686
        %2631 = vmatpush1.bf16.msra.mxu0 %v1685
        %2632 = vmatprep.subr.bf16.mxu0 %v1690
        %2633 = vmatpush1.bf16.msra.mxu0 %v1689
        %2634 = vmatprep.subr.bf16.mxu0 %v1694
        %2635 = vmatpush1.bf16.msra.mxu0 %v1693
        %2636 = vmatprep.subr.bf16.mxu0 %v1698
        %2637 = vmatpush1.bf16.msra.mxu0 %v1697
        %2638 = vmatprep.subr.bf16.mxu0 %v1702
        %2639 = vmatpush1.bf16.msra.mxu0 %v1701
        %2640 = vmatprep.subr.bf16.mxu0 %v1706
        %2641 = vmatpush1.bf16.msra.mxu0 %v1705
        %2642 = vmatprep.subr.bf16.mxu0 %v1710
        %2643 = vmatpush1.bf16.msra.mxu0 %v1709
        %2644 = vmatprep.subr.bf16.mxu0 %v1714
        %2645 = vmatpush1.bf16.msra.mxu0 %v1713
        %2646 = vmatprep.subr.bf16.mxu0 %v1718
        %2647 = vmatpush1.bf16.msra.mxu0 %v1717
        %2648 = vmatprep.subr.bf16.mxu0 %v1722
        %2649 = vmatpush1.bf16.msra.mxu0 %v1721
        %2650 = vmatprep.subr.bf16.mxu0 %v1726
        %2651 = vmatpush1.bf16.msra.mxu0 %v1725
        %2652 = vmatprep.subr.bf16.mxu0 %v1730
        %2653 = vmatpush1.bf16.msra.mxu0 %v1729
        %2654 = vmatprep.subr.bf16.mxu0 %v1734
        %2655 = vmatpush1.bf16.msra.mxu0 %v1733
        %2656 = vmatprep.subr.bf16.mxu0 %v1738
        %2657 = vmatpush1.bf16.msra.mxu0 %v1737
        %2658 = vmatprep.subr.bf16.mxu0 %v1742
        %2659 = vmatpush1.bf16.msra.mxu0 %v1741
        %2660 = vmatprep.mubr.bf16.mxu0 %v834
        %2661 = vmatmul.mubr.bf16.gmra.mrb[0].mxu0 %v833
        %v2662 = vpop.f32.mrb[0].mxu0
        %v2663 = vadd.f32 %v2550, %v2662
        %v2664 = vpop.f32.mrb[0].mxu0
        %v2665 = vadd.f32 %v2552, %v2664
        %v2666 = vpop.f32.mrb[0].mxu0
        %v2667 = vadd.f32 %v2554, %v2666
        %v2668 = vpop.f32.mrb[0].mxu0
        %v2669 = vadd.f32 %v2556, %v2668
        %2670 = vmatprep.mubr.bf16.mxu0 %v841
        %2671 = vmatmul.mubr.bf16.gmra.mrb[0].mxu0 %v840
        %v2672 = vpop.f32.mrb[0].mxu0
        %v2673 = vadd.f32 %v2560, %v2672
        %v2674 = vpop.f32.mrb[0].mxu0
        %v2675 = vadd.f32 %v2562, %v2674
        %v2676 = vpop.f32.mrb[0].mxu0
        %v2677 = vadd.f32 %v2564, %v2676
        %v2678 = vpop.f32.mrb[0].mxu0
        %v2679 = vadd.f32 %v2566, %v2678
        %2680 = vmatprep.mubr.bf16.mxu0 %v848
        %2681 = vmatmul.mubr.bf16.gmra.mrb[0].mxu0 %v847
        %v2682 = vpop.f32.mrb[0].mxu0
        %v2683 = vadd.f32 %v2570, %v2682
        %v2684 = vpop.f32.mrb[0].mxu0
        %v2685 = vadd.f32 %v2572, %v2684
        %v2686 = vpop.f32.mrb[0].mxu0
        %v2687 = vadd.f32 %v2574, %v2686
        %v2688 = vpop.f32.mrb[0].mxu0
        %v2689 = vadd.f32 %v2576, %v2688
        %2690 = vmatprep.mubr.bf16.mxu0 %v855
        %2691 = vmatmul.mubr.bf16.gmra.mrb[0].mxu0 %v854
        %v2692 = vpop.f32.mrb[0].mxu0
        %v2693 = vadd.f32 %v2580, %v2692
        %v2694 = vpop.f32.mrb[0].mxu0
        %v2695 = vadd.f32 %v2582, %v2694
        %v2696 = vpop.f32.mrb[0].mxu0
        %v2697 = vadd.f32 %v2584, %v2696
        %v2698 = vpop.f32.mrb[0].mxu0
        %v2699 = vadd.f32 %v2586, %v2698
        %2700 = vmatprep.mubr.bf16.mxu0 %v862
        %2701 = vmatmul.mubr.bf16.gmra.mrb[0].mxu0 %v861
        %v2702 = vpop.f32.mrb[0].mxu0
        %v2703 = vadd.f32 %v2590, %v2702
        %v2704 = vpop.f32.mrb[0].mxu0
        %v2705 = vadd.f32 %v2592, %v2704
        %v2706 = vpop.f32.mrb[0].mxu0
        %v2707 = vadd.f32 %v2594, %v2706
        %v2708 = vpop.f32.mrb[0].mxu0
        %v2709 = vadd.f32 %v2596, %v2708
        %2710 = vmatprep.mubr.bf16.mxu0 %v869
        %2711 = vmatmul.mubr.bf16.gmra.mrb[0].mxu0 %v868
        %v2712 = vpop.f32.mrb[0].mxu0
        %v2713 = vadd.f32 %v2600, %v2712
        %v2714 = vpop.f32.mrb[0].mxu0
        %v2715 = vadd.f32 %v2602, %v2714
        %v2716 = vpop.f32.mrb[0].mxu0
        %v2717 = vadd.f32 %v2604, %v2716
        %v2718 = vpop.f32.mrb[0].mxu0
        %v2719 = vadd.f32 %v2606, %v2718
        %2720 = vmatprep.mubr.bf16.mxu0 %v876
        %2721 = vmatmul.mubr.bf16.gmra.mrb[0].mxu0 %v875
        %v2722 = vpop.f32.mrb[0].mxu0
        %v2723 = vadd.f32 %v2610, %v2722
        %v2724 = vpop.f32.mrb[0].mxu0
        %v2725 = vadd.f32 %v2612, %v2724
        %v2726 = vpop.f32.mrb[0].mxu0
        %v2727 = vadd.f32 %v2614, %v2726
        %v2728 = vpop.f32.mrb[0].mxu0
        %v2729 = vadd.f32 %v2616, %v2728
        %2730 = vmatprep.mubr.bf16.mxu0 %v883
        %2731 = vmatmul.mubr.bf16.gmra.mrb[0].mxu0 %v882
        %v2732 = vpop.f32.mrb[0].mxu0
        %v2733 = vadd.f32 %v2620, %v2732
        %v2734 = vpop.f32.mrb[0].mxu0
        %v2735 = vadd.f32 %v2622, %v2734
        %v2736 = vpop.f32.mrb[0].mxu0
        %v2737 = vadd.f32 %v2624, %v2736
        %v2738 = vpop.f32.mrb[0].mxu0
        %v2739 = vadd.f32 %v2626, %v2738
        %2740 = vdwg.mxu0
        %2741 = vmatprep.subr.bf16.mxu0 %v1746
        %2742 = vmatpush1.bf16.msra.mxu0 %v1745
        %2743 = vmatprep.subr.bf16.mxu0 %v1750
        %2744 = vmatpush1.bf16.msra.mxu0 %v1749
        %2745 = vmatprep.subr.bf16.mxu0 %v1754
        %2746 = vmatpush1.bf16.msra.mxu0 %v1753
        %2747 = vmatprep.subr.bf16.mxu0 %v1758
        %2748 = vmatpush1.bf16.msra.mxu0 %v1757
        %2749 = vmatprep.subr.bf16.mxu0 %v1762
        %2750 = vmatpush1.bf16.msra.mxu0 %v1761
        %2751 = vmatprep.subr.bf16.mxu0 %v1766
        %2752 = vmatpush1.bf16.msra.mxu0 %v1765
        %2753 = vmatprep.subr.bf16.mxu0 %v1770
        %2754 = vmatpush1.bf16.msra.mxu0 %v1769
        %2755 = vmatprep.subr.bf16.mxu0 %v1774
        %2756 = vmatpush1.bf16.msra.mxu0 %v1773
        %2757 = vmatprep.subr.bf16.mxu0 %v1778
        %2758 = vmatpush1.bf16.msra.mxu0 %v1777
        %2759 = vmatprep.subr.bf16.mxu0 %v1782
        %2760 = vmatpush1.bf16.msra.mxu0 %v1781
        %2761 = vmatprep.subr.bf16.mxu0 %v1786
        %2762 = vmatpush1.bf16.msra.mxu0 %v1785
        %2763 = vmatprep.subr.bf16.mxu0 %v1790
        %2764 = vmatpush1.bf16.msra.mxu0 %v1789
        %2765 = vmatprep.subr.bf16.mxu0 %v1794
        %2766 = vmatpush1.bf16.msra.mxu0 %v1793
        %2767 = vmatprep.subr.bf16.mxu0 %v1798
        %2768 = vmatpush1.bf16.msra.mxu0 %v1797
        %2769 = vmatprep.subr.bf16.mxu0 %v1802
        %2770 = vmatpush1.bf16.msra.mxu0 %v1801
        %2771 = vmatprep.subr.bf16.mxu0 %v1806
        %2772 = vmatpush1.bf16.msra.mxu0 %v1805
        %2773 = vmatprep.mubr.bf16.mxu0 %v836
        %2774 = vmatmul.mubr.bf16.gmra.mrb[0].mxu0 %v835
        %v2775 = vpop.f32.mrb[0].mxu0
        %v2776 = vadd.f32 %v2663, %v2775
        %v2777 = vpop.f32.mrb[0].mxu0
        %v2778 = vadd.f32 %v2665, %v2777
        %v2779 = vpop.f32.mrb[0].mxu0
        %v2780 = vadd.f32 %v2667, %v2779
        %v2781 = vpop.f32.mrb[0].mxu0
        %v2782 = vadd.f32 %v2669, %v2781
        %2783 = vmatprep.mubr.bf16.mxu0 %v843
        %2784 = vmatmul.mubr.bf16.gmra.mrb[0].mxu0 %v842
        %v2785 = vpop.f32.mrb[0].mxu0
        %v2786 = vadd.f32 %v2673, %v2785
        %v2787 = vpop.f32.mrb[0].mxu0
        %v2788 = vadd.f32 %v2675, %v2787
        %v2789 = vpop.f32.mrb[0].mxu0
        %v2790 = vadd.f32 %v2677, %v2789
        %v2791 = vpop.f32.mrb[0].mxu0
        %v2792 = vadd.f32 %v2679, %v2791
        %2793 = vmatprep.mubr.bf16.mxu0 %v850
        %2794 = vmatmul.mubr.bf16.gmra.mrb[0].mxu0 %v849
        %v2795 = vpop.f32.mrb[0].mxu0
        %v2796 = vadd.f32 %v2683, %v2795
        %v2797 = vpop.f32.mrb[0].mxu0
        %v2798 = vadd.f32 %v2685, %v2797
        %v2799 = vpop.f32.mrb[0].mxu0
        %v2800 = vadd.f32 %v2687, %v2799
        %v2801 = vpop.f32.mrb[0].mxu0
        %v2802 = vadd.f32 %v2689, %v2801
        %2803 = vmatprep.mubr.bf16.mxu0 %v857
        %2804 = vmatmul.mubr.bf16.gmra.mrb[0].mxu0 %v856
        %v2805 = vpop.f32.mrb[0].mxu0
        %v2806 = vadd.f32 %v2693, %v2805
        %v2807 = vpop.f32.mrb[0].mxu0
        %v2808 = vadd.f32 %v2695, %v2807
        %v2809 = vpop.f32.mrb[0].mxu0
        %v2810 = vadd.f32 %v2697, %v2809
        %v2811 = vpop.f32.mrb[0].mxu0
        %v2812 = vadd.f32 %v2699, %v2811
        %2813 = vmatprep.mubr.bf16.mxu0 %v864
        %2814 = vmatmul.mubr.bf16.gmra.mrb[0].mxu0 %v863
        %v2815 = vpop.f32.mrb[0].mxu0
        %v2816 = vadd.f32 %v2703, %v2815
        %v2817 = vpop.f32.mrb[0].mxu0
        %v2818 = vadd.f32 %v2705, %v2817
        %v2819 = vpop.f32.mrb[0].mxu0
        %v2820 = vadd.f32 %v2707, %v2819
        %v2821 = vpop.f32.mrb[0].mxu0
        %v2822 = vadd.f32 %v2709, %v2821
        %2823 = vmatprep.mubr.bf16.mxu0 %v871
        %2824 = vmatmul.mubr.bf16.gmra.mrb[0].mxu0 %v870
        %v2825 = vpop.f32.mrb[0].mxu0
        %v2826 = vadd.f32 %v2713, %v2825
        %v2827 = vpop.f32.mrb[0].mxu0
        %v2828 = vadd.f32 %v2715, %v2827
        %v2829 = vpop.f32.mrb[0].mxu0
        %v2830 = vadd.f32 %v2717, %v2829
        %v2831 = vpop.f32.mrb[0].mxu0
        %v2832 = vadd.f32 %v2719, %v2831
        %2833 = vmatprep.mubr.bf16.mxu0 %v878
        %2834 = vmatmul.mubr.bf16.gmra.mrb[0].mxu0 %v877
        %v2835 = vpop.f32.mrb[0].mxu0
        %v2836 = vadd.f32 %v2723, %v2835
        %v2837 = vpop.f32.mrb[0].mxu0
        %v2838 = vadd.f32 %v2725, %v2837
        %v2839 = vpop.f32.mrb[0].mxu0
        %v2840 = vadd.f32 %v2727, %v2839
        %v2841 = vpop.f32.mrb[0].mxu0
        %v2842 = vadd.f32 %v2729, %v2841
        %2843 = vmatprep.mubr.bf16.mxu0 %v885
        %2844 = vmatmul.mubr.bf16.gmra.mrb[0].mxu0 %v884
        %v2845 = vpop.f32.mrb[0].mxu0
        %v2846 = vadd.f32 %v2733, %v2845
        %v2847 = vpop.f32.mrb[0].mxu0
        %v2848 = vadd.f32 %v2735, %v2847
        %v2849 = vpop.f32.mrb[0].mxu0
        %v2850 = vadd.f32 %v2737, %v2849
        %v2851 = vpop.f32.mrb[0].mxu0
        %v2852 = vadd.f32 %v2739, %v2851
        %2853 = vdwg.mxu0
        %2854 = vmatprep.subr.bf16.mxu0 %v1810
        %2855 = vmatpush1.bf16.msra.mxu0 %v1809
        %2856 = vmatprep.subr.bf16.mxu0 %v1814
        %2857 = vmatpush1.bf16.msra.mxu0 %v1813
        %2858 = vmatprep.subr.bf16.mxu0 %v1818
        %2859 = vmatpush1.bf16.msra.mxu0 %v1817
        %2860 = vmatprep.subr.bf16.mxu0 %v1822
        %2861 = vmatpush1.bf16.msra.mxu0 %v1821
        %2862 = vmatprep.subr.bf16.mxu0 %v1826
        %2863 = vmatpush1.bf16.msra.mxu0 %v1825
        %2864 = vmatprep.subr.bf16.mxu0 %v1830
        %2865 = vmatpush1.bf16.msra.mxu0 %v1829
        %2866 = vmatprep.subr.bf16.mxu0 %v1834
        %2867 = vmatpush1.bf16.msra.mxu0 %v1833
        %2868 = vmatprep.subr.bf16.mxu0 %v1838
        %2869 = vmatpush1.bf16.msra.mxu0 %v1837
        %2870 = vmatprep.subr.bf16.mxu0 0
        %2871 = vmatpush1.bf16.msra.mxu0 0
        %2872 = vmatprep.subr.bf16.mxu0 0
        %2873 = vmatpush1.bf16.msra.mxu0 0
        %2874 = vmatprep.subr.bf16.mxu0 0
        %2875 = vmatpush1.bf16.msra.mxu0 0
        %2876 = vmatprep.subr.bf16.mxu0 0
        %2877 = vmatpush1.bf16.msra.mxu0 0
        %2878 = vmatprep.subr.bf16.mxu0 0
        %2879 = vmatpush1.bf16.msra.mxu0 0
        %2880 = vmatprep.subr.bf16.mxu0 0
        %2881 = vmatpush1.bf16.msra.mxu0 0
        %2882 = vmatprep.subr.bf16.mxu0 0
        %2883 = vmatpush1.bf16.msra.mxu0 0
        %2884 = vmatprep.subr.bf16.mxu0 0
        %2885 = vmatpush1.bf16.msra.mxu0 0
        %2886 = vmatprep.mubr.bf16.mxu0 0
        %2887 = vmatmul.mubr.bf16.gmra.mrb[0].mxu0 %v837
        %v2888 = vpop.f32.mrb[0].mxu0
        %v2889 = vadd.f32 %v2776, %v2888
        %v2890 = vpop.f32.mrb[0].mxu0
        %v2891 = vadd.f32 %v2778, %v2890
        %v2892 = vpop.f32.mrb[0].mxu0
        %v2893 = vadd.f32 %v2780, %v2892
        %v2894 = vpop.f32.mrb[0].mxu0
        %v2895 = vadd.f32 %v2782, %v2894
        %2896 = vmatprep.mubr.bf16.mxu0 0
        %2897 = vmatmul.mubr.bf16.gmra.mrb[0].mxu0 %v844
        %v2898 = vpop.f32.mrb[0].mxu0
        %v2899 = vadd.f32 %v2786, %v2898
        %v2900 = vpop.f32.mrb[0].mxu0
        %v2901 = vadd.f32 %v2788, %v2900
        %v2902 = vpop.f32.mrb[0].mxu0
        %v2903 = vadd.f32 %v2790, %v2902
        %v2904 = vpop.f32.mrb[0].mxu0
        %v2905 = vadd.f32 %v2792, %v2904
        %2906 = vmatprep.mubr.bf16.mxu0 0
        %2907 = vmatmul.mubr.bf16.gmra.mrb[0].mxu0 %v851
        %v2908 = vpop.f32.mrb[0].mxu0
        %v2909 = vadd.f32 %v2796, %v2908
        %v2910 = vpop.f32.mrb[0].mxu0
        %v2911 = vadd.f32 %v2798, %v2910
        %v2912 = vpop.f32.mrb[0].mxu0
        %v2913 = vadd.f32 %v2800, %v2912
        %v2914 = vpop.f32.mrb[0].mxu0
        %v2915 = vadd.f32 %v2802, %v2914
        %2916 = vmatprep.mubr.bf16.mxu0 0
        %2917 = vmatmul.mubr.bf16.gmra.mrb[0].mxu0 %v858
        %v2918 = vpop.f32.mrb[0].mxu0
        %v2919 = vadd.f32 %v2806, %v2918
        %v2920 = vpop.f32.mrb[0].mxu0
        %v2921 = vadd.f32 %v2808, %v2920
        %v2922 = vpop.f32.mrb[0].mxu0
        %v2923 = vadd.f32 %v2810, %v2922
        %v2924 = vpop.f32.mrb[0].mxu0
        %v2925 = vadd.f32 %v2812, %v2924
        %2926 = vmatprep.mubr.bf16.mxu0 0
        %2927 = vmatmul.mubr.bf16.gmra.mrb[0].mxu0 %v865
        %v2928 = vpop.f32.mrb[0].mxu0
        %v2929 = vadd.f32 %v2816, %v2928
        %v2930 = vpop.f32.mrb[0].mxu0
        %v2931 = vadd.f32 %v2818, %v2930
        %v2932 = vpop.f32.mrb[0].mxu0
        %v2933 = vadd.f32 %v2820, %v2932
        %v2934 = vpop.f32.mrb[0].mxu0
        %v2935 = vadd.f32 %v2822, %v2934
        %2936 = vmatprep.mubr.bf16.mxu0 0
        %2937 = vmatmul.mubr.bf16.gmra.mrb[0].mxu0 %v872
        %v2938 = vpop.f32.mrb[0].mxu0
        %v2939 = vadd.f32 %v2826, %v2938
        %v2940 = vpop.f32.mrb[0].mxu0
        %v2941 = vadd.f32 %v2828, %v2940
        %v2942 = vpop.f32.mrb[0].mxu0
        %v2943 = vadd.f32 %v2830, %v2942
        %v2944 = vpop.f32.mrb[0].mxu0
        %v2945 = vadd.f32 %v2832, %v2944
        %2946 = vmatprep.mubr.bf16.mxu0 0
        %2947 = vmatmul.mubr.bf16.gmra.mrb[0].mxu0 %v879
        %v2948 = vpop.f32.mrb[0].mxu0
        %v2949 = vadd.f32 %v2836, %v2948
        %v2950 = vpop.f32.mrb[0].mxu0
        %v2951 = vadd.f32 %v2838, %v2950
        %v2952 = vpop.f32.mrb[0].mxu0
        %v2953 = vadd.f32 %v2840, %v2952
        %v2954 = vpop.f32.mrb[0].mxu0
        %v2955 = vadd.f32 %v2842, %v2954
        %2956 = vmatprep.mubr.bf16.mxu0 0
        %2957 = vmatmul.mubr.bf16.gmra.mrb[0].mxu0 %v886
        %v2958 = vpop.f32.mrb[0].mxu0
        %v2959 = vadd.f32 %v2846, %v2958
        %v2960 = vpop.f32.mrb[0].mxu0
        %v2961 = vadd.f32 %v2848, %v2960
        %v2962 = vpop.f32.mrb[0].mxu0
        %v2963 = vadd.f32 %v2850, %v2962
        %v2964 = vpop.f32.mrb[0].mxu0
        %v2965 = vadd.f32 %v2852, %v2964
        %2966 = vdwg.mxu0
        %vm2967 = vcmp.ge.f32.partialorder %v2437, 0.0
        %vm2968 = vcmp.ge.f32.partialorder %v2439, 0.0
        %vm2969 = vcmp.ge.f32.partialorder %v2889, 0.0
        %vm2970 = vcmp.ge.f32.partialorder %v2891, 0.0
        %vm2971 = vcmp.ge.f32.partialorder %v2441, 0.0
        %vm2972 = vcmp.ge.f32.partialorder %v2443, 0.0
        %vm2973 = vcmp.ge.f32.partialorder %v2893, 0.0
        %vm2974 = vcmp.ge.f32.partialorder %v2895, 0.0
        %vm2975 = vcmp.ge.f32.partialorder %v2447, 0.0
        %vm2976 = vcmp.ge.f32.partialorder %v2449, 0.0
        %vm2977 = vcmp.ge.f32.partialorder %v2899, 0.0
        %vm2978 = vcmp.ge.f32.partialorder %v2901, 0.0
        %vm2979 = vcmp.ge.f32.partialorder %v2451, 0.0
        %vm2980 = vcmp.ge.f32.partialorder %v2453, 0.0
        %vm2981 = vcmp.ge.f32.partialorder %v2903, 0.0
        %vm2982 = vcmp.ge.f32.partialorder %v2905, 0.0
        %vm2983 = vcmp.ge.f32.partialorder %v2457, 0.0
        %vm2984 = vcmp.ge.f32.partialorder %v2459, 0.0
        %vm2985 = vcmp.ge.f32.partialorder %v2909, 0.0
        %vm2986 = vcmp.ge.f32.partialorder %v2911, 0.0
        %vm2987 = vcmp.ge.f32.partialorder %v2461, 0.0
        %vm2988 = vcmp.ge.f32.partialorder %v2463, 0.0
        %vm2989 = vcmp.ge.f32.partialorder %v2913, 0.0
        %vm2990 = vcmp.ge.f32.partialorder %v2915, 0.0
        %vm2991 = vcmp.ge.f32.partialorder %v2467, 0.0
        %vm2992 = vcmp.ge.f32.partialorder %v2469, 0.0
        %vm2993 = vcmp.ge.f32.partialorder %v2919, 0.0
        %vm2994 = vcmp.ge.f32.partialorder %v2921, 0.0
        %vm2995 = vcmp.ge.f32.partialorder %v2471, 0.0
        %vm2996 = vcmp.ge.f32.partialorder %v2473, 0.0
        %vm2997 = vcmp.ge.f32.partialorder %v2923, 0.0
        %vm2998 = vcmp.ge.f32.partialorder %v2925, 0.0
        %vm2999 = vcmp.ge.f32.partialorder %v2477, 0.0
        %vm3000 = vcmp.ge.f32.partialorder %v2479, 0.0
        %vm3001 = vcmp.ge.f32.partialorder %v2929, 0.0
        %vm3002 = vcmp.ge.f32.partialorder %v2931, 0.0
        %vm3003 = vcmp.ge.f32.partialorder %v2481, 0.0
        %vm3004 = vcmp.ge.f32.partialorder %v2483, 0.0
        %vm3005 = vcmp.ge.f32.partialorder %v2933, 0.0
        %vm3006 = vcmp.ge.f32.partialorder %v2935, 0.0
        %vm3007 = vcmp.ge.f32.partialorder %v2487, 0.0
        %vm3008 = vcmp.ge.f32.partialorder %v2489, 0.0
        %vm3009 = vcmp.ge.f32.partialorder %v2939, 0.0
        %vm3010 = vcmp.ge.f32.partialorder %v2941, 0.0
        %vm3011 = vcmp.ge.f32.partialorder %v2491, 0.0
        %vm3012 = vcmp.ge.f32.partialorder %v2493, 0.0
        %vm3013 = vcmp.ge.f32.partialorder %v2943, 0.0
        %vm3014 = vcmp.ge.f32.partialorder %v2945, 0.0
        %vm3015 = vcmp.ge.f32.partialorder %v2497, 0.0
        %vm3016 = vcmp.ge.f32.partialorder %v2499, 0.0
        %vm3017 = vcmp.ge.f32.partialorder %v2949, 0.0
        %vm3018 = vcmp.ge.f32.partialorder %v2951, 0.0
        %vm3019 = vcmp.ge.f32.partialorder %v2501, 0.0
        %vm3020 = vcmp.ge.f32.partialorder %v2503, 0.0
        %vm3021 = vcmp.ge.f32.partialorder %v2953, 0.0
        %vm3022 = vcmp.ge.f32.partialorder %v2955, 0.0
        %vm3023 = vcmp.ge.f32.partialorder %v2507, 0.0
        %vm3024 = vcmp.ge.f32.partialorder %v2509, 0.0
        %vm3025 = vcmp.ge.f32.partialorder %v2959, 0.0
        %vm3026 = vcmp.ge.f32.partialorder %v2961, 0.0
        %vm3027 = vcmp.ge.f32.partialorder %v2511, 0.0
        %vm3028 = vcmp.ge.f32.partialorder %v2513, 0.0
        %vm3029 = vcmp.ge.f32.partialorder %v2963, 0.0
        %vm3030 = vcmp.ge.f32.partialorder %v2965, 0.0
        %v3031 = vmul.f32 %v2437, 0.2
        %v3032 = vmul.f32 %v2439, 0.2
        %v3033 = vmul.f32 %v2889, 0.2
        %v3034 = vmul.f32 %v2891, 0.2
        %v3035 = vmul.f32 %v2441, 0.2
        %v3036 = vmul.f32 %v2443, 0.2
        %v3037 = vmul.f32 %v2893, 0.2
        %v3038 = vmul.f32 %v2895, 0.2
        %v3039 = vmul.f32 %v2447, 0.2
        %v3040 = vmul.f32 %v2449, 0.2
        %v3041 = vmul.f32 %v2899, 0.2
        %v3042 = vmul.f32 %v2901, 0.2
        %v3043 = vmul.f32 %v2451, 0.2
        %v3044 = vmul.f32 %v2453, 0.2
        %v3045 = vmul.f32 %v2903, 0.2
        %v3046 = vmul.f32 %v2905, 0.2
        %v3047 = vmul.f32 %v2457, 0.2
        %v3048 = vmul.f32 %v2459, 0.2
        %v3049 = vmul.f32 %v2909, 0.2
        %v3050 = vmul.f32 %v2911, 0.2
        %v3051 = vmul.f32 %v2461, 0.2
        %v3052 = vmul.f32 %v2463, 0.2
        %v3053 = vmul.f32 %v2913, 0.2
        %v3054 = vmul.f32 %v2915, 0.2
        %v3055 = vmul.f32 %v2467, 0.2
        %v3056 = vmul.f32 %v2469, 0.2
        %v3057 = vmul.f32 %v2919, 0.2
        %v3058 = vmul.f32 %v2921, 0.2
        %v3059 = vmul.f32 %v2471, 0.2
        %v3060 = vmul.f32 %v2473, 0.2
        %v3061 = vmul.f32 %v2923, 0.2
        %v3062 = vmul.f32 %v2925, 0.2
        %v3063 = vmul.f32 %v2477, 0.2
        %v3064 = vmul.f32 %v2479, 0.2
        %v3065 = vmul.f32 %v2929, 0.2
        %v3066 = vmul.f32 %v2931, 0.2
        %v3067 = vmul.f32 %v2481, 0.2
        %v3068 = vmul.f32 %v2483, 0.2
        %v3069 = vmul.f32 %v2933, 0.2
        %v3070 = vmul.f32 %v2935, 0.2
        %v3071 = vmul.f32 %v2487, 0.2
        %v3072 = vmul.f32 %v2489, 0.2
        %v3073 = vmul.f32 %v2939, 0.2
        %v3074 = vmul.f32 %v2941, 0.2
        %v3075 = vmul.f32 %v2491, 0.2
        %v3076 = vmul.f32 %v2493, 0.2
        %v3077 = vmul.f32 %v2943, 0.2
        %v3078 = vmul.f32 %v2945, 0.2
        %v3079 = vmul.f32 %v2497, 0.2
        %v3080 = vmul.f32 %v2499, 0.2
        %v3081 = vmul.f32 %v2949, 0.2
        %v3082 = vmul.f32 %v2951, 0.2
        %v3083 = vmul.f32 %v2501, 0.2
        %v3084 = vmul.f32 %v2503, 0.2
        %v3085 = vmul.f32 %v2953, 0.2
        %v3086 = vmul.f32 %v2955, 0.2
        %v3087 = vmul.f32 %v2507, 0.2
        %v3088 = vmul.f32 %v2509, 0.2
        %v3089 = vmul.f32 %v2959, 0.2
        %v3090 = vmul.f32 %v2961, 0.2
        %v3091 = vmul.f32 %v2511, 0.2
        %v3092 = vmul.f32 %v2513, 0.2
        %v3093 = vmul.f32 %v2963, 0.2
        %v3094 = vmul.f32 %v2965, 0.2
        %v3095 = vsel %vm2967, %v2437, %v3031
        %v3096 = vsel %vm2968, %v2439, %v3032
        %v3097 = vsel %vm2969, %v2889, %v3033
        %v3098 = vsel %vm2970, %v2891, %v3034
        %v3099 = vsel %vm2971, %v2441, %v3035
        %v3100 = vsel %vm2972, %v2443, %v3036
        %v3101 = vsel %vm2973, %v2893, %v3037
        %v3102 = vsel %vm2974, %v2895, %v3038
        %v3103 = vsel %vm2975, %v2447, %v3039
        %v3104 = vsel %vm2976, %v2449, %v3040
        %v3105 = vsel %vm2977, %v2899, %v3041
        %v3106 = vsel %vm2978, %v2901, %v3042
        %v3107 = vsel %vm2979, %v2451, %v3043
        %v3108 = vsel %vm2980, %v2453, %v3044
        %v3109 = vsel %vm2981, %v2903, %v3045
        %v3110 = vsel %vm2982, %v2905, %v3046
        %v3111 = vsel %vm2983, %v2457, %v3047
        %v3112 = vsel %vm2984, %v2459, %v3048
        %v3113 = vsel %vm2985, %v2909, %v3049
        %v3114 = vsel %vm2986, %v2911, %v3050
        %v3115 = vsel %vm2987, %v2461, %v3051
        %v3116 = vsel %vm2988, %v2463, %v3052
        %v3117 = vsel %vm2989, %v2913, %v3053
        %v3118 = vsel %vm2990, %v2915, %v3054
        %v3119 = vsel %vm2991, %v2467, %v3055
        %v3120 = vsel %vm2992, %v2469, %v3056
        %v3121 = vsel %vm2993, %v2919, %v3057
        %v3122 = vsel %vm2994, %v2921, %v3058
        %v3123 = vsel %vm2995, %v2471, %v3059
        %v3124 = vsel %vm2996, %v2473, %v3060
        %v3125 = vsel %vm2997, %v2923, %v3061
        %v3126 = vsel %vm2998, %v2925, %v3062
        %v3127 = vsel %vm2999, %v2477, %v3063
        %v3128 = vsel %vm3000, %v2479, %v3064
        %v3129 = vsel %vm3001, %v2929, %v3065
        %v3130 = vsel %vm3002, %v2931, %v3066
        %v3131 = vsel %vm3003, %v2481, %v3067
        %v3132 = vsel %vm3004, %v2483, %v3068
        %v3133 = vsel %vm3005, %v2933, %v3069
        %v3134 = vsel %vm3006, %v2935, %v3070
        %v3135 = vsel %vm3007, %v2487, %v3071
        %v3136 = vsel %vm3008, %v2489, %v3072
        %v3137 = vsel %vm3009, %v2939, %v3073
        %v3138 = vsel %vm3010, %v2941, %v3074
        %v3139 = vsel %vm3011, %v2491, %v3075
        %v3140 = vsel %vm3012, %v2493, %v3076
        %v3141 = vsel %vm3013, %v2943, %v3077
        %v3142 = vsel %vm3014, %v2945, %v3078
        %v3143 = vsel %vm3015, %v2497, %v3079
        %v3144 = vsel %vm3016, %v2499, %v3080
        %v3145 = vsel %vm3017, %v2949, %v3081
        %v3146 = vsel %vm3018, %v2951, %v3082
        %v3147 = vsel %vm3019, %v2501, %v3083
        %v3148 = vsel %vm3020, %v2503, %v3084
        %v3149 = vsel %vm3021, %v2953, %v3085
        %v3150 = vsel %vm3022, %v2955, %v3086
        %v3151 = vsel %vm3023, %v2507, %v3087
        %v3152 = vsel %vm3024, %v2509, %v3088
        %v3153 = vsel %vm3025, %v2959, %v3089
        %v3154 = vsel %vm3026, %v2961, %v3090
        %v3155 = vsel %vm3027, %v2511, %v3091
        %v3156 = vsel %vm3028, %v2513, %v3092
        %v3157 = vsel %vm3029, %v2963, %v3093
        %v3158 = vsel %vm3030, %v2965, %v3094
        %v3159 = vpack.c.bf16 %v3099, %v3095
        %v3160 = vpack.c.bf16 %v3100, %v3096
        %v3161 = vpack.c.bf16 %v3101, %v3097
        %v3162 = vpack.c.bf16 %v3102, %v3098
        %v3163 = vpack.c.bf16 %v3107, %v3103
        %v3164 = vpack.c.bf16 %v3108, %v3104
        %v3165 = vpack.c.bf16 %v3109, %v3105
        %v3166 = vpack.c.bf16 %v3110, %v3106
        %v3167 = vpack.c.bf16 %v3115, %v3111
        %v3168 = vpack.c.bf16 %v3116, %v3112
        %v3169 = vpack.c.bf16 %v3117, %v3113
        %v3170 = vpack.c.bf16 %v3118, %v3114
        %v3171 = vpack.c.bf16 %v3123, %v3119
        %v3172 = vpack.c.bf16 %v3124, %v3120
        %v3173 = vpack.c.bf16 %v3125, %v3121
        %v3174 = vpack.c.bf16 %v3126, %v3122
        %v3175 = vpack.c.bf16 %v3131, %v3127
        %v3176 = vpack.c.bf16 %v3132, %v3128
        %v3177 = vpack.c.bf16 %v3133, %v3129
        %v3178 = vpack.c.bf16 %v3134, %v3130
        %v3179 = vpack.c.bf16 %v3139, %v3135
        %v3180 = vpack.c.bf16 %v3140, %v3136
        %v3181 = vpack.c.bf16 %v3141, %v3137
        %v3182 = vpack.c.bf16 %v3142, %v3138
        %v3183 = vpack.c.bf16 %v3147, %v3143
        %v3184 = vpack.c.bf16 %v3148, %v3144
        %v3185 = vpack.c.bf16 %v3149, %v3145
        %v3186 = vpack.c.bf16 %v3150, %v3146
        %v3187 = vpack.c.bf16 %v3155, %v3151
        %v3188 = vpack.c.bf16 %v3156, %v3152
        %v3189 = vpack.c.bf16 %v3157, %v3153
        %v3190 = vpack.c.bf16 %v3158, %v3154
        %v3191 = vld [vmem:[#allocation7] sm:$0xff]
        %v3192 = vld [vmem:[#allocation7 + $0x8] sm:$0xff]
        %v3193 = vld [vmem:[#allocation7 + $0x10] sm:$0xff]
        %v3194 = vld [vmem:[#allocation7 + $0x18] sm:$0xff]
        %v3195 = vld [vmem:[#allocation7 + $0x20] sm:$0xff]
        %v3196 = vld [vmem:[#allocation7 + $0x28] sm:$0xff]
        %v3197 = vld [vmem:[#allocation7 + $0x30] sm:$0xff]
        %v3198 = vld [vmem:[#allocation7 + $0x38] sm:$0xff]
        %v3199 = vld [vmem:[#allocation7 + $0x40] sm:$0xff]
        %v3200 = vld [vmem:[#allocation7 + $0x48] sm:$0xff]
        %v3201 = vld [vmem:[#allocation7 + $0x50] sm:$0xff]
        %v3202 = vld [vmem:[#allocation7 + $0x58] sm:$0xff]
        %v3203 = vld [vmem:[#allocation7 + $0x60] sm:$0xff]
        %v3204 = vld [vmem:[#allocation7 + $0x68] sm:$0xff]
        %v3205 = vld [vmem:[#allocation7 + $0x70] sm:$0xff]
        %v3206 = vld [vmem:[#allocation7 + $0x78] sm:$0xff]
        %v3207 = vld [vmem:[#allocation7 + $0x80] sm:$0xff]
        %v3208 = vld [vmem:[#allocation7 + $0x88] sm:$0xff]
        %v3209 = vld [vmem:[#allocation7 + $0x90] sm:$0xff]
        %v3210 = vld [vmem:[#allocation7 + $0x98] sm:$0xff]
        %v3211 = vld [vmem:[#allocation7 + $0xa0] sm:$0xff]
        %v3212 = vld [vmem:[#allocation7 + $0xa8] sm:$0xff]
        %v3213 = vld [vmem:[#allocation7 + $0xb0] sm:$0xff]
        %v3214 = vld [vmem:[#allocation7 + $0xb8] sm:$0xff]
        %v3215 = vld [vmem:[#allocation7 + $0xc0] sm:$0xff]
        %v3216 = vld [vmem:[#allocation7 + $0xc8] sm:$0xff]
        %v3217 = vld [vmem:[#allocation7 + $0xd0] sm:$0xff]
        %v3218 = vld [vmem:[#allocation7 + $0xd8] sm:$0xff]
        %v3219 = vld [vmem:[#allocation7 + $0xe0] sm:$0xff]
        %v3220 = vld [vmem:[#allocation7 + $0xe8] sm:$0xff]
        %v3221 = vld [vmem:[#allocation7 + $0xf0] sm:$0xff]
        %v3222 = vld [vmem:[#allocation7 + $0xf8] sm:$0xff]
        %v3223 = vld [vmem:[#allocation7 + $0x100] sm:$0xff]
        %v3224 = vld [vmem:[#allocation7 + $0x108] sm:$0xff]
        %v3225 = vld [vmem:[#allocation7 + $0x110] sm:$0xff]
        %v3226 = vld [vmem:[#allocation7 + $0x118] sm:$0xff]
        %v3227 = vld [vmem:[#allocation7 + $0x120] sm:$0xff]
        %v3228 = vld [vmem:[#allocation7 + $0x128] sm:$0xff]
        %v3229 = vld [vmem:[#allocation7 + $0x130] sm:$0xff]
        %v3230 = vld [vmem:[#allocation7 + $0x138] sm:$0xff]
        %v3231 = vld [vmem:[#allocation7 + $0x140] sm:$0xff]
        %v3232 = vld [vmem:[#allocation7 + $0x148] sm:$0xff]
        %v3233 = vld [vmem:[#allocation7 + $0x150] sm:$0xff]
        %v3234 = vld [vmem:[#allocation7 + $0x158] sm:$0xff]
        %v3235 = vld [vmem:[#allocation7 + $0x160] sm:$0xff]
        %v3236 = vld [vmem:[#allocation7 + $0x168] sm:$0xff]
        %v3237 = vld [vmem:[#allocation7 + $0x170] sm:$0xff]
        %v3238 = vld [vmem:[#allocation7 + $0x178] sm:$0xff]
        %v3239 = vld [vmem:[#allocation7 + $0x180] sm:$0xff]
        %v3240 = vld [vmem:[#allocation7 + $0x188] sm:$0xff]
        %v3241 = vld [vmem:[#allocation7 + $0x190] sm:$0xff]
        %v3242 = vld [vmem:[#allocation7 + $0x198] sm:$0xff]
        %v3243 = vld [vmem:[#allocation7 + $0x1a0] sm:$0xff]
        %v3244 = vld [vmem:[#allocation7 + $0x1a8] sm:$0xff]
        %v3245 = vld [vmem:[#allocation7 + $0x1b0] sm:$0xff]
        %v3246 = vld [vmem:[#allocation7 + $0x1b8] sm:$0xff]
        %v3247 = vld [vmem:[#allocation7 + $0x1c0] sm:$0xff]
        %v3248 = vld [vmem:[#allocation7 + $0x1c8] sm:$0xff]
        %v3249 = vld [vmem:[#allocation7 + $0x1d0] sm:$0xff]
        %v3250 = vld [vmem:[#allocation7 + $0x1d8] sm:$0xff]
        %v3251 = vld [vmem:[#allocation7 + $0x1e0] sm:$0xff]
        %v3252 = vld [vmem:[#allocation7 + $0x1e8] sm:$0xff]
        %v3253 = vld [vmem:[#allocation7 + $0x1f0] sm:$0xff]
        %v3254 = vld [vmem:[#allocation7 + $0x1f8] sm:$0xff]
        %v3255 = vld [vmem:[%s4] sm:$0x3]
        %v3257 = vlaneseq
        %v3258 = vshrl.u32 %v3257, 7
        %v3259 = vsub.s32 0, %v3258
        %v3260 = vrot.slane %v3255, %v3259
        %v3261 = vlaneseq
        %v3262 = vshrl.u32 %v3261, 7
        %v3263 = vsub.s32 1, %v3262
        %v3264 = vrot.slane %v3255, %v3263
        %v3331 = vunpack.c.l.b16 %v3191
        %v3332 = vunpack.c.h.b16 %v3191
        %v3333 = vunpack.c.l.b16 %v3192
        %v3334 = vunpack.c.h.b16 %v3192
        %v3335 = vunpack.c.l.b16 %v3193
        %v3336 = vunpack.c.h.b16 %v3193
        %v3337 = vunpack.c.l.b16 %v3194
        %v3338 = vunpack.c.h.b16 %v3194
        %v3339 = vunpack.c.l.b16 %v3195
        %v3340 = vunpack.c.h.b16 %v3195
        %v3341 = vunpack.c.l.b16 %v3196
        %v3342 = vunpack.c.h.b16 %v3196
        %v3343 = vunpack.c.l.b16 %v3197
        %v3344 = vunpack.c.h.b16 %v3197
        %v3345 = vunpack.c.l.b16 %v3198
        %v3346 = vunpack.c.h.b16 %v3198
        %v3347 = vunpack.c.l.b16 %v3199
        %v3348 = vunpack.c.h.b16 %v3199
        %v3349 = vunpack.c.l.b16 %v3200
        %v3350 = vunpack.c.h.b16 %v3200
        %v3351 = vunpack.c.l.b16 %v3201
        %v3352 = vunpack.c.h.b16 %v3201
        %v3353 = vunpack.c.l.b16 %v3202
        %v3354 = vunpack.c.h.b16 %v3202
        %v3355 = vunpack.c.l.b16 %v3203
        %v3356 = vunpack.c.h.b16 %v3203
        %v3357 = vunpack.c.l.b16 %v3204
        %v3358 = vunpack.c.h.b16 %v3204
        %v3359 = vunpack.c.l.b16 %v3205
        %v3360 = vunpack.c.h.b16 %v3205
        %v3361 = vunpack.c.l.b16 %v3206
        %v3362 = vunpack.c.h.b16 %v3206
        %v3363 = vunpack.c.l.b16 %v3207
        %v3364 = vunpack.c.h.b16 %v3207
        %v3365 = vunpack.c.l.b16 %v3208
        %v3366 = vunpack.c.h.b16 %v3208
        %v3367 = vunpack.c.l.b16 %v3209
        %v3368 = vunpack.c.h.b16 %v3209
        %v3369 = vunpack.c.l.b16 %v3210
        %v3370 = vunpack.c.h.b16 %v3210
        %v3371 = vunpack.c.l.b16 %v3211
        %v3372 = vunpack.c.h.b16 %v3211
        %v3373 = vunpack.c.l.b16 %v3212
        %v3374 = vunpack.c.h.b16 %v3212
        %v3375 = vunpack.c.l.b16 %v3213
        %v3376 = vunpack.c.h.b16 %v3213
        %v3377 = vunpack.c.l.b16 %v3214
        %v3378 = vunpack.c.h.b16 %v3214
        %v3379 = vunpack.c.l.b16 %v3215
        %v3380 = vunpack.c.h.b16 %v3215
        %v3381 = vunpack.c.l.b16 %v3216
        %v3382 = vunpack.c.h.b16 %v3216
        %v3383 = vunpack.c.l.b16 %v3217
        %v3384 = vunpack.c.h.b16 %v3217
        %v3385 = vunpack.c.l.b16 %v3218
        %v3386 = vunpack.c.h.b16 %v3218
        %v3387 = vunpack.c.l.b16 %v3219
        %v3388 = vunpack.c.h.b16 %v3219
        %v3389 = vunpack.c.l.b16 %v3220
        %v3390 = vunpack.c.h.b16 %v3220
        %v3391 = vunpack.c.l.b16 %v3221
        %v3392 = vunpack.c.h.b16 %v3221
        %v3393 = vunpack.c.l.b16 %v3222
        %v3394 = vunpack.c.h.b16 %v3222
        %v3395 = vunpack.c.l.b16 %v3223
        %v3396 = vunpack.c.h.b16 %v3223
        %v3397 = vunpack.c.l.b16 %v3224
        %v3398 = vunpack.c.h.b16 %v3224
        %v3399 = vunpack.c.l.b16 %v3225
        %v3400 = vunpack.c.h.b16 %v3225
        %v3401 = vunpack.c.l.b16 %v3226
        %v3402 = vunpack.c.h.b16 %v3226
        %v3403 = vunpack.c.l.b16 %v3227
        %v3404 = vunpack.c.h.b16 %v3227
        %v3405 = vunpack.c.l.b16 %v3228
        %v3406 = vunpack.c.h.b16 %v3228
        %v3407 = vunpack.c.l.b16 %v3229
        %v3408 = vunpack.c.h.b16 %v3229
        %v3409 = vunpack.c.l.b16 %v3230
        %v3410 = vunpack.c.h.b16 %v3230
        %v3411 = vunpack.c.l.b16 %v3231
        %v3412 = vunpack.c.h.b16 %v3231
        %v3413 = vunpack.c.l.b16 %v3232
        %v3414 = vunpack.c.h.b16 %v3232
        %v3415 = vunpack.c.l.b16 %v3233
        %v3416 = vunpack.c.h.b16 %v3233
        %v3417 = vunpack.c.l.b16 %v3234
        %v3418 = vunpack.c.h.b16 %v3234
        %v3419 = vunpack.c.l.b16 %v3235
        %v3420 = vunpack.c.h.b16 %v3235
        %v3421 = vunpack.c.l.b16 %v3236
        %v3422 = vunpack.c.h.b16 %v3236
        %v3423 = vunpack.c.l.b16 %v3237
        %v3424 = vunpack.c.h.b16 %v3237
        %v3425 = vunpack.c.l.b16 %v3238
        %v3426 = vunpack.c.h.b16 %v3238
        %v3427 = vunpack.c.l.b16 %v3239
        %v3428 = vunpack.c.h.b16 %v3239
        %v3429 = vunpack.c.l.b16 %v3240
        %v3430 = vunpack.c.h.b16 %v3240
        %v3431 = vunpack.c.l.b16 %v3241
        %v3432 = vunpack.c.h.b16 %v3241
        %v3433 = vunpack.c.l.b16 %v3242
        %v3434 = vunpack.c.h.b16 %v3242
        %v3435 = vunpack.c.l.b16 %v3243
        %v3436 = vunpack.c.h.b16 %v3243
        %v3437 = vunpack.c.l.b16 %v3244
        %v3438 = vunpack.c.h.b16 %v3244
        %v3439 = vunpack.c.l.b16 %v3245
        %v3440 = vunpack.c.h.b16 %v3245
        %v3441 = vunpack.c.l.b16 %v3246
        %v3442 = vunpack.c.h.b16 %v3246
        %v3443 = vunpack.c.l.b16 %v3247
        %v3444 = vunpack.c.h.b16 %v3247
        %v3445 = vunpack.c.l.b16 %v3248
        %v3446 = vunpack.c.h.b16 %v3248
        %v3447 = vunpack.c.l.b16 %v3249
        %v3448 = vunpack.c.h.b16 %v3249
        %v3449 = vunpack.c.l.b16 %v3250
        %v3450 = vunpack.c.h.b16 %v3250
        %v3451 = vunpack.c.l.b16 %v3251
        %v3452 = vunpack.c.h.b16 %v3251
        %v3453 = vunpack.c.l.b16 %v3252
        %v3454 = vunpack.c.h.b16 %v3252
        %v3455 = vunpack.c.l.b16 %v3253
        %v3456 = vunpack.c.h.b16 %v3253
        %v3457 = vunpack.c.l.b16 %v3254
        %v3458 = vunpack.c.h.b16 %v3254
        %v3459 = vpack.c.b16 %v3333, %v3331
        %v3460 = vpack.c.b16 %v3334, %v3332
        %v3461 = vpack.c.b16 %v3337, %v3335
        %v3462 = vpack.c.b16 %v3338, %v3336
        %v3463 = vpack.c.b16 %v3341, %v3339
        %v3464 = vpack.c.b16 %v3342, %v3340
        %v3465 = vpack.c.b16 %v3345, %v3343
        %v3466 = vpack.c.b16 %v3346, %v3344
        %v3467 = vpack.c.b16 %v3349, %v3347
        %v3468 = vpack.c.b16 %v3350, %v3348
        %v3469 = vpack.c.b16 %v3353, %v3351
        %v3470 = vpack.c.b16 %v3354, %v3352
        %v3471 = vpack.c.b16 %v3357, %v3355
        %v3472 = vpack.c.b16 %v3358, %v3356
        %v3473 = vpack.c.b16 %v3361, %v3359
        %v3474 = vpack.c.b16 %v3362, %v3360
        %v3475 = vpack.c.b16 %v3365, %v3363
        %v3476 = vpack.c.b16 %v3366, %v3364
        %v3477 = vpack.c.b16 %v3369, %v3367
        %v3478 = vpack.c.b16 %v3370, %v3368
        %v3479 = vpack.c.b16 %v3373, %v3371
        %v3480 = vpack.c.b16 %v3374, %v3372
        %v3481 = vpack.c.b16 %v3377, %v3375
        %v3482 = vpack.c.b16 %v3378, %v3376
        %v3483 = vpack.c.b16 %v3381, %v3379
        %v3484 = vpack.c.b16 %v3382, %v3380
        %v3485 = vpack.c.b16 %v3385, %v3383
        %v3486 = vpack.c.b16 %v3386, %v3384
        %v3487 = vpack.c.b16 %v3389, %v3387
        %v3488 = vpack.c.b16 %v3390, %v3388
        %v3489 = vpack.c.b16 %v3393, %v3391
        %v3490 = vpack.c.b16 %v3394, %v3392
        %v3491 = vpack.c.b16 %v3397, %v3395
        %v3492 = vpack.c.b16 %v3398, %v3396
        %v3493 = vpack.c.b16 %v3401, %v3399
        %v3494 = vpack.c.b16 %v3402, %v3400
        %v3495 = vpack.c.b16 %v3405, %v3403
        %v3496 = vpack.c.b16 %v3406, %v3404
        %v3497 = vpack.c.b16 %v3409, %v3407
        %v3498 = vpack.c.b16 %v3410, %v3408
        %v3499 = vpack.c.b16 %v3413, %v3411
        %v3500 = vpack.c.b16 %v3414, %v3412
        %v3501 = vpack.c.b16 %v3417, %v3415
        %v3502 = vpack.c.b16 %v3418, %v3416
        %v3503 = vpack.c.b16 %v3421, %v3419
        %v3504 = vpack.c.b16 %v3422, %v3420
        %v3505 = vpack.c.b16 %v3425, %v3423
        %v3506 = vpack.c.b16 %v3426, %v3424
        %v3507 = vpack.c.b16 %v3429, %v3427
        %v3508 = vpack.c.b16 %v3430, %v3428
        %v3509 = vpack.c.b16 %v3433, %v3431
        %v3510 = vpack.c.b16 %v3434, %v3432
        %v3511 = vpack.c.b16 %v3437, %v3435
        %v3512 = vpack.c.b16 %v3438, %v3436
        %v3513 = vpack.c.b16 %v3441, %v3439
        %v3514 = vpack.c.b16 %v3442, %v3440
        %v3515 = vpack.c.b16 %v3445, %v3443
        %v3516 = vpack.c.b16 %v3446, %v3444
        %v3517 = vpack.c.b16 %v3449, %v3447
        %v3518 = vpack.c.b16 %v3450, %v3448
        %v3519 = vpack.c.b16 %v3453, %v3451
        %v3520 = vpack.c.b16 %v3454, %v3452
        %v3521 = vpack.c.b16 %v3457, %v3455
        %v3522 = vpack.c.b16 %v3458, %v3456
        %3587 = vmatprep.subr.bf16.mxu0 %v3460
        %3588 = vmatpush1.bf16.msra.mxu0 %v3459
        %3589 = vmatprep.subr.bf16.mxu0 %v3462
        %3590 = vmatpush1.bf16.msra.mxu0 %v3461
        %3591 = vmatprep.subr.bf16.mxu0 %v3464
        %3592 = vmatpush1.bf16.msra.mxu0 %v3463
        %3593 = vmatprep.subr.bf16.mxu0 %v3466
        %3594 = vmatpush1.bf16.msra.mxu0 %v3465
        %3595 = vmatprep.subr.bf16.mxu0 %v3468
        %3596 = vmatpush1.bf16.msra.mxu0 %v3467
        %3597 = vmatprep.subr.bf16.mxu0 %v3470
        %3598 = vmatpush1.bf16.msra.mxu0 %v3469
        %3599 = vmatprep.subr.bf16.mxu0 %v3472
        %3600 = vmatpush1.bf16.msra.mxu0 %v3471
        %3601 = vmatprep.subr.bf16.mxu0 %v3474
        %3602 = vmatpush1.bf16.msra.mxu0 %v3473
        %3603 = vmatprep.subr.bf16.mxu0 %v3476
        %3604 = vmatpush1.bf16.msra.mxu0 %v3475
        %3605 = vmatprep.subr.bf16.mxu0 %v3478
        %3606 = vmatpush1.bf16.msra.mxu0 %v3477
        %3607 = vmatprep.subr.bf16.mxu0 %v3480
        %3608 = vmatpush1.bf16.msra.mxu0 %v3479
        %3609 = vmatprep.subr.bf16.mxu0 %v3482
        %3610 = vmatpush1.bf16.msra.mxu0 %v3481
        %3611 = vmatprep.subr.bf16.mxu0 %v3484
        %3612 = vmatpush1.bf16.msra.mxu0 %v3483
        %3613 = vmatprep.subr.bf16.mxu0 %v3486
        %3614 = vmatpush1.bf16.msra.mxu0 %v3485
        %3615 = vmatprep.subr.bf16.mxu0 %v3488
        %3616 = vmatpush1.bf16.msra.mxu0 %v3487
        %3617 = vmatprep.subr.bf16.mxu0 %v3490
        %3618 = vmatpush1.bf16.msra.mxu0 %v3489
        %3619 = vmatprep.mubr.bf16.mxu0 %v3160
        %3620 = vmatmul.mubr.bf16.gmra.mrb[0].mxu0 %v3159
        %v3621 = vpop.f32.mrb[0].mxu0
        %v3622 = vadd.f32 %v3260, %v3621
        %v3623 = vpop.f32.mrb[0].mxu0
        %v3624 = vadd.f32 %v3264, %v3623
        %v3625 = vpop.f32.mrb[0].mxu0
        %v3626 = vadd.f32 %v3260, %v3625
        %v3627 = vpop.f32.mrb[0].mxu0
        %v3628 = vadd.f32 %v3264, %v3627
        %3629 = vmatprep.mubr.bf16.mxu0 %v3164
        %3630 = vmatmul.mubr.bf16.gmra.mrb[0].mxu0 %v3163
        %v3631 = vpop.f32.mrb[0].mxu0
        %v3632 = vadd.f32 %v3260, %v3631
        %v3633 = vpop.f32.mrb[0].mxu0
        %v3634 = vadd.f32 %v3264, %v3633
        %v3635 = vpop.f32.mrb[0].mxu0
        %v3636 = vadd.f32 %v3260, %v3635
        %v3637 = vpop.f32.mrb[0].mxu0
        %v3638 = vadd.f32 %v3264, %v3637
        %3639 = vmatprep.mubr.bf16.mxu0 %v3168
        %3640 = vmatmul.mubr.bf16.gmra.mrb[0].mxu0 %v3167
        %v3641 = vpop.f32.mrb[0].mxu0
        %v3642 = vadd.f32 %v3260, %v3641
        %v3643 = vpop.f32.mrb[0].mxu0
        %v3644 = vadd.f32 %v3264, %v3643
        %v3645 = vpop.f32.mrb[0].mxu0
        %v3646 = vadd.f32 %v3260, %v3645
        %v3647 = vpop.f32.mrb[0].mxu0
        %v3648 = vadd.f32 %v3264, %v3647
        %3649 = vmatprep.mubr.bf16.mxu0 %v3172
        %3650 = vmatmul.mubr.bf16.gmra.mrb[0].mxu0 %v3171
        %v3651 = vpop.f32.mrb[0].mxu0
        %v3652 = vadd.f32 %v3260, %v3651
        %v3653 = vpop.f32.mrb[0].mxu0
        %v3654 = vadd.f32 %v3264, %v3653
        %v3655 = vpop.f32.mrb[0].mxu0
        %v3656 = vadd.f32 %v3260, %v3655
        %v3657 = vpop.f32.mrb[0].mxu0
        %v3658 = vadd.f32 %v3264, %v3657
        %3659 = vmatprep.mubr.bf16.mxu0 %v3176
        %3660 = vmatmul.mubr.bf16.gmra.mrb[0].mxu0 %v3175
        %v3661 = vpop.f32.mrb[0].mxu0
        %v3662 = vadd.f32 %v3260, %v3661
        %v3663 = vpop.f32.mrb[0].mxu0
        %v3664 = vadd.f32 %v3264, %v3663
        %v3665 = vpop.f32.mrb[0].mxu0
        %v3666 = vadd.f32 %v3260, %v3665
        %v3667 = vpop.f32.mrb[0].mxu0
        %v3668 = vadd.f32 %v3264, %v3667
        %3669 = vmatprep.mubr.bf16.mxu0 %v3180
        %3670 = vmatmul.mubr.bf16.gmra.mrb[0].mxu0 %v3179
        %v3671 = vpop.f32.mrb[0].mxu0
        %v3672 = vadd.f32 %v3260, %v3671
        %v3673 = vpop.f32.mrb[0].mxu0
        %v3674 = vadd.f32 %v3264, %v3673
        %v3675 = vpop.f32.mrb[0].mxu0
        %v3676 = vadd.f32 %v3260, %v3675
        %v3677 = vpop.f32.mrb[0].mxu0
        %v3678 = vadd.f32 %v3264, %v3677
        %3679 = vmatprep.mubr.bf16.mxu0 %v3184
        %3680 = vmatmul.mubr.bf16.gmra.mrb[0].mxu0 %v3183
        %v3681 = vpop.f32.mrb[0].mxu0
        %v3682 = vadd.f32 %v3260, %v3681
        %v3683 = vpop.f32.mrb[0].mxu0
        %v3684 = vadd.f32 %v3264, %v3683
        %v3685 = vpop.f32.mrb[0].mxu0
        %v3686 = vadd.f32 %v3260, %v3685
        %v3687 = vpop.f32.mrb[0].mxu0
        %v3688 = vadd.f32 %v3264, %v3687
        %3689 = vmatprep.mubr.bf16.mxu0 %v3188
        %3690 = vmatmul.mubr.bf16.gmra.mrb[0].mxu0 %v3187
        %v3691 = vpop.f32.mrb[0].mxu0
        %v3692 = vadd.f32 %v3260, %v3691
        %v3693 = vpop.f32.mrb[0].mxu0
        %v3694 = vadd.f32 %v3264, %v3693
        %v3695 = vpop.f32.mrb[0].mxu0
        %v3696 = vadd.f32 %v3260, %v3695
        %v3697 = vpop.f32.mrb[0].mxu0
        %v3698 = vadd.f32 %v3264, %v3697
        %3699 = vdwg.mxu0
        %3700 = vmatprep.subr.bf16.mxu0 %v3492
        %3701 = vmatpush1.bf16.msra.mxu0 %v3491
        %3702 = vmatprep.subr.bf16.mxu0 %v3494
        %3703 = vmatpush1.bf16.msra.mxu0 %v3493
        %3704 = vmatprep.subr.bf16.mxu0 %v3496
        %3705 = vmatpush1.bf16.msra.mxu0 %v3495
        %3706 = vmatprep.subr.bf16.mxu0 %v3498
        %3707 = vmatpush1.bf16.msra.mxu0 %v3497
        %3708 = vmatprep.subr.bf16.mxu0 %v3500
        %3709 = vmatpush1.bf16.msra.mxu0 %v3499
        %3710 = vmatprep.subr.bf16.mxu0 %v3502
        %3711 = vmatpush1.bf16.msra.mxu0 %v3501
        %3712 = vmatprep.subr.bf16.mxu0 %v3504
        %3713 = vmatpush1.bf16.msra.mxu0 %v3503
        %3714 = vmatprep.subr.bf16.mxu0 %v3506
        %3715 = vmatpush1.bf16.msra.mxu0 %v3505
        %3716 = vmatprep.subr.bf16.mxu0 %v3508
        %3717 = vmatpush1.bf16.msra.mxu0 %v3507
        %3718 = vmatprep.subr.bf16.mxu0 %v3510
        %3719 = vmatpush1.bf16.msra.mxu0 %v3509
        %3720 = vmatprep.subr.bf16.mxu0 %v3512
        %3721 = vmatpush1.bf16.msra.mxu0 %v3511
        %3722 = vmatprep.subr.bf16.mxu0 %v3514
        %3723 = vmatpush1.bf16.msra.mxu0 %v3513
        %3724 = vmatprep.subr.bf16.mxu0 %v3516
        %3725 = vmatpush1.bf16.msra.mxu0 %v3515
        %3726 = vmatprep.subr.bf16.mxu0 %v3518
        %3727 = vmatpush1.bf16.msra.mxu0 %v3517
        %3728 = vmatprep.subr.bf16.mxu0 %v3520
        %3729 = vmatpush1.bf16.msra.mxu0 %v3519
        %3730 = vmatprep.subr.bf16.mxu0 %v3522
        %3731 = vmatpush1.bf16.msra.mxu0 %v3521
        %3732 = vmatprep.mubr.bf16.mxu0 %v3162
        %3733 = vmatmul.mubr.bf16.gmra.mrb[0].mxu0 %v3161
        %v3734 = vpop.f32.mrb[0].mxu0
        %v3735 = vadd.f32 %v3622, %v3734
        %v3736 = vpop.f32.mrb[0].mxu0
        %v3737 = vadd.f32 %v3624, %v3736
        %v3738 = vpop.f32.mrb[0].mxu0
        %v3739 = vadd.f32 %v3626, %v3738
        %v3740 = vpop.f32.mrb[0].mxu0
        %v3741 = vadd.f32 %v3628, %v3740
        %3742 = vmatprep.mubr.bf16.mxu0 %v3166
        %3743 = vmatmul.mubr.bf16.gmra.mrb[0].mxu0 %v3165
        %v3744 = vpop.f32.mrb[0].mxu0
        %v3745 = vadd.f32 %v3632, %v3744
        %v3746 = vpop.f32.mrb[0].mxu0
        %v3747 = vadd.f32 %v3634, %v3746
        %v3748 = vpop.f32.mrb[0].mxu0
        %v3749 = vadd.f32 %v3636, %v3748
        %v3750 = vpop.f32.mrb[0].mxu0
        %v3751 = vadd.f32 %v3638, %v3750
        %3752 = vmatprep.mubr.bf16.mxu0 %v3170
        %3753 = vmatmul.mubr.bf16.gmra.mrb[0].mxu0 %v3169
        %v3754 = vpop.f32.mrb[0].mxu0
        %v3755 = vadd.f32 %v3642, %v3754
        %v3756 = vpop.f32.mrb[0].mxu0
        %v3757 = vadd.f32 %v3644, %v3756
        %v3758 = vpop.f32.mrb[0].mxu0
        %v3759 = vadd.f32 %v3646, %v3758
        %v3760 = vpop.f32.mrb[0].mxu0
        %v3761 = vadd.f32 %v3648, %v3760
        %3762 = vmatprep.mubr.bf16.mxu0 %v3174
        %3763 = vmatmul.mubr.bf16.gmra.mrb[0].mxu0 %v3173
        %v3764 = vpop.f32.mrb[0].mxu0
        %v3765 = vadd.f32 %v3652, %v3764
        %v3766 = vpop.f32.mrb[0].mxu0
        %v3767 = vadd.f32 %v3654, %v3766
        %v3768 = vpop.f32.mrb[0].mxu0
        %v3769 = vadd.f32 %v3656, %v3768
        %v3770 = vpop.f32.mrb[0].mxu0
        %v3771 = vadd.f32 %v3658, %v3770
        %3772 = vmatprep.mubr.bf16.mxu0 %v3178
        %3773 = vmatmul.mubr.bf16.gmra.mrb[0].mxu0 %v3177
        %v3774 = vpop.f32.mrb[0].mxu0
        %v3775 = vadd.f32 %v3662, %v3774
        %v3776 = vpop.f32.mrb[0].mxu0
        %v3777 = vadd.f32 %v3664, %v3776
        %v3778 = vpop.f32.mrb[0].mxu0
        %v3779 = vadd.f32 %v3666, %v3778
        %v3780 = vpop.f32.mrb[0].mxu0
        %v3781 = vadd.f32 %v3668, %v3780
        %3782 = vmatprep.mubr.bf16.mxu0 %v3182
        %3783 = vmatmul.mubr.bf16.gmra.mrb[0].mxu0 %v3181
        %v3784 = vpop.f32.mrb[0].mxu0
        %v3785 = vadd.f32 %v3672, %v3784
        %v3786 = vpop.f32.mrb[0].mxu0
        %v3787 = vadd.f32 %v3674, %v3786
        %v3788 = vpop.f32.mrb[0].mxu0
        %v3789 = vadd.f32 %v3676, %v3788
        %v3790 = vpop.f32.mrb[0].mxu0
        %v3791 = vadd.f32 %v3678, %v3790
        %3792 = vmatprep.mubr.bf16.mxu0 %v3186
        %3793 = vmatmul.mubr.bf16.gmra.mrb[0].mxu0 %v3185
        %v3794 = vpop.f32.mrb[0].mxu0
        %v3795 = vadd.f32 %v3682, %v3794
        %v3796 = vpop.f32.mrb[0].mxu0
        %v3797 = vadd.f32 %v3684, %v3796
        %v3798 = vpop.f32.mrb[0].mxu0
        %v3799 = vadd.f32 %v3686, %v3798
        %v3800 = vpop.f32.mrb[0].mxu0
        %v3801 = vadd.f32 %v3688, %v3800
        %3802 = vmatprep.mubr.bf16.mxu0 %v3190
        %3803 = vmatmul.mubr.bf16.gmra.mrb[0].mxu0 %v3189
        %v3804 = vpop.f32.mrb[0].mxu0
        %v3805 = vadd.f32 %v3692, %v3804
        %v3806 = vpop.f32.mrb[0].mxu0
        %v3807 = vadd.f32 %v3694, %v3806
        %v3808 = vpop.f32.mrb[0].mxu0
        %v3809 = vadd.f32 %v3696, %v3808
        %v3810 = vpop.f32.mrb[0].mxu0
        %v3811 = vadd.f32 %v3698, %v3810
        %3812 = vdwg.mxu0
        %vm3813 = vcmp.ge.f32.partialorder %v3735, 0.0
        %vm3814 = vcmp.ge.f32.partialorder %v3737, 0.0
        %vm3815 = vcmp.ge.f32.partialorder %v3739, 0.0
        %vm3816 = vcmp.ge.f32.partialorder %v3741, 0.0
        %vm3817 = vcmp.ge.f32.partialorder %v3745, 0.0
        %vm3818 = vcmp.ge.f32.partialorder %v3747, 0.0
        %vm3819 = vcmp.ge.f32.partialorder %v3749, 0.0
        %vm3820 = vcmp.ge.f32.partialorder %v3751, 0.0
        %vm3821 = vcmp.ge.f32.partialorder %v3755, 0.0
        %vm3822 = vcmp.ge.f32.partialorder %v3757, 0.0
        %vm3823 = vcmp.ge.f32.partialorder %v3759, 0.0
        %vm3824 = vcmp.ge.f32.partialorder %v3761, 0.0
        %vm3825 = vcmp.ge.f32.partialorder %v3765, 0.0
        %vm3826 = vcmp.ge.f32.partialorder %v3767, 0.0
        %vm3827 = vcmp.ge.f32.partialorder %v3769, 0.0
        %vm3828 = vcmp.ge.f32.partialorder %v3771, 0.0
        %vm3829 = vcmp.ge.f32.partialorder %v3775, 0.0
        %vm3830 = vcmp.ge.f32.partialorder %v3777, 0.0
        %vm3831 = vcmp.ge.f32.partialorder %v3779, 0.0
        %vm3832 = vcmp.ge.f32.partialorder %v3781, 0.0
        %vm3833 = vcmp.ge.f32.partialorder %v3785, 0.0
        %vm3834 = vcmp.ge.f32.partialorder %v3787, 0.0
        %vm3835 = vcmp.ge.f32.partialorder %v3789, 0.0
        %vm3836 = vcmp.ge.f32.partialorder %v3791, 0.0
        %vm3837 = vcmp.ge.f32.partialorder %v3795, 0.0
        %vm3838 = vcmp.ge.f32.partialorder %v3797, 0.0
        %vm3839 = vcmp.ge.f32.partialorder %v3799, 0.0
        %vm3840 = vcmp.ge.f32.partialorder %v3801, 0.0
        %vm3841 = vcmp.ge.f32.partialorder %v3805, 0.0
        %vm3842 = vcmp.ge.f32.partialorder %v3807, 0.0
        %vm3843 = vcmp.ge.f32.partialorder %v3809, 0.0
        %vm3844 = vcmp.ge.f32.partialorder %v3811, 0.0
        %v3845 = vmul.f32 %v3735, 0.2
        %v3846 = vmul.f32 %v3737, 0.2
        %v3847 = vmul.f32 %v3739, 0.2
        %v3848 = vmul.f32 %v3741, 0.2
        %v3849 = vmul.f32 %v3745, 0.2
        %v3850 = vmul.f32 %v3747, 0.2
        %v3851 = vmul.f32 %v3749, 0.2
        %v3852 = vmul.f32 %v3751, 0.2
        %v3853 = vmul.f32 %v3755, 0.2
        %v3854 = vmul.f32 %v3757, 0.2
        %v3855 = vmul.f32 %v3759, 0.2
        %v3856 = vmul.f32 %v3761, 0.2
        %v3857 = vmul.f32 %v3765, 0.2
        %v3858 = vmul.f32 %v3767, 0.2
        %v3859 = vmul.f32 %v3769, 0.2
        %v3860 = vmul.f32 %v3771, 0.2
        %v3861 = vmul.f32 %v3775, 0.2
        %v3862 = vmul.f32 %v3777, 0.2
        %v3863 = vmul.f32 %v3779, 0.2
        %v3864 = vmul.f32 %v3781, 0.2
        %v3865 = vmul.f32 %v3785, 0.2
        %v3866 = vmul.f32 %v3787, 0.2
        %v3867 = vmul.f32 %v3789, 0.2
        %v3868 = vmul.f32 %v3791, 0.2
        %v3869 = vmul.f32 %v3795, 0.2
        %v3870 = vmul.f32 %v3797, 0.2
        %v3871 = vmul.f32 %v3799, 0.2
        %v3872 = vmul.f32 %v3801, 0.2
        %v3873 = vmul.f32 %v3805, 0.2
        %v3874 = vmul.f32 %v3807, 0.2
        %v3875 = vmul.f32 %v3809, 0.2
        %v3876 = vmul.f32 %v3811, 0.2
        %v3877 = vsel %vm3813, %v3735, %v3845
        %v3878 = vsel %vm3814, %v3737, %v3846
        %v3879 = vsel %vm3815, %v3739, %v3847
        %v3880 = vsel %vm3816, %v3741, %v3848
        %v3881 = vsel %vm3817, %v3745, %v3849
        %v3882 = vsel %vm3818, %v3747, %v3850
        %v3883 = vsel %vm3819, %v3749, %v3851
        %v3884 = vsel %vm3820, %v3751, %v3852
        %v3885 = vsel %vm3821, %v3755, %v3853
        %v3886 = vsel %vm3822, %v3757, %v3854
        %v3887 = vsel %vm3823, %v3759, %v3855
        %v3888 = vsel %vm3824, %v3761, %v3856
        %v3889 = vsel %vm3825, %v3765, %v3857
        %v3890 = vsel %vm3826, %v3767, %v3858
        %v3891 = vsel %vm3827, %v3769, %v3859
        %v3892 = vsel %vm3828, %v3771, %v3860
        %v3893 = vsel %vm3829, %v3775, %v3861
        %v3894 = vsel %vm3830, %v3777, %v3862
        %v3895 = vsel %vm3831, %v3779, %v3863
        %v3896 = vsel %vm3832, %v3781, %v3864
        %v3897 = vsel %vm3833, %v3785, %v3865
        %v3898 = vsel %vm3834, %v3787, %v3866
        %v3899 = vsel %vm3835, %v3789, %v3867
        %v3900 = vsel %vm3836, %v3791, %v3868
        %v3901 = vsel %vm3837, %v3795, %v3869
        %v3902 = vsel %vm3838, %v3797, %v3870
        %v3903 = vsel %vm3839, %v3799, %v3871
        %v3904 = vsel %vm3840, %v3801, %v3872
        %v3905 = vsel %vm3841, %v3805, %v3873
        %v3906 = vsel %vm3842, %v3807, %v3874
        %v3907 = vsel %vm3843, %v3809, %v3875
        %v3908 = vsel %vm3844, %v3811, %v3876
        %v3909 = vpack.c.bf16 %v3879, %v3877
        %v3910 = vpack.c.bf16 %v3880, %v3878
        %v3911 = vpack.c.bf16 %v3883, %v3881
        %v3912 = vpack.c.bf16 %v3884, %v3882
        %v3913 = vpack.c.bf16 %v3887, %v3885
        %v3914 = vpack.c.bf16 %v3888, %v3886
        %v3915 = vpack.c.bf16 %v3891, %v3889
        %v3916 = vpack.c.bf16 %v3892, %v3890
        %v3917 = vpack.c.bf16 %v3895, %v3893
        %v3918 = vpack.c.bf16 %v3896, %v3894
        %v3919 = vpack.c.bf16 %v3899, %v3897
        %v3920 = vpack.c.bf16 %v3900, %v3898
        %v3921 = vpack.c.bf16 %v3903, %v3901
        %v3922 = vpack.c.bf16 %v3904, %v3902
        %v3923 = vpack.c.bf16 %v3907, %v3905
        %v3924 = vpack.c.bf16 %v3908, %v3906
        %v3925 = vld [vmem:[#allocation8] sm:$0xf]
        %v3926 = vld [vmem:[#allocation8 + $0x4] sm:$0xf]
        %v3927 = vld [vmem:[#allocation8 + $0x8] sm:$0xf]
        %v3928 = vld [vmem:[#allocation8 + $0xc] sm:$0xf]
        %v3929 = vld [vmem:[#allocation8 + $0x10] sm:$0xf]
        %v3930 = vld [vmem:[#allocation8 + $0x14] sm:$0xf]
        %v3931 = vld [vmem:[#allocation8 + $0x18] sm:$0xf]
        %v3932 = vld [vmem:[#allocation8 + $0x1c] sm:$0xf]
        %v3933 = vld [vmem:[#allocation8 + $0x20] sm:$0xf]
        %v3934 = vld [vmem:[#allocation8 + $0x24] sm:$0xf]
        %v3935 = vld [vmem:[#allocation8 + $0x28] sm:$0xf]
        %v3936 = vld [vmem:[#allocation8 + $0x2c] sm:$0xf]
        %v3937 = vld [vmem:[#allocation8 + $0x30] sm:$0xf]
        %v3938 = vld [vmem:[#allocation8 + $0x34] sm:$0xf]
        %v3939 = vld [vmem:[#allocation8 + $0x38] sm:$0xf]
        %v3940 = vld [vmem:[#allocation8 + $0x3c] sm:$0xf]
        %v3941 = vld [vmem:[#allocation8 + $0x40] sm:$0xf]
        %v3942 = vld [vmem:[#allocation8 + $0x44] sm:$0xf]
        %v3943 = vld [vmem:[#allocation8 + $0x48] sm:$0xf]
        %v3944 = vld [vmem:[#allocation8 + $0x4c] sm:$0xf]
        %v3945 = vld [vmem:[#allocation8 + $0x50] sm:$0xf]
        %v3946 = vld [vmem:[#allocation8 + $0x54] sm:$0xf]
        %v3947 = vld [vmem:[#allocation8 + $0x58] sm:$0xf]
        %v3948 = vld [vmem:[#allocation8 + $0x5c] sm:$0xf]
        %v3949 = vld [vmem:[#allocation8 + $0x60] sm:$0xf]
        %v3950 = vld [vmem:[#allocation8 + $0x64] sm:$0xf]
        %v3951 = vld [vmem:[#allocation8 + $0x68] sm:$0xf]
        %v3952 = vld [vmem:[#allocation8 + $0x6c] sm:$0xf]
        %v3953 = vld [vmem:[#allocation8 + $0x70] sm:$0xf]
        %v3954 = vld [vmem:[#allocation8 + $0x74] sm:$0xf]
        %v3955 = vld [vmem:[#allocation8 + $0x78] sm:$0xf]
        %v3956 = vld [vmem:[#allocation8 + $0x7c] sm:$0xf]
        %v3957 = vld [vmem:[%s6] sm:$0x1]
        %v3959 = vlaneseq
        %v3960 = vshrl.u32 %v3959, 7
        %v3961 = vsub.s32 0, %v3960
        %v3962 = vrot.slane %v3957, %v3961
        %v3996 = vunpack.c.l.b16 %v3925
        %v3997 = vunpack.c.l.b16 %v3926
        %v3998 = vunpack.c.l.b16 %v3927
        %v3999 = vunpack.c.l.b16 %v3928
        %v4000 = vunpack.c.l.b16 %v3929
        %v4001 = vunpack.c.l.b16 %v3930
        %v4002 = vunpack.c.l.b16 %v3931
        %v4003 = vunpack.c.l.b16 %v3932
        %v4004 = vunpack.c.l.b16 %v3933
        %v4005 = vunpack.c.l.b16 %v3934
        %v4006 = vunpack.c.l.b16 %v3935
        %v4007 = vunpack.c.l.b16 %v3936
        %v4008 = vunpack.c.l.b16 %v3937
        %v4009 = vunpack.c.l.b16 %v3938
        %v4010 = vunpack.c.l.b16 %v3939
        %v4011 = vunpack.c.l.b16 %v3940
        %v4012 = vunpack.c.l.b16 %v3941
        %v4013 = vunpack.c.l.b16 %v3942
        %v4014 = vunpack.c.l.b16 %v3943
        %v4015 = vunpack.c.l.b16 %v3944
        %v4016 = vunpack.c.l.b16 %v3945
        %v4017 = vunpack.c.l.b16 %v3946
        %v4018 = vunpack.c.l.b16 %v3947
        %v4019 = vunpack.c.l.b16 %v3948
        %v4020 = vunpack.c.l.b16 %v3949
        %v4021 = vunpack.c.l.b16 %v3950
        %v4022 = vunpack.c.l.b16 %v3951
        %v4023 = vunpack.c.l.b16 %v3952
        %v4024 = vunpack.c.l.b16 %v3953
        %v4025 = vunpack.c.l.b16 %v3954
        %v4026 = vunpack.c.l.b16 %v3955
        %v4027 = vunpack.c.l.b16 %v3956
        %v4028 = vpack.c.b16 %v3997, %v3996
        %v4029 = vpack.c.b16 %v3999, %v3998
        %v4030 = vpack.c.b16 %v4001, %v4000
        %v4031 = vpack.c.b16 %v4003, %v4002
        %v4032 = vpack.c.b16 %v4005, %v4004
        %v4033 = vpack.c.b16 %v4007, %v4006
        %v4034 = vpack.c.b16 %v4009, %v4008
        %v4035 = vpack.c.b16 %v4011, %v4010
        %v4036 = vpack.c.b16 %v4013, %v4012
        %v4037 = vpack.c.b16 %v4015, %v4014
        %v4038 = vpack.c.b16 %v4017, %v4016
        %v4039 = vpack.c.b16 %v4019, %v4018
        %v4040 = vpack.c.b16 %v4021, %v4020
        %v4041 = vpack.c.b16 %v4023, %v4022
        %v4042 = vpack.c.b16 %v4025, %v4024
        %v4043 = vpack.c.b16 %v4027, %v4026
        %4060 = vmatprep.subr.bf16.mxu0 0
        %4061 = vmatpush1.bf16.msra.mxu0 %v4028
        %4062 = vmatprep.subr.bf16.mxu0 0
        %4063 = vmatpush1.bf16.msra.mxu0 %v4029
        %4064 = vmatprep.subr.bf16.mxu0 0
        %4065 = vmatpush1.bf16.msra.mxu0 %v4030
        %4066 = vmatprep.subr.bf16.mxu0 0
        %4067 = vmatpush1.bf16.msra.mxu0 %v4031
        %4068 = vmatprep.subr.bf16.mxu0 0
        %4069 = vmatpush1.bf16.msra.mxu0 %v4032
        %4070 = vmatprep.subr.bf16.mxu0 0
        %4071 = vmatpush1.bf16.msra.mxu0 %v4033
        %4072 = vmatprep.subr.bf16.mxu0 0
        %4073 = vmatpush1.bf16.msra.mxu0 %v4034
        %4074 = vmatprep.subr.bf16.mxu0 0
        %4075 = vmatpush1.bf16.msra.mxu0 %v4035
        %4076 = vmatprep.subr.bf16.mxu0 0
        %4077 = vmatpush1.bf16.msra.mxu0 %v4036
        %4078 = vmatprep.subr.bf16.mxu0 0
        %4079 = vmatpush1.bf16.msra.mxu0 %v4037
        %4080 = vmatprep.subr.bf16.mxu0 0
        %4081 = vmatpush1.bf16.msra.mxu0 %v4038
        %4082 = vmatprep.subr.bf16.mxu0 0
        %4083 = vmatpush1.bf16.msra.mxu0 %v4039
        %4084 = vmatprep.subr.bf16.mxu0 0
        %4085 = vmatpush1.bf16.msra.mxu0 %v4040
        %4086 = vmatprep.subr.bf16.mxu0 0
        %4087 = vmatpush1.bf16.msra.mxu0 %v4041
        %4088 = vmatprep.subr.bf16.mxu0 0
        %4089 = vmatpush1.bf16.msra.mxu0 %v4042
        %4090 = vmatprep.subr.bf16.mxu0 0
        %4091 = vmatpush1.bf16.msra.mxu0 %v4043
        %4092 = vmatprep.mubr.bf16.mxu0 %v3910
        %4093 = vmatmul.mubr.bf16.gmra.mrb[0].mxu0 %v3909
        %v4094 = vpop.f32.mrb[0].mxu0
        %v4095 = vadd.f32 %v3962, %v4094
        %v4096 = vpop.f32.mrb[0].mxu0
        %v4097 = vpop.f32.mrb[0].mxu0
        %v4098 = vadd.f32 %v3962, %v4097
        %v4099 = vpop.f32.mrb[0].mxu0
        %4100 = vmatprep.mubr.bf16.mxu0 %v3912
        %4101 = vmatmul.mubr.bf16.gmra.mrb[0].mxu0 %v3911
        %v4102 = vpop.f32.mrb[0].mxu0
        %v4103 = vadd.f32 %v3962, %v4102
        %v4104 = vpop.f32.mrb[0].mxu0
        %v4105 = vpop.f32.mrb[0].mxu0
        %v4106 = vadd.f32 %v3962, %v4105
        %v4107 = vpop.f32.mrb[0].mxu0
        %4108 = vmatprep.mubr.bf16.mxu0 %v3914
        %4109 = vmatmul.mubr.bf16.gmra.mrb[0].mxu0 %v3913
        %v4110 = vpop.f32.mrb[0].mxu0
        %v4111 = vadd.f32 %v3962, %v4110
        %v4112 = vpop.f32.mrb[0].mxu0
        %v4113 = vpop.f32.mrb[0].mxu0
        %v4114 = vadd.f32 %v3962, %v4113
        %v4115 = vpop.f32.mrb[0].mxu0
        %4116 = vmatprep.mubr.bf16.mxu0 %v3916
        %4117 = vmatmul.mubr.bf16.gmra.mrb[0].mxu0 %v3915
        %v4118 = vpop.f32.mrb[0].mxu0
        %v4119 = vadd.f32 %v3962, %v4118
        %v4120 = vpop.f32.mrb[0].mxu0
        %v4121 = vpop.f32.mrb[0].mxu0
        %v4122 = vadd.f32 %v3962, %v4121
        %v4123 = vpop.f32.mrb[0].mxu0
        %4124 = vmatprep.mubr.bf16.mxu0 %v3918
        %4125 = vmatmul.mubr.bf16.gmra.mrb[0].mxu0 %v3917
        %v4126 = vpop.f32.mrb[0].mxu0
        %v4127 = vadd.f32 %v3962, %v4126
        %v4128 = vpop.f32.mrb[0].mxu0
        %v4129 = vpop.f32.mrb[0].mxu0
        %v4130 = vadd.f32 %v3962, %v4129
        %v4131 = vpop.f32.mrb[0].mxu0
        %4132 = vmatprep.mubr.bf16.mxu0 %v3920
        %4133 = vmatmul.mubr.bf16.gmra.mrb[0].mxu0 %v3919
        %v4134 = vpop.f32.mrb[0].mxu0
        %v4135 = vadd.f32 %v3962, %v4134
        %v4136 = vpop.f32.mrb[0].mxu0
        %v4137 = vpop.f32.mrb[0].mxu0
        %v4138 = vadd.f32 %v3962, %v4137
        %v4139 = vpop.f32.mrb[0].mxu0
        %4140 = vmatprep.mubr.bf16.mxu0 %v3922
        %4141 = vmatmul.mubr.bf16.gmra.mrb[0].mxu0 %v3921
        %v4142 = vpop.f32.mrb[0].mxu0
        %v4143 = vadd.f32 %v3962, %v4142
        %v4144 = vpop.f32.mrb[0].mxu0
        %v4145 = vpop.f32.mrb[0].mxu0
        %v4146 = vadd.f32 %v3962, %v4145
        %v4147 = vpop.f32.mrb[0].mxu0
        %4148 = vmatprep.mubr.bf16.mxu0 %v3924
        %4149 = vmatmul.mubr.bf16.gmra.mrb[0].mxu0 %v3923
        %v4150 = vpop.f32.mrb[0].mxu0
        %v4151 = vadd.f32 %v3962, %v4150
        %v4152 = vpop.f32.mrb[0].mxu0
        %v4153 = vpop.f32.mrb[0].mxu0
        %v4154 = vadd.f32 %v3962, %v4153
        %v4155 = vpop.f32.mrb[0].mxu0
        %4156 = vdwg.mxu0
        %v4157 = vxor.u32 %v4095, 2147483648
        %v4158 = vxor.u32 %v4098, 2147483648
        %v4159 = vxor.u32 %v4103, 2147483648
        %v4160 = vxor.u32 %v4106, 2147483648
        %v4161 = vxor.u32 %v4111, 2147483648
        %v4162 = vxor.u32 %v4114, 2147483648
        %v4163 = vxor.u32 %v4119, 2147483648
        %v4164 = vxor.u32 %v4122, 2147483648
        %v4165 = vxor.u32 %v4127, 2147483648
        %v4166 = vxor.u32 %v4130, 2147483648
        %v4167 = vxor.u32 %v4135, 2147483648
        %v4168 = vxor.u32 %v4138, 2147483648
        %v4169 = vxor.u32 %v4143, 2147483648
        %v4170 = vxor.u32 %v4146, 2147483648
        %v4171 = vxor.u32 %v4151, 2147483648
        %v4172 = vxor.u32 %v4154, 2147483648
        %v4173 = vmul.f32 %v4157, 1.442695
        %v4174 = vpow.pop %v4173
        %v4175 = vmul.f32 %v4158, 1.442695
        %v4176 = vpow.pop %v4175
        %v4177 = vmul.f32 %v4159, 1.442695
        %v4178 = vpow.pop %v4177
        %v4179 = vmul.f32 %v4160, 1.442695
        %v4180 = vpow.pop %v4179
        %v4181 = vmul.f32 %v4161, 1.442695
        %v4182 = vpow.pop %v4181
        %v4183 = vmul.f32 %v4162, 1.442695
        %v4184 = vpow.pop %v4183
        %v4185 = vmul.f32 %v4163, 1.442695
        %v4186 = vpow.pop %v4185
        %v4187 = vmul.f32 %v4164, 1.442695
        %v4188 = vpow.pop %v4187
        %v4189 = vmul.f32 %v4165, 1.442695
        %v4190 = vpow.pop %v4189
        %v4191 = vmul.f32 %v4166, 1.442695
        %v4192 = vpow.pop %v4191
        %v4193 = vmul.f32 %v4167, 1.442695
        %v4194 = vpow.pop %v4193
        %v4195 = vmul.f32 %v4168, 1.442695
        %v4196 = vpow.pop %v4195
        %v4197 = vmul.f32 %v4169, 1.442695
        %v4198 = vpow.pop %v4197
        %v4199 = vmul.f32 %v4170, 1.442695
        %v4200 = vpow.pop %v4199
        %v4201 = vmul.f32 %v4171, 1.442695
        %v4202 = vpow.pop %v4201
        %v4203 = vmul.f32 %v4172, 1.442695
        %v4204 = vpow.pop %v4203
        %v4205 = vadd.f32 %v4174, 1.0
        %v4206 = vadd.f32 %v4176, 1.0
        %v4207 = vadd.f32 %v4178, 1.0
        %v4208 = vadd.f32 %v4180, 1.0
        %v4209 = vadd.f32 %v4182, 1.0
        %v4210 = vadd.f32 %v4184, 1.0
        %v4211 = vadd.f32 %v4186, 1.0
        %v4212 = vadd.f32 %v4188, 1.0
        %v4213 = vadd.f32 %v4190, 1.0
        %v4214 = vadd.f32 %v4192, 1.0
        %v4215 = vadd.f32 %v4194, 1.0
        %v4216 = vadd.f32 %v4196, 1.0
        %v4217 = vadd.f32 %v4198, 1.0
        %v4218 = vadd.f32 %v4200, 1.0
        %v4219 = vadd.f32 %v4202, 1.0
        %v4220 = vadd.f32 %v4204, 1.0
        %v4221 = vrcp.pop %v4205
        %v4222 = vmul.f32 1.0, %v4221
        %v4223 = vrcp.pop %v4206
        %v4224 = vmul.f32 1.0, %v4223
        %v4225 = vrcp.pop %v4207
        %v4226 = vmul.f32 1.0, %v4225
        %v4227 = vrcp.pop %v4208
        %v4228 = vmul.f32 1.0, %v4227
        %v4229 = vrcp.pop %v4209
        %v4230 = vmul.f32 1.0, %v4229
        %v4231 = vrcp.pop %v4210
        %v4232 = vmul.f32 1.0, %v4231
        %v4233 = vrcp.pop %v4211
        %v4234 = vmul.f32 1.0, %v4233
        %v4235 = vrcp.pop %v4212
        %v4236 = vmul.f32 1.0, %v4235
        %v4237 = vrcp.pop %v4213
        %v4238 = vmul.f32 1.0, %v4237
        %v4239 = vrcp.pop %v4214
        %v4240 = vmul.f32 1.0, %v4239
        %v4241 = vrcp.pop %v4215
        %v4242 = vmul.f32 1.0, %v4241
        %v4243 = vrcp.pop %v4216
        %v4244 = vmul.f32 1.0, %v4243
        %v4245 = vrcp.pop %v4217
        %v4246 = vmul.f32 1.0, %v4245
        %v4247 = vrcp.pop %v4218
        %v4248 = vmul.f32 1.0, %v4247
        %v4249 = vrcp.pop %v4219
        %v4250 = vmul.f32 1.0, %v4249
        %v4251 = vrcp.pop %v4220
        %v4252 = vmul.f32 1.0, %v4251
        %4253 = vst [vmem:[%s341] sm:$0xff] %v4222
        %4254 = vst [vmem:[%s341 + $0x8] sm:$0xff] %v4224
        %4255 = vst [vmem:[%s341 + $0x10] sm:$0xff] %v4226
        %4256 = vst [vmem:[%s341 + $0x18] sm:$0xff] %v4228
        %4257 = vst [vmem:[%s341 + $0x20] sm:$0xff] %v4230
        %4258 = vst [vmem:[%s341 + $0x28] sm:$0xff] %v4232
        %4259 = vst [vmem:[%s341 + $0x30] sm:$0xff] %v4234
        %4260 = vst [vmem:[%s341 + $0x38] sm:$0xff] %v4236
        %4261 = vst [vmem:[%s341 + $0x40] sm:$0xff] %v4238
        %4262 = vst [vmem:[%s341 + $0x48] sm:$0xff] %v4240
        %4263 = vst [vmem:[%s341 + $0x50] sm:$0xff] %v4242
        %4264 = vst [vmem:[%s341 + $0x58] sm:$0xff] %v4244
        %4265 = vst [vmem:[%s341 + $0x60] sm:$0xff] %v4246
        %4266 = vst [vmem:[%s341 + $0x68] sm:$0xff] %v4248
        %4267 = vst [vmem:[%s341 + $0x70] sm:$0xff] %v4250
        %4268 = vst [vmem:[%s341 + $0x78] sm:$0xff] %v4252
        %s4269 = sand.u32 %s186, 1
        %s4270 = scalar_lea.sflag [#allocation4], %s4269
        %s4271 = sand.u32 %s186, 1
        %s4272 = smul.addr %s4271, 128
        %s4273 = scalar_lea.vmem [#allocation10], %s4272
        // Predicated region
        $region65: #{tpu_custom_call.1} parent=47 // pred_check
          %p4274 = pneg %p196
        $region66: #{tpu_custom_call.1} parent=47 // pred_check_branch
          %4276 = sbr.rel (%p4274) target = $region68
        $region67: #{tpu_custom_call.1} parent=47 // pred_region
          %s4277 = smul.u32 16, %s26
          %s4279 = ssub.s32 2048, 2048
          %4280 = vsyncadd %s4270, %s4279
          %s4281 = smul.addr %s4277, 128
          %s4282 = scalar_lea.hbm %s7, %s4281
          %s4283 = sshll.u32 %s4273, 4
          %s4284 = int_to_ptr.vmem [resolvable:$true] %s4283
          %4289 = dma.vmem_to_hbm [thread:$0]  %s4284, 2048, %s4282, %s4270, 128, 128, 8
        $region68: #{tpu_custom_call.1} parent=47 // pred_fallthru
          _
      $region48: #{tpu_custom_call.1} parent=5 // pred_fallthru
        _
      %p4290 = scmp.le.s32.totalorder 2, %s21
      // Predicated region
      $region69: #{tpu_custom_call.1} parent=5 // pred_check
        %p4291 = pneg %p4290
      $region70: #{tpu_custom_call.1} parent=5 // pred_check_branch
        %4293 = sbr.rel (%p4291) target = $region72
      $region71: #{tpu_custom_call.1} parent=5 // pred_region
        %s4294 = ssub.s32 %s21, 2
        // Predicated region
        $region73: #{tpu_custom_call.1} parent=71 // pred_check
          %p4295 = pneg %p202
        $region74: #{tpu_custom_call.1} parent=71 // pred_check_branch
          %4297 = sbr.rel (%p4295) target = $region76
        $region75: #{tpu_custom_call.1} parent=71 // pred_region
          %s4298 = sand.u32 %s187, 1
          %s4299 = scalar_lea.sflag [#allocation4], %s4298
          %s4300 = sand.u32 %s187, 1
          %s4301 = smul.addr %s4300, 128
          %s4302 = scalar_lea.vmem [#allocation10], %s4301
          %4303 = dma.done %s4299, 2048
        $region76: #{tpu_custom_call.1} parent=71 // pred_fallthru
          _
      $region72: #{tpu_custom_call.1} parent=5 // pred_fallthru
        _
    $region6: #{tpu_custom_call.1} parent=1 // loop_footer
      %s25 = sadd.s32 1, %s21
    $region7: #{tpu_custom_call.1} parent=1 // loop_footer_branch
      %20 = sbr.rel target = $region3
    $region8: #{tpu_custom_call.1} parent=1 // loop_exit
      _
    %4304 = vsyncpa [#allocation3], 1
    %s4305 = scalar_lea.sflag [#allocation3], 1
    %4306 = vsyncpa %s4305, 1
    %4307 = vsyncpa [#allocation6], 1
    %4308 = vsyncpa [#allocation9], 1
    %4309 = vsyncpa [#allocation4], 1
    %s4310 = scalar_lea.sflag [#allocation4], 1
    %4311 = vsyncpa %s4310, 1

</llo_original>
